<compile_context>
chip_gen: v5e
topology: v5e:2x2
jax: 0.10.0
libtpu: 0.0.40
codegen_flags: <defaults>
</compile_context>

<pallas_src>
import functools
import math

import jax
import jax.numpy as jnp
from jax.experimental import pallas as pl
from jax.experimental.pallas import tpu as pltpu

_LN_EPS = 1e-5                    # torch nn.LayerNorm default eps
_SQRT_2_OVER_PI = math.sqrt(2.0 / math.pi)

# Matmul-operand dtype (weights are pre-cast host-side; activations are cast
# in-kernel right before each matmul).  bf16 = production choice on
# v5e/v6e/v7x; accumulation is always f32.
_MM_DTYPE = jnp.bfloat16


# ----------------------------------------------------------------------------
# small math helpers (shared by kernel and pure-JAX reference)
# ----------------------------------------------------------------------------
def _layernorm(x, g, b):
    mu = jnp.mean(x, axis=-1, keepdims=True)
    var = jnp.mean((x - mu) ** 2, axis=-1, keepdims=True)
    return (x - mu) * jax.lax.rsqrt(var + _LN_EPS) * g + b


def _gelu_tanh(x):
    # tanh-form GELU (EUP tanh + a few VALU ops).  Deviates from torch's exact
    # erf-form nn.GELU() by <~1e-3 per element (review-sanctioned trade).
    return 0.5 * x * (1.0 + jnp.tanh(_SQRT_2_OVER_PI * (x + 0.044715 * x * x * x)))


# ----------------------------------------------------------------------------
# host-side parameter preprocessing (shared by kernel path and reference)
#   * fold attention scale into the q-columns of wqkv
#   * cast all matmul weights to _MM_DTYPE (this is what actually halves the
#     weight DMA -- an in-kernel astype would not)
# ----------------------------------------------------------------------------
def prepare_transformer_params(params, *, heads, dim_head, mm_dtype=_MM_DTYPE):
    inner = heads * dim_head
    scale = float(dim_head) ** -0.5
    wqkv = params['wqkv'].at[:, :, :inner].multiply(scale)       # fold scale into q
    stacked = dict(
        ln1_g=params['ln1_g'], ln1_b=params['ln1_b'],
        wqkv=wqkv.astype(mm_dtype),
        wo=params['wo'].astype(mm_dtype),
        bo=params['bo'],
        ln2_g=params['ln2_g'], ln2_b=params['ln2_b'],
        w1=params['w1'].astype(mm_dtype), b1=params['b1'],
        w2=params['w2'].astype(mm_dtype), b2=params['b2'],
    )
    head = dict(ln_g=params['head_ln_g'], ln_b=params['head_ln_b'],
                w=params['head_w'].astype(mm_dtype), b=params['head_b'])
    return stacked, head


# ----------------------------------------------------------------------------
# Fused transformer kernel: all layers + final LayerNorm + classifier head.
# grid = (depth,); per-layer weights pipelined; x resident in VMEM scratch.
# ----------------------------------------------------------------------------
def _make_fused_kernel(heads, dim_head, depth, batch, pool, mm_dtype):
    inner = heads * dim_head

    def kernel(x_ref,
               ln1g_ref, ln1b_ref, wqkv_ref, wo_ref, bo_ref,
               ln2g_ref, ln2b_ref, w1_ref, b1_ref, w2_ref, b2_ref,
               hg_ref, hb_ref, hw_ref, hbias_ref,
               o_ref, x_sc):
        l = pl.program_id(0)

        @pl.when(l == 0)
        def _init():
            x_sc[...] = x_ref[...].astype(jnp.float32)

        # Per-layer weights: DMA'd once per layer (grid step), reused for every
        # batch element below -> weight HBM traffic is depth * bytes, not B x.
        wqkv = wqkv_ref[0]                     # (D, 3*inner) bf16, scale folded
        w1 = w1_ref[0]                         # (D, mlp)     bf16
        w2 = w2_ref[0]                         # (mlp, D)     bf16
        ln1g, ln1b = ln1g_ref[0], ln1b_ref[0]  # (1, D) f32
        ln2g, ln2b = ln2g_ref[0], ln2b_ref[0]
        bo, b1, b2 = bo_ref[0], b1_ref[0], b2_ref[0]

        for b in range(batch):                 # static unroll; all ops 2-D
            x = x_sc[b]                        # (N, D) f32 residual stream

            # ---- PreNorm + multi-head self-attention + residual ----
            h = _layernorm(x, ln1g, ln1b).astype(mm_dtype)
            # single lane-dense QKV projection (one MXU pass, K = D, N = 3*inner)
            qkv = jnp.dot(h, wqkv, preferred_element_type=jnp.float32)   # (N, 3I)
            attn_out = None
            for hd in range(heads):
                lo = hd * dim_head
                q = qkv[:, lo:lo + dim_head]                       # already scaled
                k = qkv[:, inner + lo:inner + lo + dim_head]
                v = qkv[:, 2 * inner + lo:2 * inner + lo + dim_head]
                dots = jax.lax.dot_general(                        # (N, N) = q @ k^T
                    q.astype(mm_dtype), k.astype(mm_dtype),
                    (((1,), (1,)), ((), ())),
                    preferred_element_type=jnp.float32)
                m = jnp.max(dots, axis=-1, keepdims=True)
                e = jnp.exp(dots - m)
                attn = e * (1.0 / jnp.sum(e, axis=-1, keepdims=True))  # exact softmax
                o = jnp.dot(attn.astype(mm_dtype), v.astype(mm_dtype),
                            preferred_element_type=jnp.float32)        # (N, dh)
                # per-head output projection, accumulated into one (N, D) value
                contrib = jnp.dot(o.astype(mm_dtype), wo_ref[0, hd],
                                  preferred_element_type=jnp.float32)  # (N, D)
                attn_out = contrib if attn_out is None else attn_out + contrib
            x = x + attn_out + bo

            # ---- PreNorm + MLP (Linear -> GELU(tanh) -> Linear) + residual ----
            h = _layernorm(x, ln2g, ln2b).astype(mm_dtype)
            h = jnp.dot(h, w1, preferred_element_type=jnp.float32) + b1
            h = _gelu_tanh(h).astype(mm_dtype)
            h = jnp.dot(h, w2, preferred_element_type=jnp.float32) + b2
            x = x + h
            x_sc[b] = x                        # carry to next layer

            # ---- folded mlp_head (pool + LayerNorm + Linear) on the last layer
            @pl.when(l == depth - 1)
            def _head(x=x, b=b):
                pooled = (jnp.mean(x, axis=0, keepdims=True) if pool == 'mean'
                          else x[0:1, :])                              # (1, D)
                hh = _layernorm(pooled, hg_ref[...], hb_ref[...]).astype(mm_dtype)
                res = (jnp.dot(hh, hw_ref[...],
                               preferred_element_type=jnp.float32) + hbias_ref[...])
                o_ref[pl.ds(b, 1), :] = res.astype(o_ref.dtype)

    return kernel


def _vmem_limit_bytes(kernel_arrays, B, N, D):
    def nbytes(a):
        return int(a.size) * a.dtype.itemsize
    stacked, full = kernel_arrays
    per_layer = sum(nbytes(v) // v.shape[0] for v in stacked)
    full_bytes = sum(nbytes(v) for v in full)
    x_bytes = B * N * D * 4
    # double-buffered per-layer weight blocks + x in / f32 scratch + head params
    # + headroom for matmul intermediates / relayouts
    est = 2 * per_layer + full_bytes + 4 * x_bytes + (8 << 20)
    # clamp to v7x physical VMEM (64 MiB); always below v5e/v6e physical 128 MiB.
    return int(min(max(est, 32 << 20), 64 << 20))


def transformer_with_head(x, stacked, head, *, heads, dim_head, depth, pool,
                          num_classes, mm_dtype=_MM_DTYPE):
    B, N, D = x.shape
    # head-major layout for the output-projection weight so the kernel indexes
    # heads on leading axes (no sublane slicing of packed bf16 data)
    wo_k = stacked['wo'].reshape(depth, heads, dim_head, D)

    stacked_inputs = [stacked['ln1_g'], stacked['ln1_b'],
                      stacked['wqkv'], wo_k, stacked['bo'],
                      stacked['ln2_g'], stacked['ln2_b'],
                      stacked['w1'], stacked['b1'], stacked['w2'], stacked['b2']]
    full_inputs = [head['ln_g'], head['ln_b'], head['w'], head['b']]

    def lspec(arr):     # stacked per-layer param: one layer slice per grid step
        nd = arr.ndim
        return pl.BlockSpec((1,) + arr.shape[1:],
                            lambda l, _nd=nd: (l,) + (0,) * (_nd - 1))

    def fspec(arr):     # full-array block, resident for the whole sweep
        nd = arr.ndim
        return pl.BlockSpec(arr.shape, lambda l, _nd=nd: (0,) * _nd)

    vmem_limit = _vmem_limit_bytes((stacked_inputs, full_inputs + [x]), B, N, D)

    return pl.pallas_call(
        _make_fused_kernel(heads, dim_head, depth, B, pool, mm_dtype),
        out_shape=jax.ShapeDtypeStruct((B, num_classes), x.dtype),
        grid=(depth,),
        in_specs=[fspec(x)] + [lspec(a) for a in stacked_inputs]
                 + [fspec(a) for a in full_inputs],
        out_specs=pl.BlockSpec((B, num_classes), lambda l: (0, 0)),
        scratch_shapes=[pltpu.VMEM((B, N, D), jnp.float32)],
        compiler_params=pltpu.CompilerParams(
            dimension_semantics=("arbitrary",),      # depth carries the x_sc dep
            vmem_limit_bytes=vmem_limit),
    )(x, *stacked_inputs, *full_inputs)


# ----------------------------------------------------------------------------
# Full MP_AViT forward (embedding glue in plain JAX, transformer in Pallas)
# ----------------------------------------------------------------------------
def mp_avit_forward(video, audio, params, *, heads, dim_head, pool='cls',
                    mm_dtype=_MM_DTYPE):
    B, D, T, H, W = video.shape
    _, _, Ta = audio.shape
    depth = params['wqkv'].shape[0]
    num_classes = params['head_w'].shape[1]

    # Embedding adds + global spatial max pool: memory-bound glue with a tiny
    # lane-sparse result -> leave to XLA fusion (perf-review recommendation).
    v = video + params['pos_embedding']
    v = jnp.max(v, axis=(3, 4))                                   # (B, D, T)
    v = (v + params['temporal_visual_embedding'][:, :, :T]
           + params['visual_modality_embedding'])
    a = (audio + params['temporal_audio_embedding'][:, :, :Ta]
               + params['audio_modality_embedding'])              # (B, D, Ta)

    # bug-for-bug: torch does .reshape(b, -1, d) on (B, D, T) -- a row-major
    # reshape, NOT a transpose; reproduce exactly.
    v = v.reshape(B, -1, D)
    a = a.reshape(B, -1, D)
    cls = jnp.broadcast_to(params['cls_token'], (B, 1, D))
    x = jnp.concatenate([cls, a, v], axis=1).astype(jnp.float32)  # (B, N, D)
    # emb_dropout / attention & MLP dropout: identity (p = 0 / eval mode)

    stacked, head = prepare_transformer_params(
        params, heads=heads, dim_head=dim_head, mm_dtype=mm_dtype)
    return transformer_with_head(x, stacked, head, heads=heads,
                                 dim_head=dim_head, depth=depth, pool=pool,
                                 num_classes=num_classes, mm_dtype=mm_dtype)


# ----------------------------------------------------------------------------
# Pure-JAX reference.  Uses the SAME preprocessed (bf16-cast, scale-folded)
# weights and the same operand-cast pattern as the kernel, so the comparison
# isolates kernel correctness (residual diffs are Mosaic-vs-XLA transcendental
# ulps and f32 reduction order).  Set mm_dtype=float32 for full-f32 math.
# ----------------------------------------------------------------------------
def reference_forward(video, audio, params, *, heads, dim_head, pool='cls',
                      mm_dtype=_MM_DTYPE):
    B, D, T, H, W = video.shape
    _, _, Ta = audio.shape
    depth = params['wqkv'].shape[0]
    inner = heads * dim_head
    stacked, head = prepare_transformer_params(
        params, heads=heads, dim_head=dim_head, mm_dtype=mm_dtype)
    md = stacked['wqkv'].dtype

    def mm(a_, w_):
        return jnp.dot(a_.astype(w_.dtype), w_, preferred_element_type=jnp.float32)

    v = video + params['pos_embedding']
    v = jnp.max(v, axis=(3, 4))
    v = (v + params['temporal_visual_embedding'][:, :, :T]
           + params['visual_modality_embedding'])
    a = (audio + params['temporal_audio_embedding'][:, :, :Ta]
               + params['audio_modality_embedding'])
    v = v.reshape(B, -1, D)
    a = a.reshape(B, -1, D)
    x = jnp.concatenate(
        [jnp.broadcast_to(params['cls_token'], (B, 1, D)), a, v],
        axis=1).astype(jnp.float32)

    for l in range(depth):
        h = _layernorm(x, stacked['ln1_g'][l], stacked['ln1_b'][l])
        qkv = mm(h, stacked['wqkv'][l])                           # (B, N, 3I)
        q, k, vv = (qkv[..., :inner], qkv[..., inner:2 * inner],
                    qkv[..., 2 * inner:])
        sh = lambda t: t.reshape(B, -1, heads, dim_head).transpose(0, 2, 1, 3)
        q, k, vv = sh(q), sh(k), sh(vv)
        dots = jnp.einsum('bhnd,bhmd->bhnm', q.astype(md), k.astype(md),
                          preferred_element_type=jnp.float32)     # scale pre-folded
        m = jnp.max(dots, axis=-1, keepdims=True)
        e = jnp.exp(dots - m)
        attn = e * (1.0 / jnp.sum(e, axis=-1, keepdims=True))
        out = jnp.einsum('bhnm,bhmd->bhnd', attn.astype(md), vv.astype(md),
                         preferred_element_type=jnp.float32)
        out = out.transpose(0, 2, 1, 3).reshape(B, -1, inner)
        x = x + mm(out, stacked['wo'][l]) + stacked['bo'][l]
        h = _layernorm(x, stacked['ln2_g'][l], stacked['ln2_b'][l])
        h = mm(h, stacked['w1'][l]) + stacked['b1'][l]
        h = _gelu_tanh(h)
        h = mm(h, stacked['w2'][l]) + stacked['b2'][l]
        x = x + h

    pooled = x.mean(axis=1) if pool == 'mean' else x[:, 0]
    hh = _layernorm(pooled, head['ln_g'], head['ln_b'])
    return mm(hh, head['w']) + head['b']


# ----------------------------------------------------------------------------
# Deterministic parameter init (synthetic; shapes follow MP_AViT.__init__,
# transformer params stacked with a leading depth axis)
# ----------------------------------------------------------------------------
def init_params(key, *, dim, depth, heads, dim_head, mlp_dim, num_classes,
                image_size, max_visual_len, max_audio_len):
    H = W = image_size
    inner = heads * dim_head
    keys = jax.random.split(key, 14)

    def rnd(k, shape, s=0.05):
        return (jax.random.normal(k, shape) * s).astype(jnp.float32)

    return dict(
        pos_embedding=rnd(keys[0], (1, dim, 1, H, W)),
        visual_modality_embedding=rnd(keys[1], (1, dim, 1)),
        audio_modality_embedding=rnd(keys[2], (1, dim, 1)),
        temporal_visual_embedding=rnd(keys[3], (1, dim, max_visual_len)),
        temporal_audio_embedding=rnd(keys[4], (1, dim, max_audio_len)),
        cls_token=rnd(keys[5], (1, 1, dim)),
        head_ln_g=jnp.ones((1, dim), jnp.float32),
        head_ln_b=jnp.zeros((1, dim), jnp.float32),
        head_w=rnd(keys[6], (dim, num_classes)),
        head_b=rnd(keys[7], (1, num_classes)),
        # stacked transformer layers (leading depth axis)
        ln1_g=jnp.ones((depth, 1, dim), jnp.float32),
        ln1_b=jnp.zeros((depth, 1, dim), jnp.float32),
        wqkv=rnd(keys[8], (depth, dim, 3 * inner)),
        wo=rnd(keys[9], (depth, inner, dim)),
        bo=rnd(keys[10], (depth, 1, dim)),
        ln2_g=jnp.ones((depth, 1, dim), jnp.float32),
        ln2_b=jnp.zeros((depth, 1, dim), jnp.float32),
        w1=rnd(keys[11], (depth, dim, mlp_dim)),
        b1=rnd(keys[12], (depth, 1, mlp_dim)),
        w2=rnd(keys[13], (depth, mlp_dim, dim)),
        b2=jnp.zeros((depth, 1, dim), jnp.float32),
    )


# ----------------------------------------------------------------------------
if __name__ == "__main__":
    # small config consistent with the module's forward
    B = 2
    dim = 32
    depth = 2
    heads = 4
    dim_head = 8            # inner_dim = 32, project_out = True
    mlp_dim = 64
    num_classes = 3
    image_size = 8          # H = W = 8
    t_len, aud_t_len = 4, 4
    max_visual_len, max_audio_len = 6, 6

    key = jax.random.PRNGKey(0)
    kp, kv, ka = jax.random.split(key, 3)
    params = init_params(kp, dim=dim, depth=depth, heads=heads,
                         dim_head=dim_head, mlp_dim=mlp_dim,
                         num_classes=num_classes, image_size=image_size,
                         max_visual_len=max_visual_len,
                         max_audio_len=max_audio_len)

    video = jax.random.normal(kv, (B, dim, t_len, image_size, image_size),
                              jnp.float32)
    audio = jax.random.normal(ka, (B, dim, aud_t_len), jnp.float32)

    fwd = jax.jit(functools.partial(mp_avit_forward, heads=heads,
                                    dim_head=dim_head, pool='cls'))
    out = jax.block_until_ready(fwd(video, audio, params))

    ref = reference_forward(video, audio, params, heads=heads,
                            dim_head=dim_head, pool='cls')
    assert out.shape == (B, num_classes), out.shape
    # Reference uses the same bf16 operand casts / f32 accumulation as the
    # kernel, so agreement is tight (remaining diffs: Mosaic-vs-XLA
    # transcendental ulps and f32 reduction order).
    assert jnp.allclose(out, ref, atol=5e-3, rtol=5e-3), (out, ref)
    print("KERNEL_OK")
</pallas_src>

<mosaic_0001>
module attributes {stable_mosaic.version = 11 : i64} {
  func.func @kernel(%arg0: i32, %arg1: memref<2x9x32xf32, #tpu.memory_space<vmem>>, %arg2: memref<1x1x32xf32, #tpu.memory_space<vmem>>, %arg3: memref<1x1x32xf32, #tpu.memory_space<vmem>>, %arg4: memref<1x32x96xbf16, #tpu.memory_space<vmem>>, %arg5: memref<1x4x8x32xbf16, #tpu.memory_space<vmem>>, %arg6: memref<1x1x32xf32, #tpu.memory_space<vmem>>, %arg7: memref<1x1x32xf32, #tpu.memory_space<vmem>>, %arg8: memref<1x1x32xf32, #tpu.memory_space<vmem>>, %arg9: memref<1x32x64xbf16, #tpu.memory_space<vmem>>, %arg10: memref<1x1x64xf32, #tpu.memory_space<vmem>>, %arg11: memref<1x64x32xbf16, #tpu.memory_space<vmem>>, %arg12: memref<1x1x32xf32, #tpu.memory_space<vmem>>, %arg13: memref<1x32xf32, #tpu.memory_space<vmem>>, %arg14: memref<1x32xf32, #tpu.memory_space<vmem>>, %arg15: memref<32x3xbf16, #tpu.memory_space<vmem>>, %arg16: memref<1x3xf32, #tpu.memory_space<vmem>>, %arg17: memref<2x3xf32, #tpu.memory_space<vmem>>, %arg18: memref<2x9x32xf32, #tpu.memory_space<vmem>>) attributes {dimension_semantics = [#tpu.dimension_semantics<arbitrary>], iteration_bounds = array<i64: 2>, scalar_prefetch = 0 : i64, scratch_operands = 1 : i64, tpu.core_type = #tpu.core_type<tc>, window_params = [{pipeline_mode = #tpu.pipeline_mode<synchronous>, transform_indices = @transform_0, window_bounds = array<i64: 2, 9, 32>}, {transform_indices = @transform_1, window_bounds = array<i64: 1, 1, 32>}, {transform_indices = @transform_2, window_bounds = array<i64: 1, 1, 32>}, {transform_indices = @transform_3, window_bounds = array<i64: 1, 32, 96>}, {transform_indices = @transform_4, window_bounds = array<i64: 1, 4, 8, 32>}, {transform_indices = @transform_5, window_bounds = array<i64: 1, 1, 32>}, {transform_indices = @transform_6, window_bounds = array<i64: 1, 1, 32>}, {transform_indices = @transform_7, window_bounds = array<i64: 1, 1, 32>}, {transform_indices = @transform_8, window_bounds = array<i64: 1, 32, 64>}, {transform_indices = @transform_9, window_bounds = array<i64: 1, 1, 64>}, {transform_indices = @transform_10, window_bounds = array<i64: 1, 64, 32>}, {transform_indices = @transform_11, window_bounds = array<i64: 1, 1, 32>}, {pipeline_mode = #tpu.pipeline_mode<synchronous>, transform_indices = @transform_12, window_bounds = array<i64: 1, 32>}, {pipeline_mode = #tpu.pipeline_mode<synchronous>, transform_indices = @transform_13, window_bounds = array<i64: 1, 32>}, {pipeline_mode = #tpu.pipeline_mode<synchronous>, transform_indices = @transform_14, window_bounds = array<i64: 32, 3>}, {pipeline_mode = #tpu.pipeline_mode<synchronous>, transform_indices = @transform_15, window_bounds = array<i64: 1, 3>}, {pipeline_mode = #tpu.pipeline_mode<synchronous>, transform_indices = @transform_16, window_bounds = array<i64: 2, 3>}]} {
    %c0_i32 = arith.constant 0 : i32
    %0 = arith.cmpi eq, %arg0, %c0_i32 : i32
    %1 = arith.extui %0 : i1 to i32
    %c0_i32_0 = arith.constant 0 : i32
    %2 = arith.cmpi ne, %1, %c0_i32_0 : i32
    scf.if %2 {
      %c0_155 = arith.constant 0 : index
      %c0_156 = arith.constant 0 : index
      %c0_157 = arith.constant 0 : index
      %379 = vector.load %arg1[%c0_155, %c0_156, %c0_157] : memref<2x9x32xf32, #tpu.memory_space<vmem>>, vector<2x9x32xf32>
      %c0_158 = arith.constant 0 : index
      %c0_159 = arith.constant 0 : index
      %c0_160 = arith.constant 0 : index
      %380 = vector.load %arg18[%c0_158, %c0_159, %c0_160] : memref<2x9x32xf32, #tpu.memory_space<vmem>>, vector<2x9x32xf32>
      tpu.vector_store %arg18[%c0_158, %c0_159, %c0_160], %379 {strides = array<i32>} : memref<2x9x32xf32, #tpu.memory_space<vmem>>, vector<2x9x32xf32>,
    } else {
    }
    %c0 = arith.constant 0 : index
    %c0_1 = arith.constant 0 : index
    %c0_2 = arith.constant 0 : index
    %3 = vector.load %arg4[%c0, %c0_1, %c0_2] : memref<1x32x96xbf16, #tpu.memory_space<vmem>>, vector<1x32x96xbf16>
    %4 = vector.shape_cast %3 : vector<1x32x96xbf16> to vector<32x96xbf16>
    %c0_3 = arith.constant 0 : index
    %c0_4 = arith.constant 0 : index
    %c0_5 = arith.constant 0 : index
    %5 = vector.load %arg9[%c0_3, %c0_4, %c0_5] : memref<1x32x64xbf16, #tpu.memory_space<vmem>>, vector<1x32x64xbf16>
    %6 = vector.shape_cast %5 : vector<1x32x64xbf16> to vector<32x64xbf16>
    %c0_6 = arith.constant 0 : index
    %c0_7 = arith.constant 0 : index
    %c0_8 = arith.constant 0 : index
    %7 = vector.load %arg11[%c0_6, %c0_7, %c0_8] : memref<1x64x32xbf16, #tpu.memory_space<vmem>>, vector<1x64x32xbf16>
    %8 = vector.shape_cast %7 : vector<1x64x32xbf16> to vector<64x32xbf16>
    %c0_9 = arith.constant 0 : index
    %c0_10 = arith.constant 0 : index
    %c0_11 = arith.constant 0 : index
    %9 = vector.load %arg2[%c0_9, %c0_10, %c0_11] : memref<1x1x32xf32, #tpu.memory_space<vmem>>, vector<1x1x32xf32>
    %10 = vector.shape_cast %9 : vector<1x1x32xf32> to vector<1x32xf32>
    %c0_12 = arith.constant 0 : index
    %c0_13 = arith.constant 0 : index
    %c0_14 = arith.constant 0 : index
    %11 = vector.load %arg3[%c0_12, %c0_13, %c0_14] : memref<1x1x32xf32, #tpu.memory_space<vmem>>, vector<1x1x32xf32>
    %12 = vector.shape_cast %11 : vector<1x1x32xf32> to vector<1x32xf32>
    %c0_15 = arith.constant 0 : index
    %c0_16 = arith.constant 0 : index
    %c0_17 = arith.constant 0 : index
    %13 = vector.load %arg7[%c0_15, %c0_16, %c0_17] : memref<1x1x32xf32, #tpu.memory_space<vmem>>, vector<1x1x32xf32>
    %14 = vector.shape_cast %13 : vector<1x1x32xf32> to vector<1x32xf32>
    %c0_18 = arith.constant 0 : index
    %c0_19 = arith.constant 0 : index
    %c0_20 = arith.constant 0 : index
    %15 = vector.load %arg8[%c0_18, %c0_19, %c0_20] : memref<1x1x32xf32, #tpu.memory_space<vmem>>, vector<1x1x32xf32>
    %16 = vector.shape_cast %15 : vector<1x1x32xf32> to vector<1x32xf32>
    %c0_21 = arith.constant 0 : index
    %c0_22 = arith.constant 0 : index
    %c0_23 = arith.constant 0 : index
    %17 = vector.load %arg6[%c0_21, %c0_22, %c0_23] : memref<1x1x32xf32, #tpu.memory_space<vmem>>, vector<1x1x32xf32>
    %18 = vector.shape_cast %17 : vector<1x1x32xf32> to vector<1x32xf32>
    %c0_24 = arith.constant 0 : index
    %c0_25 = arith.constant 0 : index
    %c0_26 = arith.constant 0 : index
    %19 = vector.load %arg10[%c0_24, %c0_25, %c0_26] : memref<1x1x64xf32, #tpu.memory_space<vmem>>, vector<1x1x64xf32>
    %20 = vector.shape_cast %19 : vector<1x1x64xf32> to vector<1x64xf32>
    %c0_27 = arith.constant 0 : index
    %c0_28 = arith.constant 0 : index
    %c0_29 = arith.constant 0 : index
    %21 = vector.load %arg12[%c0_27, %c0_28, %c0_29] : memref<1x1x32xf32, #tpu.memory_space<vmem>>, vector<1x1x32xf32>
    %22 = vector.shape_cast %21 : vector<1x1x32xf32> to vector<1x32xf32>
    %c0_30 = arith.constant 0 : index
    %c0_31 = arith.constant 0 : index
    %c0_32 = arith.constant 0 : index
    %23 = vector.load %arg18[%c0_30, %c0_31, %c0_32] : memref<2x9x32xf32, #tpu.memory_space<vmem>>, vector<1x9x32xf32>
    %24 = vector.shape_cast %23 : vector<1x9x32xf32> to vector<9x32xf32>
    %cst = arith.constant dense<0.000000e+00> : vector<9xf32>
    %25 = vector.multi_reduction <add>, %24, %cst [1] : vector<9x32xf32> to vector<9xf32>
    %26 = vector.shape_cast %25 : vector<9xf32> to vector<9x1xf32>
    %cst_33 = arith.constant 3.200000e+01 : f32
    %27 = vector.broadcast %cst_33 : f32 to vector<9x1xf32>
    %28 = arith.divf %26, %27 : vector<9x1xf32>
    %29 = vector.broadcast %28 : vector<9x1xf32> to vector<9x32xf32>
    %30 = arith.subf %24, %29 : vector<9x32xf32>
    %31 = arith.mulf %30, %30 : vector<9x32xf32>
    %cst_34 = arith.constant dense<0.000000e+00> : vector<9xf32>
    %32 = vector.multi_reduction <add>, %31, %cst_34 [1] : vector<9x32xf32> to vector<9xf32>
    %33 = vector.shape_cast %32 : vector<9xf32> to vector<9x1xf32>
    %cst_35 = arith.constant 3.200000e+01 : f32
    %34 = vector.broadcast %cst_35 : f32 to vector<9x1xf32>
    %35 = arith.divf %33, %34 : vector<9x1xf32>
    %36 = vector.broadcast %28 : vector<9x1xf32> to vector<9x32xf32>
    %37 = arith.subf %24, %36 : vector<9x32xf32>
    %cst_36 = arith.constant 9.99999974E-6 : f32
    %38 = vector.broadcast %cst_36 : f32 to vector<9x1xf32>
    %39 = arith.addf %35, %38 : vector<9x1xf32>
    %40 = math.rsqrt %39 : vector<9x1xf32>
    %41 = vector.broadcast %40 : vector<9x1xf32> to vector<9x32xf32>
    %42 = arith.mulf %37, %41 : vector<9x32xf32>
    %43 = vector.broadcast %10 : vector<1x32xf32> to vector<9x32xf32>
    %44 = arith.mulf %42, %43 : vector<9x32xf32>
    %45 = vector.broadcast %12 : vector<1x32xf32> to vector<9x32xf32>
    %46 = arith.addf %44, %45 : vector<9x32xf32>
    %47 = arith.truncf %46 : vector<9x32xf32> to vector<9x32xbf16>
    %cst_37 = arith.constant dense<0.000000e+00> : vector<9x96xf32>
    %48 = tpu.matmul %47, %4, %cst_37 {dimension_numbers = #tpu.dot_dimension_numbers<[1], [0], [0], [1], [0, 0, 1, 1], [], []>} : vector<9x32xbf16>, vector<32x96xbf16>, vector<9x96xf32> -> vector<9x96xf32>
    %49 = vector.extract_strided_slice %48 {offsets = [0, 0], sizes = [9, 8], strides = [1, 1]} : vector<9x96xf32> to vector<9x8xf32>
    %50 = vector.extract_strided_slice %48 {offsets = [0, 32], sizes = [9, 8], strides = [1, 1]} : vector<9x96xf32> to vector<9x8xf32>
    %51 = vector.extract_strided_slice %48 {offsets = [0, 64], sizes = [9, 8], strides = [1, 1]} : vector<9x96xf32> to vector<9x8xf32>
    %52 = arith.truncf %49 : vector<9x8xf32> to vector<9x8xbf16>
    %53 = arith.truncf %50 : vector<9x8xf32> to vector<9x8xbf16>
    %cst_38 = arith.constant dense<0.000000e+00> : vector<9x9xf32>
    %54 = tpu.matmul %52, %53, %cst_38 {dimension_numbers = #tpu.dot_dimension_numbers<[1], [1], [0], [0], [0, 0, 1, 0], [], []>} : vector<9x8xbf16>, vector<9x8xbf16>, vector<9x9xf32> -> vector<9x9xf32>
    %cst_39 = arith.constant dense<0xFF800000> : vector<9xf32>
    %55 = vector.multi_reduction <maximumf>, %54, %cst_39 [1] : vector<9x9xf32> to vector<9xf32>
    %56 = vector.shape_cast %55 : vector<9xf32> to vector<9x1xf32>
    %57 = vector.broadcast %56 : vector<9x1xf32> to vector<9x9xf32>
    %58 = arith.subf %54, %57 : vector<9x9xf32>
    %59 = math.exp %58 : vector<9x9xf32>
    %cst_40 = arith.constant dense<0.000000e+00> : vector<9xf32>
    %60 = vector.multi_reduction <add>, %59, %cst_40 [1] : vector<9x9xf32> to vector<9xf32>
    %61 = vector.shape_cast %60 : vector<9xf32> to vector<9x1xf32>
    %cst_41 = arith.constant 1.000000e+00 : f32
    %62 = vector.broadcast %cst_41 : f32 to vector<9x1xf32>
    %63 = arith.divf %62, %61 : vector<9x1xf32>
    %64 = vector.broadcast %63 : vector<9x1xf32> to vector<9x9xf32>
    %65 = arith.mulf %59, %64 : vector<9x9xf32>
    %66 = arith.truncf %65 : vector<9x9xf32> to vector<9x9xbf16>
    %67 = arith.truncf %51 : vector<9x8xf32> to vector<9x8xbf16>
    %cst_42 = arith.constant dense<0.000000e+00> : vector<9x8xf32>
    %68 = tpu.matmul %66, %67, %cst_42 {dimension_numbers = #tpu.dot_dimension_numbers<[1], [0], [0], [1], [0, 0, 1, 1], [], []>} : vector<9x9xbf16>, vector<9x8xbf16>, vector<9x8xf32> -> vector<9x8xf32>
    %69 = arith.truncf %68 : vector<9x8xf32> to vector<9x8xbf16>
    %c0_43 = arith.constant 0 : index
    %c0_44 = arith.constant 0 : index
    %c0_45 = arith.constant 0 : index
    %c0_46 = arith.constant 0 : index
    %70 = vector.load %arg5[%c0_43, %c0_44, %c0_45, %c0_46] : memref<1x4x8x32xbf16, #tpu.memory_space<vmem>>, vector<1x1x8x32xbf16>
    %71 = vector.shape_cast %70 : vector<1x1x8x32xbf16> to vector<8x32xbf16>
    %cst_47 = arith.constant dense<0.000000e+00> : vector<9x32xf32>
    %72 = tpu.matmul %69, %71, %cst_47 {dimension_numbers = #tpu.dot_dimension_numbers<[1], [0], [0], [1], [0, 0, 1, 1], [], []>} : vector<9x8xbf16>, vector<8x32xbf16>, vector<9x32xf32> -> vector<9x32xf32>
    %73 = vector.extract_strided_slice %48 {offsets = [0, 8], sizes = [9, 8], strides = [1, 1]} : vector<9x96xf32> to vector<9x8xf32>
    %74 = vector.extract_strided_slice %48 {offsets = [0, 40], sizes = [9, 8], strides = [1, 1]} : vector<9x96xf32> to vector<9x8xf32>
    %75 = vector.extract_strided_slice %48 {offsets = [0, 72], sizes = [9, 8], strides = [1, 1]} : vector<9x96xf32> to vector<9x8xf32>
    %76 = arith.truncf %73 : vector<9x8xf32> to vector<9x8xbf16>
    %77 = arith.truncf %74 : vector<9x8xf32> to vector<9x8xbf16>
    %cst_48 = arith.constant dense<0.000000e+00> : vector<9x9xf32>
    %78 = tpu.matmul %76, %77, %cst_48 {dimension_numbers = #tpu.dot_dimension_numbers<[1], [1], [0], [0], [0, 0, 1, 0], [], []>} : vector<9x8xbf16>, vector<9x8xbf16>, vector<9x9xf32> -> vector<9x9xf32>
    %cst_49 = arith.constant dense<0xFF800000> : vector<9xf32>
    %79 = vector.multi_reduction <maximumf>, %78, %cst_49 [1] : vector<9x9xf32> to vector<9xf32>
    %80 = vector.shape_cast %79 : vector<9xf32> to vector<9x1xf32>
    %81 = vector.broadcast %80 : vector<9x1xf32> to vector<9x9xf32>
    %82 = arith.subf %78, %81 : vector<9x9xf32>
    %83 = math.exp %82 : vector<9x9xf32>
    %cst_50 = arith.constant dense<0.000000e+00> : vector<9xf32>
    %84 = vector.multi_reduction <add>, %83, %cst_50 [1] : vector<9x9xf32> to vector<9xf32>
    %85 = vector.shape_cast %84 : vector<9xf32> to vector<9x1xf32>
    %cst_51 = arith.constant 1.000000e+00 : f32
    %86 = vector.broadcast %cst_51 : f32 to vector<9x1xf32>
    %87 = arith.divf %86, %85 : vector<9x1xf32>
    %88 = vector.broadcast %87 : vector<9x1xf32> to vector<9x9xf32>
    %89 = arith.mulf %83, %88 : vector<9x9xf32>
    %90 = arith.truncf %89 : vector<9x9xf32> to vector<9x9xbf16>
    %91 = arith.truncf %75 : vector<9x8xf32> to vector<9x8xbf16>
    %cst_52 = arith.constant dense<0.000000e+00> : vector<9x8xf32>
    %92 = tpu.matmul %90, %91, %cst_52 {dimension_numbers = #tpu.dot_dimension_numbers<[1], [0], [0], [1], [0, 0, 1, 1], [], []>} : vector<9x9xbf16>, vector<9x8xbf16>, vector<9x8xf32> -> vector<9x8xf32>
    %93 = arith.truncf %92 : vector<9x8xf32> to vector<9x8xbf16>
    %c0_53 = arith.constant 0 : index
    %c1 = arith.constant 1 : index
    %c0_54 = arith.constant 0 : index
    %c0_55 = arith.constant 0 : index
    %94 = vector.load %arg5[%c0_53, %c1, %c0_54, %c0_55] : memref<1x4x8x32xbf16, #tpu.memory_space<vmem>>, vector<1x1x8x32xbf16>
    %95 = vector.shape_cast %94 : vector<1x1x8x32xbf16> to vector<8x32xbf16>
    %cst_56 = arith.constant dense<0.000000e+00> : vector<9x32xf32>
    %96 = tpu.matmul %93, %95, %cst_56 {dimension_numbers = #tpu.dot_dimension_numbers<[1], [0], [0], [1], [0, 0, 1, 1], [], []>} : vector<9x8xbf16>, vector<8x32xbf16>, vector<9x32xf32> -> vector<9x32xf32>
    %97 = arith.addf %72, %96 : vector<9x32xf32>
    %98 = vector.extract_strided_slice %48 {offsets = [0, 16], sizes = [9, 8], strides = [1, 1]} : vector<9x96xf32> to vector<9x8xf32>
    %99 = vector.extract_strided_slice %48 {offsets = [0, 48], sizes = [9, 8], strides = [1, 1]} : vector<9x96xf32> to vector<9x8xf32>
    %100 = vector.extract_strided_slice %48 {offsets = [0, 80], sizes = [9, 8], strides = [1, 1]} : vector<9x96xf32> to vector<9x8xf32>
    %101 = arith.truncf %98 : vector<9x8xf32> to vector<9x8xbf16>
    %102 = arith.truncf %99 : vector<9x8xf32> to vector<9x8xbf16>
    %cst_57 = arith.constant dense<0.000000e+00> : vector<9x9xf32>
    %103 = tpu.matmul %101, %102, %cst_57 {dimension_numbers = #tpu.dot_dimension_numbers<[1], [1], [0], [0], [0, 0, 1, 0], [], []>} : vector<9x8xbf16>, vector<9x8xbf16>, vector<9x9xf32> -> vector<9x9xf32>
    %cst_58 = arith.constant dense<0xFF800000> : vector<9xf32>
    %104 = vector.multi_reduction <maximumf>, %103, %cst_58 [1] : vector<9x9xf32> to vector<9xf32>
    %105 = vector.shape_cast %104 : vector<9xf32> to vector<9x1xf32>
    %106 = vector.broadcast %105 : vector<9x1xf32> to vector<9x9xf32>
    %107 = arith.subf %103, %106 : vector<9x9xf32>
    %108 = math.exp %107 : vector<9x9xf32>
    %cst_59 = arith.constant dense<0.000000e+00> : vector<9xf32>
    %109 = vector.multi_reduction <add>, %108, %cst_59 [1] : vector<9x9xf32> to vector<9xf32>
    %110 = vector.shape_cast %109 : vector<9xf32> to vector<9x1xf32>
    %cst_60 = arith.constant 1.000000e+00 : f32
    %111 = vector.broadcast %cst_60 : f32 to vector<9x1xf32>
    %112 = arith.divf %111, %110 : vector<9x1xf32>
    %113 = vector.broadcast %112 : vector<9x1xf32> to vector<9x9xf32>
    %114 = arith.mulf %108, %113 : vector<9x9xf32>
    %115 = arith.truncf %114 : vector<9x9xf32> to vector<9x9xbf16>
    %116 = arith.truncf %100 : vector<9x8xf32> to vector<9x8xbf16>
    %cst_61 = arith.constant dense<0.000000e+00> : vector<9x8xf32>
    %117 = tpu.matmul %115, %116, %cst_61 {dimension_numbers = #tpu.dot_dimension_numbers<[1], [0], [0], [1], [0, 0, 1, 1], [], []>} : vector<9x9xbf16>, vector<9x8xbf16>, vector<9x8xf32> -> vector<9x8xf32>
    %118 = arith.truncf %117 : vector<9x8xf32> to vector<9x8xbf16>
    %c0_62 = arith.constant 0 : index
    %c2 = arith.constant 2 : index
    %c0_63 = arith.constant 0 : index
    %c0_64 = arith.constant 0 : index
    %119 = vector.load %arg5[%c0_62, %c2, %c0_63, %c0_64] : memref<1x4x8x32xbf16, #tpu.memory_space<vmem>>, vector<1x1x8x32xbf16>
    %120 = vector.shape_cast %119 : vector<1x1x8x32xbf16> to vector<8x32xbf16>
    %cst_65 = arith.constant dense<0.000000e+00> : vector<9x32xf32>
    %121 = tpu.matmul %118, %120, %cst_65 {dimension_numbers = #tpu.dot_dimension_numbers<[1], [0], [0], [1], [0, 0, 1, 1], [], []>} : vector<9x8xbf16>, vector<8x32xbf16>, vector<9x32xf32> -> vector<9x32xf32>
    %122 = arith.addf %97, %121 : vector<9x32xf32>
    %123 = vector.extract_strided_slice %48 {offsets = [0, 24], sizes = [9, 8], strides = [1, 1]} : vector<9x96xf32> to vector<9x8xf32>
    %124 = vector.extract_strided_slice %48 {offsets = [0, 56], sizes = [9, 8], strides = [1, 1]} : vector<9x96xf32> to vector<9x8xf32>
    %125 = vector.extract_strided_slice %48 {offsets = [0, 88], sizes = [9, 8], strides = [1, 1]} : vector<9x96xf32> to vector<9x8xf32>
    %126 = arith.truncf %123 : vector<9x8xf32> to vector<9x8xbf16>
    %127 = arith.truncf %124 : vector<9x8xf32> to vector<9x8xbf16>
    %cst_66 = arith.constant dense<0.000000e+00> : vector<9x9xf32>
    %128 = tpu.matmul %126, %127, %cst_66 {dimension_numbers = #tpu.dot_dimension_numbers<[1], [1], [0], [0], [0, 0, 1, 0], [], []>} : vector<9x8xbf16>, vector<9x8xbf16>, vector<9x9xf32> -> vector<9x9xf32>
    %cst_67 = arith.constant dense<0xFF800000> : vector<9xf32>
    %129 = vector.multi_reduction <maximumf>, %128, %cst_67 [1] : vector<9x9xf32> to vector<9xf32>
    %130 = vector.shape_cast %129 : vector<9xf32> to vector<9x1xf32>
    %131 = vector.broadcast %130 : vector<9x1xf32> to vector<9x9xf32>
    %132 = arith.subf %128, %131 : vector<9x9xf32>
    %133 = math.exp %132 : vector<9x9xf32>
    %cst_68 = arith.constant dense<0.000000e+00> : vector<9xf32>
    %134 = vector.multi_reduction <add>, %133, %cst_68 [1] : vector<9x9xf32> to vector<9xf32>
    %135 = vector.shape_cast %134 : vector<9xf32> to vector<9x1xf32>
    %cst_69 = arith.constant 1.000000e+00 : f32
    %136 = vector.broadcast %cst_69 : f32 to vector<9x1xf32>
    %137 = arith.divf %136, %135 : vector<9x1xf32>
    %138 = vector.broadcast %137 : vector<9x1xf32> to vector<9x9xf32>
    %139 = arith.mulf %133, %138 : vector<9x9xf32>
    %140 = arith.truncf %139 : vector<9x9xf32> to vector<9x9xbf16>
    %141 = arith.truncf %125 : vector<9x8xf32> to vector<9x8xbf16>
    %cst_70 = arith.constant dense<0.000000e+00> : vector<9x8xf32>
    %142 = tpu.matmul %140, %141, %cst_70 {dimension_numbers = #tpu.dot_dimension_numbers<[1], [0], [0], [1], [0, 0, 1, 1], [], []>} : vector<9x9xbf16>, vector<9x8xbf16>, vector<9x8xf32> -> vector<9x8xf32>
    %143 = arith.truncf %142 : vector<9x8xf32> to vector<9x8xbf16>
    %c0_71 = arith.constant 0 : index
    %c3 = arith.constant 3 : index
    %c0_72 = arith.constant 0 : index
    %c0_73 = arith.constant 0 : index
    %144 = vector.load %arg5[%c0_71, %c3, %c0_72, %c0_73] : memref<1x4x8x32xbf16, #tpu.memory_space<vmem>>, vector<1x1x8x32xbf16>
    %145 = vector.shape_cast %144 : vector<1x1x8x32xbf16> to vector<8x32xbf16>
    %cst_74 = arith.constant dense<0.000000e+00> : vector<9x32xf32>
    %146 = tpu.matmul %143, %145, %cst_74 {dimension_numbers = #tpu.dot_dimension_numbers<[1], [0], [0], [1], [0, 0, 1, 1], [], []>} : vector<9x8xbf16>, vector<8x32xbf16>, vector<9x32xf32> -> vector<9x32xf32>
    %147 = arith.addf %122, %146 : vector<9x32xf32>
    %148 = arith.addf %24, %147 : vector<9x32xf32>
    %149 = vector.broadcast %18 : vector<1x32xf32> to vector<9x32xf32>
    %150 = arith.addf %148, %149 : vector<9x32xf32>
    %cst_75 = arith.constant dense<0.000000e+00> : vector<9xf32>
    %151 = vector.multi_reduction <add>, %150, %cst_75 [1] : vector<9x32xf32> to vector<9xf32>
    %152 = vector.shape_cast %151 : vector<9xf32> to vector<9x1xf32>
    %cst_76 = arith.constant 3.200000e+01 : f32
    %153 = vector.broadcast %cst_76 : f32 to vector<9x1xf32>
    %154 = arith.divf %152, %153 : vector<9x1xf32>
    %155 = vector.broadcast %154 : vector<9x1xf32> to vector<9x32xf32>
    %156 = arith.subf %150, %155 : vector<9x32xf32>
    %157 = arith.mulf %156, %156 : vector<9x32xf32>
    %cst_77 = arith.constant dense<0.000000e+00> : vector<9xf32>
    %158 = vector.multi_reduction <add>, %157, %cst_77 [1] : vector<9x32xf32> to vector<9xf32>
    %159 = vector.shape_cast %158 : vector<9xf32> to vector<9x1xf32>
    %cst_78 = arith.constant 3.200000e+01 : f32
    %160 = vector.broadcast %cst_78 : f32 to vector<9x1xf32>
    %161 = arith.divf %159, %160 : vector<9x1xf32>
    %162 = vector.broadcast %154 : vector<9x1xf32> to vector<9x32xf32>
    %163 = arith.subf %150, %162 : vector<9x32xf32>
    %cst_79 = arith.constant 9.99999974E-6 : f32
    %164 = vector.broadcast %cst_79 : f32 to vector<9x1xf32>
    %165 = arith.addf %161, %164 : vector<9x1xf32>
    %166 = math.rsqrt %165 : vector<9x1xf32>
    %167 = vector.broadcast %166 : vector<9x1xf32> to vector<9x32xf32>
    %168 = arith.mulf %163, %167 : vector<9x32xf32>
    %169 = vector.broadcast %14 : vector<1x32xf32> to vector<9x32xf32>
    %170 = arith.mulf %168, %169 : vector<9x32xf32>
    %171 = vector.broadcast %16 : vector<1x32xf32> to vector<9x32xf32>
    %172 = arith.addf %170, %171 : vector<9x32xf32>
    %173 = arith.truncf %172 : vector<9x32xf32> to vector<9x32xbf16>
    %cst_80 = arith.constant dense<0.000000e+00> : vector<9x64xf32>
    %174 = tpu.matmul %173, %6, %cst_80 {dimension_numbers = #tpu.dot_dimension_numbers<[1], [0], [0], [1], [0, 0, 1, 1], [], []>} : vector<9x32xbf16>, vector<32x64xbf16>, vector<9x64xf32> -> vector<9x64xf32>
    %175 = vector.broadcast %20 : vector<1x64xf32> to vector<9x64xf32>
    %176 = arith.addf %174, %175 : vector<9x64xf32>
    %cst_81 = arith.constant 5.000000e-01 : f32
    %177 = vector.broadcast %cst_81 : f32 to vector<9x64xf32>
    %178 = arith.mulf %177, %176 : vector<9x64xf32>
    %cst_82 = arith.constant 4.471500e-02 : f32
    %179 = vector.broadcast %cst_82 : f32 to vector<9x64xf32>
    %180 = arith.mulf %179, %176 : vector<9x64xf32>
    %181 = arith.mulf %180, %176 : vector<9x64xf32>
    %182 = arith.mulf %181, %176 : vector<9x64xf32>
    %183 = arith.addf %176, %182 : vector<9x64xf32>
    %cst_83 = arith.constant 0.797884583 : f32
    %184 = vector.broadcast %cst_83 : f32 to vector<9x64xf32>
    %185 = arith.mulf %184, %183 : vector<9x64xf32>
    %186 = math.tanh %185 : vector<9x64xf32>
    %cst_84 = arith.constant 1.000000e+00 : f32
    %187 = vector.broadcast %cst_84 : f32 to vector<9x64xf32>
    %188 = arith.addf %187, %186 : vector<9x64xf32>
    %189 = arith.mulf %178, %188 : vector<9x64xf32>
    %190 = arith.truncf %189 : vector<9x64xf32> to vector<9x64xbf16>
    %cst_85 = arith.constant dense<0.000000e+00> : vector<9x32xf32>
    %191 = tpu.matmul %190, %8, %cst_85 {dimension_numbers = #tpu.dot_dimension_numbers<[1], [0], [0], [1], [0, 0, 1, 1], [], []>} : vector<9x64xbf16>, vector<64x32xbf16>, vector<9x32xf32> -> vector<9x32xf32>
    %192 = vector.broadcast %22 : vector<1x32xf32> to vector<9x32xf32>
    %193 = arith.addf %191, %192 : vector<9x32xf32>
    %194 = arith.addf %150, %193 : vector<9x32xf32>
    %c0_86 = arith.constant 0 : index
    %c0_87 = arith.constant 0 : index
    %c0_88 = arith.constant 0 : index
    %195 = vector.load %arg18[%c0_86, %c0_87, %c0_88] : memref<2x9x32xf32, #tpu.memory_space<vmem>>, vector<1x9x32xf32>
    %196 = vector.shape_cast %195 : vector<1x9x32xf32> to vector<9x32xf32>
    %197 = vector.shape_cast %194 : vector<9x32xf32> to vector<1x9x32xf32>
    tpu.vector_store %arg18[%c0_86, %c0_87, %c0_88], %197 {strides = array<i32>} : memref<2x9x32xf32, #tpu.memory_space<vmem>>, vector<1x9x32xf32>,
    %c1_i32 = arith.constant 1 : i32
    %198 = arith.cmpi eq, %arg0, %c1_i32 : i32
    %199 = arith.extui %198 : i1 to i32
    %c0_i32_89 = arith.constant 0 : i32
    %200 = arith.cmpi ne, %199, %c0_i32_89 : i32
    scf.if %200 {
      %379 = vector.extract_strided_slice %194 {offsets = [0, 0], sizes = [1, 32], strides = [1, 1]} : vector<9x32xf32> to vector<1x32xf32>
      %c0_155 = arith.constant 0 : index
      %c0_156 = arith.constant 0 : index
      %380 = vector.load %arg13[%c0_155, %c0_156] : memref<1x32xf32, #tpu.memory_space<vmem>>, vector<1x32xf32>
      %c0_157 = arith.constant 0 : index
      %c0_158 = arith.constant 0 : index
      %381 = vector.load %arg14[%c0_157, %c0_158] : memref<1x32xf32, #tpu.memory_space<vmem>>, vector<1x32xf32>
      %cst_159 = arith.constant dense<0.000000e+00> : vector<1xf32>
      %382 = vector.multi_reduction <add>, %379, %cst_159 [1] : vector<1x32xf32> to vector<1xf32>
      %383 = vector.shape_cast %382 : vector<1xf32> to vector<1x1xf32>
      %cst_160 = arith.constant 3.200000e+01 : f32
      %384 = vector.broadcast %cst_160 : f32 to vector<1x1xf32>
      %385 = arith.divf %383, %384 : vector<1x1xf32>
      %386 = vector.broadcast %385 : vector<1x1xf32> to vector<1x32xf32>
      %387 = arith.subf %379, %386 : vector<1x32xf32>
      %388 = arith.mulf %387, %387 : vector<1x32xf32>
      %cst_161 = arith.constant dense<0.000000e+00> : vector<1xf32>
      %389 = vector.multi_reduction <add>, %388, %cst_161 [1] : vector<1x32xf32> to vector<1xf32>
      %390 = vector.shape_cast %389 : vector<1xf32> to vector<1x1xf32>
      %cst_162 = arith.constant 3.200000e+01 : f32
      %391 = vector.broadcast %cst_162 : f32 to vector<1x1xf32>
      %392 = arith.divf %390, %391 : vector<1x1xf32>
      %393 = vector.broadcast %385 : vector<1x1xf32> to vector<1x32xf32>
      %394 = arith.subf %379, %393 : vector<1x32xf32>
      %cst_163 = arith.constant 9.99999974E-6 : f32
      %395 = vector.broadcast %cst_163 : f32 to vector<1x1xf32>
      %396 = arith.addf %392, %395 : vector<1x1xf32>
      %397 = math.rsqrt %396 : vector<1x1xf32>
      %398 = vector.broadcast %397 : vector<1x1xf32> to vector<1x32xf32>
      %399 = arith.mulf %394, %398 : vector<1x32xf32>
      %400 = arith.mulf %399, %380 : vector<1x32xf32>
      %401 = arith.addf %400, %381 : vector<1x32xf32>
      %402 = arith.truncf %401 : vector<1x32xf32> to vector<1x32xbf16>
      %c0_164 = arith.constant 0 : index
      %c0_165 = arith.constant 0 : index
      %403 = vector.load %arg15[%c0_164, %c0_165] : memref<32x3xbf16, #tpu.memory_space<vmem>>, vector<32x3xbf16>
      %cst_166 = arith.constant dense<0.000000e+00> : vector<1x3xf32>
      %404 = tpu.matmul %402, %403, %cst_166 {dimension_numbers = #tpu.dot_dimension_numbers<[1], [0], [0], [1], [0, 0, 1, 1], [], []>} : vector<1x32xbf16>, vector<32x3xbf16>, vector<1x3xf32> -> vector<1x3xf32>
      %c0_167 = arith.constant 0 : index
      %c0_168 = arith.constant 0 : index
      %405 = vector.load %arg16[%c0_167, %c0_168] : memref<1x3xf32, #tpu.memory_space<vmem>>, vector<1x3xf32>
      %406 = arith.addf %404, %405 : vector<1x3xf32>
      %c0_169 = arith.constant 0 : index
      %c0_170 = arith.constant 0 : index
      %407 = vector.load %arg17[%c0_169, %c0_170] : memref<2x3xf32, #tpu.memory_space<vmem>>, vector<1x3xf32>
      tpu.vector_store %arg17[%c0_169, %c0_170], %406 {strides = array<i32>} : memref<2x3xf32, #tpu.memory_space<vmem>>, vector<1x3xf32>,
    } else {
    }
    %c1_90 = arith.constant 1 : index
    %c0_91 = arith.constant 0 : index
    %c0_92 = arith.constant 0 : index
    %201 = vector.load %arg18[%c1_90, %c0_91, %c0_92] : memref<2x9x32xf32, #tpu.memory_space<vmem>>, vector<1x9x32xf32>
    %202 = vector.shape_cast %201 : vector<1x9x32xf32> to vector<9x32xf32>
    %cst_93 = arith.constant dense<0.000000e+00> : vector<9xf32>
    %203 = vector.multi_reduction <add>, %202, %cst_93 [1] : vector<9x32xf32> to vector<9xf32>
    %204 = vector.shape_cast %203 : vector<9xf32> to vector<9x1xf32>
    %cst_94 = arith.constant 3.200000e+01 : f32
    %205 = vector.broadcast %cst_94 : f32 to vector<9x1xf32>
    %206 = arith.divf %204, %205 : vector<9x1xf32>
    %207 = vector.broadcast %206 : vector<9x1xf32> to vector<9x32xf32>
    %208 = arith.subf %202, %207 : vector<9x32xf32>
    %209 = arith.mulf %208, %208 : vector<9x32xf32>
    %cst_95 = arith.constant dense<0.000000e+00> : vector<9xf32>
    %210 = vector.multi_reduction <add>, %209, %cst_95 [1] : vector<9x32xf32> to vector<9xf32>
    %211 = vector.shape_cast %210 : vector<9xf32> to vector<9x1xf32>
    %cst_96 = arith.constant 3.200000e+01 : f32
    %212 = vector.broadcast %cst_96 : f32 to vector<9x1xf32>
    %213 = arith.divf %211, %212 : vector<9x1xf32>
    %214 = vector.broadcast %206 : vector<9x1xf32> to vector<9x32xf32>
    %215 = arith.subf %202, %214 : vector<9x32xf32>
    %cst_97 = arith.constant 9.99999974E-6 : f32
    %216 = vector.broadcast %cst_97 : f32 to vector<9x1xf32>
    %217 = arith.addf %213, %216 : vector<9x1xf32>
    %218 = math.rsqrt %217 : vector<9x1xf32>
    %219 = vector.broadcast %218 : vector<9x1xf32> to vector<9x32xf32>
    %220 = arith.mulf %215, %219 : vector<9x32xf32>
    %221 = vector.broadcast %10 : vector<1x32xf32> to vector<9x32xf32>
    %222 = arith.mulf %220, %221 : vector<9x32xf32>
    %223 = vector.broadcast %12 : vector<1x32xf32> to vector<9x32xf32>
    %224 = arith.addf %222, %223 : vector<9x32xf32>
    %225 = arith.truncf %224 : vector<9x32xf32> to vector<9x32xbf16>
    %cst_98 = arith.constant dense<0.000000e+00> : vector<9x96xf32>
    %226 = tpu.matmul %225, %4, %cst_98 {dimension_numbers = #tpu.dot_dimension_numbers<[1], [0], [0], [1], [0, 0, 1, 1], [], []>} : vector<9x32xbf16>, vector<32x96xbf16>, vector<9x96xf32> -> vector<9x96xf32>
    %227 = vector.extract_strided_slice %226 {offsets = [0, 0], sizes = [9, 8], strides = [1, 1]} : vector<9x96xf32> to vector<9x8xf32>
    %228 = vector.extract_strided_slice %226 {offsets = [0, 32], sizes = [9, 8], strides = [1, 1]} : vector<9x96xf32> to vector<9x8xf32>
    %229 = vector.extract_strided_slice %226 {offsets = [0, 64], sizes = [9, 8], strides = [1, 1]} : vector<9x96xf32> to vector<9x8xf32>
    %230 = arith.truncf %227 : vector<9x8xf32> to vector<9x8xbf16>
    %231 = arith.truncf %228 : vector<9x8xf32> to vector<9x8xbf16>
    %cst_99 = arith.constant dense<0.000000e+00> : vector<9x9xf32>
    %232 = tpu.matmul %230, %231, %cst_99 {dimension_numbers = #tpu.dot_dimension_numbers<[1], [1], [0], [0], [0, 0, 1, 0], [], []>} : vector<9x8xbf16>, vector<9x8xbf16>, vector<9x9xf32> -> vector<9x9xf32>
    %cst_100 = arith.constant dense<0xFF800000> : vector<9xf32>
    %233 = vector.multi_reduction <maximumf>, %232, %cst_100 [1] : vector<9x9xf32> to vector<9xf32>
    %234 = vector.shape_cast %233 : vector<9xf32> to vector<9x1xf32>
    %235 = vector.broadcast %234 : vector<9x1xf32> to vector<9x9xf32>
    %236 = arith.subf %232, %235 : vector<9x9xf32>
    %237 = math.exp %236 : vector<9x9xf32>
    %cst_101 = arith.constant dense<0.000000e+00> : vector<9xf32>
    %238 = vector.multi_reduction <add>, %237, %cst_101 [1] : vector<9x9xf32> to vector<9xf32>
    %239 = vector.shape_cast %238 : vector<9xf32> to vector<9x1xf32>
    %cst_102 = arith.constant 1.000000e+00 : f32
    %240 = vector.broadcast %cst_102 : f32 to vector<9x1xf32>
    %241 = arith.divf %240, %239 : vector<9x1xf32>
    %242 = vector.broadcast %241 : vector<9x1xf32> to vector<9x9xf32>
    %243 = arith.mulf %237, %242 : vector<9x9xf32>
    %244 = arith.truncf %243 : vector<9x9xf32> to vector<9x9xbf16>
    %245 = arith.truncf %229 : vector<9x8xf32> to vector<9x8xbf16>
    %cst_103 = arith.constant dense<0.000000e+00> : vector<9x8xf32>
    %246 = tpu.matmul %244, %245, %cst_103 {dimension_numbers = #tpu.dot_dimension_numbers<[1], [0], [0], [1], [0, 0, 1, 1], [], []>} : vector<9x9xbf16>, vector<9x8xbf16>, vector<9x8xf32> -> vector<9x8xf32>
    %247 = arith.truncf %246 : vector<9x8xf32> to vector<9x8xbf16>
    %c0_104 = arith.constant 0 : index
    %c0_105 = arith.constant 0 : index
    %c0_106 = arith.constant 0 : index
    %c0_107 = arith.constant 0 : index
    %248 = vector.load %arg5[%c0_104, %c0_105, %c0_106, %c0_107] : memref<1x4x8x32xbf16, #tpu.memory_space<vmem>>, vector<1x1x8x32xbf16>
    %249 = vector.shape_cast %248 : vector<1x1x8x32xbf16> to vector<8x32xbf16>
    %cst_108 = arith.constant dense<0.000000e+00> : vector<9x32xf32>
    %250 = tpu.matmul %247, %249, %cst_108 {dimension_numbers = #tpu.dot_dimension_numbers<[1], [0], [0], [1], [0, 0, 1, 1], [], []>} : vector<9x8xbf16>, vector<8x32xbf16>, vector<9x32xf32> -> vector<9x32xf32>
    %251 = vector.extract_strided_slice %226 {offsets = [0, 8], sizes = [9, 8], strides = [1, 1]} : vector<9x96xf32> to vector<9x8xf32>
    %252 = vector.extract_strided_slice %226 {offsets = [0, 40], sizes = [9, 8], strides = [1, 1]} : vector<9x96xf32> to vector<9x8xf32>
    %253 = vector.extract_strided_slice %226 {offsets = [0, 72], sizes = [9, 8], strides = [1, 1]} : vector<9x96xf32> to vector<9x8xf32>
    %254 = arith.truncf %251 : vector<9x8xf32> to vector<9x8xbf16>
    %255 = arith.truncf %252 : vector<9x8xf32> to vector<9x8xbf16>
    %cst_109 = arith.constant dense<0.000000e+00> : vector<9x9xf32>
    %256 = tpu.matmul %254, %255, %cst_109 {dimension_numbers = #tpu.dot_dimension_numbers<[1], [1], [0], [0], [0, 0, 1, 0], [], []>} : vector<9x8xbf16>, vector<9x8xbf16>, vector<9x9xf32> -> vector<9x9xf32>
    %cst_110 = arith.constant dense<0xFF800000> : vector<9xf32>
    %257 = vector.multi_reduction <maximumf>, %256, %cst_110 [1] : vector<9x9xf32> to vector<9xf32>
    %258 = vector.shape_cast %257 : vector<9xf32> to vector<9x1xf32>
    %259 = vector.broadcast %258 : vector<9x1xf32> to vector<9x9xf32>
    %260 = arith.subf %256, %259 : vector<9x9xf32>
    %261 = math.exp %260 : vector<9x9xf32>
    %cst_111 = arith.constant dense<0.000000e+00> : vector<9xf32>
    %262 = vector.multi_reduction <add>, %261, %cst_111 [1] : vector<9x9xf32> to vector<9xf32>
    %263 = vector.shape_cast %262 : vector<9xf32> to vector<9x1xf32>
    %cst_112 = arith.constant 1.000000e+00 : f32
    %264 = vector.broadcast %cst_112 : f32 to vector<9x1xf32>
    %265 = arith.divf %264, %263 : vector<9x1xf32>
    %266 = vector.broadcast %265 : vector<9x1xf32> to vector<9x9xf32>
    %267 = arith.mulf %261, %266 : vector<9x9xf32>
    %268 = arith.truncf %267 : vector<9x9xf32> to vector<9x9xbf16>
    %269 = arith.truncf %253 : vector<9x8xf32> to vector<9x8xbf16>
    %cst_113 = arith.constant dense<0.000000e+00> : vector<9x8xf32>
    %270 = tpu.matmul %268, %269, %cst_113 {dimension_numbers = #tpu.dot_dimension_numbers<[1], [0], [0], [1], [0, 0, 1, 1], [], []>} : vector<9x9xbf16>, vector<9x8xbf16>, vector<9x8xf32> -> vector<9x8xf32>
    %271 = arith.truncf %270 : vector<9x8xf32> to vector<9x8xbf16>
    %c0_114 = arith.constant 0 : index
    %c1_115 = arith.constant 1 : index
    %c0_116 = arith.constant 0 : index
    %c0_117 = arith.constant 0 : index
    %272 = vector.load %arg5[%c0_114, %c1_115, %c0_116, %c0_117] : memref<1x4x8x32xbf16, #tpu.memory_space<vmem>>, vector<1x1x8x32xbf16>
    %273 = vector.shape_cast %272 : vector<1x1x8x32xbf16> to vector<8x32xbf16>
    %cst_118 = arith.constant dense<0.000000e+00> : vector<9x32xf32>
    %274 = tpu.matmul %271, %273, %cst_118 {dimension_numbers = #tpu.dot_dimension_numbers<[1], [0], [0], [1], [0, 0, 1, 1], [], []>} : vector<9x8xbf16>, vector<8x32xbf16>, vector<9x32xf32> -> vector<9x32xf32>
    %275 = arith.addf %250, %274 : vector<9x32xf32>
    %276 = vector.extract_strided_slice %226 {offsets = [0, 16], sizes = [9, 8], strides = [1, 1]} : vector<9x96xf32> to vector<9x8xf32>
    %277 = vector.extract_strided_slice %226 {offsets = [0, 48], sizes = [9, 8], strides = [1, 1]} : vector<9x96xf32> to vector<9x8xf32>
    %278 = vector.extract_strided_slice %226 {offsets = [0, 80], sizes = [9, 8], strides = [1, 1]} : vector<9x96xf32> to vector<9x8xf32>
    %279 = arith.truncf %276 : vector<9x8xf32> to vector<9x8xbf16>
    %280 = arith.truncf %277 : vector<9x8xf32> to vector<9x8xbf16>
    %cst_119 = arith.constant dense<0.000000e+00> : vector<9x9xf32>
    %281 = tpu.matmul %279, %280, %cst_119 {dimension_numbers = #tpu.dot_dimension_numbers<[1], [1], [0], [0], [0, 0, 1, 0], [], []>} : vector<9x8xbf16>, vector<9x8xbf16>, vector<9x9xf32> -> vector<9x9xf32>
    %cst_120 = arith.constant dense<0xFF800000> : vector<9xf32>
    %282 = vector.multi_reduction <maximumf>, %281, %cst_120 [1] : vector<9x9xf32> to vector<9xf32>
    %283 = vector.shape_cast %282 : vector<9xf32> to vector<9x1xf32>
    %284 = vector.broadcast %283 : vector<9x1xf32> to vector<9x9xf32>
    %285 = arith.subf %281, %284 : vector<9x9xf32>
    %286 = math.exp %285 : vector<9x9xf32>
    %cst_121 = arith.constant dense<0.000000e+00> : vector<9xf32>
    %287 = vector.multi_reduction <add>, %286, %cst_121 [1] : vector<9x9xf32> to vector<9xf32>
    %288 = vector.shape_cast %287 : vector<9xf32> to vector<9x1xf32>
    %cst_122 = arith.constant 1.000000e+00 : f32
    %289 = vector.broadcast %cst_122 : f32 to vector<9x1xf32>
    %290 = arith.divf %289, %288 : vector<9x1xf32>
    %291 = vector.broadcast %290 : vector<9x1xf32> to vector<9x9xf32>
    %292 = arith.mulf %286, %291 : vector<9x9xf32>
    %293 = arith.truncf %292 : vector<9x9xf32> to vector<9x9xbf16>
    %294 = arith.truncf %278 : vector<9x8xf32> to vector<9x8xbf16>
    %cst_123 = arith.constant dense<0.000000e+00> : vector<9x8xf32>
    %295 = tpu.matmul %293, %294, %cst_123 {dimension_numbers = #tpu.dot_dimension_numbers<[1], [0], [0], [1], [0, 0, 1, 1], [], []>} : vector<9x9xbf16>, vector<9x8xbf16>, vector<9x8xf32> -> vector<9x8xf32>
    %296 = arith.truncf %295 : vector<9x8xf32> to vector<9x8xbf16>
    %c0_124 = arith.constant 0 : index
    %c2_125 = arith.constant 2 : index
    %c0_126 = arith.constant 0 : index
    %c0_127 = arith.constant 0 : index
    %297 = vector.load %arg5[%c0_124, %c2_125, %c0_126, %c0_127] : memref<1x4x8x32xbf16, #tpu.memory_space<vmem>>, vector<1x1x8x32xbf16>
    %298 = vector.shape_cast %297 : vector<1x1x8x32xbf16> to vector<8x32xbf16>
    %cst_128 = arith.constant dense<0.000000e+00> : vector<9x32xf32>
    %299 = tpu.matmul %296, %298, %cst_128 {dimension_numbers = #tpu.dot_dimension_numbers<[1], [0], [0], [1], [0, 0, 1, 1], [], []>} : vector<9x8xbf16>, vector<8x32xbf16>, vector<9x32xf32> -> vector<9x32xf32>
    %300 = arith.addf %275, %299 : vector<9x32xf32>
    %301 = vector.extract_strided_slice %226 {offsets = [0, 24], sizes = [9, 8], strides = [1, 1]} : vector<9x96xf32> to vector<9x8xf32>
    %302 = vector.extract_strided_slice %226 {offsets = [0, 56], sizes = [9, 8], strides = [1, 1]} : vector<9x96xf32> to vector<9x8xf32>
    %303 = vector.extract_strided_slice %226 {offsets = [0, 88], sizes = [9, 8], strides = [1, 1]} : vector<9x96xf32> to vector<9x8xf32>
    %304 = arith.truncf %301 : vector<9x8xf32> to vector<9x8xbf16>
    %305 = arith.truncf %302 : vector<9x8xf32> to vector<9x8xbf16>
    %cst_129 = arith.constant dense<0.000000e+00> : vector<9x9xf32>
    %306 = tpu.matmul %304, %305, %cst_129 {dimension_numbers = #tpu.dot_dimension_numbers<[1], [1], [0], [0], [0, 0, 1, 0], [], []>} : vector<9x8xbf16>, vector<9x8xbf16>, vector<9x9xf32> -> vector<9x9xf32>
    %cst_130 = arith.constant dense<0xFF800000> : vector<9xf32>
    %307 = vector.multi_reduction <maximumf>, %306, %cst_130 [1] : vector<9x9xf32> to vector<9xf32>
    %308 = vector.shape_cast %307 : vector<9xf32> to vector<9x1xf32>
    %309 = vector.broadcast %308 : vector<9x1xf32> to vector<9x9xf32>
    %310 = arith.subf %306, %309 : vector<9x9xf32>
    %311 = math.exp %310 : vector<9x9xf32>
    %cst_131 = arith.constant dense<0.000000e+00> : vector<9xf32>
    %312 = vector.multi_reduction <add>, %311, %cst_131 [1] : vector<9x9xf32> to vector<9xf32>
    %313 = vector.shape_cast %312 : vector<9xf32> to vector<9x1xf32>
    %cst_132 = arith.constant 1.000000e+00 : f32
    %314 = vector.broadcast %cst_132 : f32 to vector<9x1xf32>
    %315 = arith.divf %314, %313 : vector<9x1xf32>
    %316 = vector.broadcast %315 : vector<9x1xf32> to vector<9x9xf32>
    %317 = arith.mulf %311, %316 : vector<9x9xf32>
    %318 = arith.truncf %317 : vector<9x9xf32> to vector<9x9xbf16>
    %319 = arith.truncf %303 : vector<9x8xf32> to vector<9x8xbf16>
    %cst_133 = arith.constant dense<0.000000e+00> : vector<9x8xf32>
    %320 = tpu.matmul %318, %319, %cst_133 {dimension_numbers = #tpu.dot_dimension_numbers<[1], [0], [0], [1], [0, 0, 1, 1], [], []>} : vector<9x9xbf16>, vector<9x8xbf16>, vector<9x8xf32> -> vector<9x8xf32>
    %321 = arith.truncf %320 : vector<9x8xf32> to vector<9x8xbf16>
    %c0_134 = arith.constant 0 : index
    %c3_135 = arith.constant 3 : index
    %c0_136 = arith.constant 0 : index
    %c0_137 = arith.constant 0 : index
    %322 = vector.load %arg5[%c0_134, %c3_135, %c0_136, %c0_137] : memref<1x4x8x32xbf16, #tpu.memory_space<vmem>>, vector<1x1x8x32xbf16>
    %323 = vector.shape_cast %322 : vector<1x1x8x32xbf16> to vector<8x32xbf16>
    %cst_138 = arith.constant dense<0.000000e+00> : vector<9x32xf32>
    %324 = tpu.matmul %321, %323, %cst_138 {dimension_numbers = #tpu.dot_dimension_numbers<[1], [0], [0], [1], [0, 0, 1, 1], [], []>} : vector<9x8xbf16>, vector<8x32xbf16>, vector<9x32xf32> -> vector<9x32xf32>
    %325 = arith.addf %300, %324 : vector<9x32xf32>
    %326 = arith.addf %202, %325 : vector<9x32xf32>
    %327 = vector.broadcast %18 : vector<1x32xf32> to vector<9x32xf32>
    %328 = arith.addf %326, %327 : vector<9x32xf32>
    %cst_139 = arith.constant dense<0.000000e+00> : vector<9xf32>
    %329 = vector.multi_reduction <add>, %328, %cst_139 [1] : vector<9x32xf32> to vector<9xf32>
    %330 = vector.shape_cast %329 : vector<9xf32> to vector<9x1xf32>
    %cst_140 = arith.constant 3.200000e+01 : f32
    %331 = vector.broadcast %cst_140 : f32 to vector<9x1xf32>
    %332 = arith.divf %330, %331 : vector<9x1xf32>
    %333 = vector.broadcast %332 : vector<9x1xf32> to vector<9x32xf32>
    %334 = arith.subf %328, %333 : vector<9x32xf32>
    %335 = arith.mulf %334, %334 : vector<9x32xf32>
    %cst_141 = arith.constant dense<0.000000e+00> : vector<9xf32>
    %336 = vector.multi_reduction <add>, %335, %cst_141 [1] : vector<9x32xf32> to vector<9xf32>
    %337 = vector.shape_cast %336 : vector<9xf32> to vector<9x1xf32>
    %cst_142 = arith.constant 3.200000e+01 : f32
    %338 = vector.broadcast %cst_142 : f32 to vector<9x1xf32>
    %339 = arith.divf %337, %338 : vector<9x1xf32>
    %340 = vector.broadcast %332 : vector<9x1xf32> to vector<9x32xf32>
    %341 = arith.subf %328, %340 : vector<9x32xf32>
    %cst_143 = arith.constant 9.99999974E-6 : f32
    %342 = vector.broadcast %cst_143 : f32 to vector<9x1xf32>
    %343 = arith.addf %339, %342 : vector<9x1xf32>
    %344 = math.rsqrt %343 : vector<9x1xf32>
    %345 = vector.broadcast %344 : vector<9x1xf32> to vector<9x32xf32>
    %346 = arith.mulf %341, %345 : vector<9x32xf32>
    %347 = vector.broadcast %14 : vector<1x32xf32> to vector<9x32xf32>
    %348 = arith.mulf %346, %347 : vector<9x32xf32>
    %349 = vector.broadcast %16 : vector<1x32xf32> to vector<9x32xf32>
    %350 = arith.addf %348, %349 : vector<9x32xf32>
    %351 = arith.truncf %350 : vector<9x32xf32> to vector<9x32xbf16>
    %cst_144 = arith.constant dense<0.000000e+00> : vector<9x64xf32>
    %352 = tpu.matmul %351, %6, %cst_144 {dimension_numbers = #tpu.dot_dimension_numbers<[1], [0], [0], [1], [0, 0, 1, 1], [], []>} : vector<9x32xbf16>, vector<32x64xbf16>, vector<9x64xf32> -> vector<9x64xf32>
    %353 = vector.broadcast %20 : vector<1x64xf32> to vector<9x64xf32>
    %354 = arith.addf %352, %353 : vector<9x64xf32>
    %cst_145 = arith.constant 5.000000e-01 : f32
    %355 = vector.broadcast %cst_145 : f32 to vector<9x64xf32>
    %356 = arith.mulf %355, %354 : vector<9x64xf32>
    %cst_146 = arith.constant 4.471500e-02 : f32
    %357 = vector.broadcast %cst_146 : f32 to vector<9x64xf32>
    %358 = arith.mulf %357, %354 : vector<9x64xf32>
    %359 = arith.mulf %358, %354 : vector<9x64xf32>
    %360 = arith.mulf %359, %354 : vector<9x64xf32>
    %361 = arith.addf %354, %360 : vector<9x64xf32>
    %cst_147 = arith.constant 0.797884583 : f32
    %362 = vector.broadcast %cst_147 : f32 to vector<9x64xf32>
    %363 = arith.mulf %362, %361 : vector<9x64xf32>
    %364 = math.tanh %363 : vector<9x64xf32>
    %cst_148 = arith.constant 1.000000e+00 : f32
    %365 = vector.broadcast %cst_148 : f32 to vector<9x64xf32>
    %366 = arith.addf %365, %364 : vector<9x64xf32>
    %367 = arith.mulf %356, %366 : vector<9x64xf32>
    %368 = arith.truncf %367 : vector<9x64xf32> to vector<9x64xbf16>
    %cst_149 = arith.constant dense<0.000000e+00> : vector<9x32xf32>
    %369 = tpu.matmul %368, %8, %cst_149 {dimension_numbers = #tpu.dot_dimension_numbers<[1], [0], [0], [1], [0, 0, 1, 1], [], []>} : vector<9x64xbf16>, vector<64x32xbf16>, vector<9x32xf32> -> vector<9x32xf32>
    %370 = vector.broadcast %22 : vector<1x32xf32> to vector<9x32xf32>
    %371 = arith.addf %369, %370 : vector<9x32xf32>
    %372 = arith.addf %328, %371 : vector<9x32xf32>
    %c1_150 = arith.constant 1 : index
    %c0_151 = arith.constant 0 : index
    %c0_152 = arith.constant 0 : index
    %373 = vector.load %arg18[%c1_150, %c0_151, %c0_152] : memref<2x9x32xf32, #tpu.memory_space<vmem>>, vector<1x9x32xf32>
    %374 = vector.shape_cast %373 : vector<1x9x32xf32> to vector<9x32xf32>
    %375 = vector.shape_cast %372 : vector<9x32xf32> to vector<1x9x32xf32>
    tpu.vector_store %arg18[%c1_150, %c0_151, %c0_152], %375 {strides = array<i32>} : memref<2x9x32xf32, #tpu.memory_space<vmem>>, vector<1x9x32xf32>,
    %c1_i32_153 = arith.constant 1 : i32
    %376 = arith.cmpi eq, %arg0, %c1_i32_153 : i32
    %377 = arith.extui %376 : i1 to i32
    %c0_i32_154 = arith.constant 0 : i32
    %378 = arith.cmpi ne, %377, %c0_i32_154 : i32
    scf.if %378 {
      %379 = vector.extract_strided_slice %372 {offsets = [0, 0], sizes = [1, 32], strides = [1, 1]} : vector<9x32xf32> to vector<1x32xf32>
      %c0_155 = arith.constant 0 : index
      %c0_156 = arith.constant 0 : index
      %380 = vector.load %arg13[%c0_155, %c0_156] : memref<1x32xf32, #tpu.memory_space<vmem>>, vector<1x32xf32>
      %c0_157 = arith.constant 0 : index
      %c0_158 = arith.constant 0 : index
      %381 = vector.load %arg14[%c0_157, %c0_158] : memref<1x32xf32, #tpu.memory_space<vmem>>, vector<1x32xf32>
      %cst_159 = arith.constant dense<0.000000e+00> : vector<1xf32>
      %382 = vector.multi_reduction <add>, %379, %cst_159 [1] : vector<1x32xf32> to vector<1xf32>
      %383 = vector.shape_cast %382 : vector<1xf32> to vector<1x1xf32>
      %cst_160 = arith.constant 3.200000e+01 : f32
      %384 = vector.broadcast %cst_160 : f32 to vector<1x1xf32>
      %385 = arith.divf %383, %384 : vector<1x1xf32>
      %386 = vector.broadcast %385 : vector<1x1xf32> to vector<1x32xf32>
      %387 = arith.subf %379, %386 : vector<1x32xf32>
      %388 = arith.mulf %387, %387 : vector<1x32xf32>
      %cst_161 = arith.constant dense<0.000000e+00> : vector<1xf32>
      %389 = vector.multi_reduction <add>, %388, %cst_161 [1] : vector<1x32xf32> to vector<1xf32>
      %390 = vector.shape_cast %389 : vector<1xf32> to vector<1x1xf32>
      %cst_162 = arith.constant 3.200000e+01 : f32
      %391 = vector.broadcast %cst_162 : f32 to vector<1x1xf32>
      %392 = arith.divf %390, %391 : vector<1x1xf32>
      %393 = vector.broadcast %385 : vector<1x1xf32> to vector<1x32xf32>
      %394 = arith.subf %379, %393 : vector<1x32xf32>
      %cst_163 = arith.constant 9.99999974E-6 : f32
      %395 = vector.broadcast %cst_163 : f32 to vector<1x1xf32>
      %396 = arith.addf %392, %395 : vector<1x1xf32>
      %397 = math.rsqrt %396 : vector<1x1xf32>
      %398 = vector.broadcast %397 : vector<1x1xf32> to vector<1x32xf32>
      %399 = arith.mulf %394, %398 : vector<1x32xf32>
      %400 = arith.mulf %399, %380 : vector<1x32xf32>
      %401 = arith.addf %400, %381 : vector<1x32xf32>
      %402 = arith.truncf %401 : vector<1x32xf32> to vector<1x32xbf16>
      %c0_164 = arith.constant 0 : index
      %c0_165 = arith.constant 0 : index
      %403 = vector.load %arg15[%c0_164, %c0_165] : memref<32x3xbf16, #tpu.memory_space<vmem>>, vector<32x3xbf16>
      %cst_166 = arith.constant dense<0.000000e+00> : vector<1x3xf32>
      %404 = tpu.matmul %402, %403, %cst_166 {dimension_numbers = #tpu.dot_dimension_numbers<[1], [0], [0], [1], [0, 0, 1, 1], [], []>} : vector<1x32xbf16>, vector<32x3xbf16>, vector<1x3xf32> -> vector<1x3xf32>
      %c0_167 = arith.constant 0 : index
      %c0_168 = arith.constant 0 : index
      %405 = vector.load %arg16[%c0_167, %c0_168] : memref<1x3xf32, #tpu.memory_space<vmem>>, vector<1x3xf32>
      %406 = arith.addf %404, %405 : vector<1x3xf32>
      %c1_169 = arith.constant 1 : index
      %c0_170 = arith.constant 0 : index
      %407 = vector.load %arg17[%c1_169, %c0_170] : memref<2x3xf32, #tpu.memory_space<vmem>>, vector<1x3xf32>
      tpu.vector_store %arg17[%c1_169, %c0_170], %406 {strides = array<i32>} : memref<2x3xf32, #tpu.memory_space<vmem>>, vector<1x3xf32>,
    } else {
    }
    return
  }
  func.func @transform_0(%arg0: i32) -> (i32, i32, i32) {
    %c0_i32 = arith.constant 0 : i32
    %c0_i32_0 = arith.constant 0 : i32
    %c0_i32_1 = arith.constant 0 : i32
    %c0_i32_2 = arith.constant 0 : i32
    return %c0_i32, %c0_i32_0, %c0_i32_1 : i32, i32, i32
  }
  func.func @transform_1(%arg0: i32) -> (i32, i32, i32) {
    %c0_i32 = arith.constant 0 : i32
    %c0_i32_0 = arith.constant 0 : i32
    %c0_i32_1 = arith.constant 0 : i32
    return %arg0, %c0_i32, %c0_i32_0 : i32, i32, i32
  }
  func.func @transform_2(%arg0: i32) -> (i32, i32, i32) {
    %c0_i32 = arith.constant 0 : i32
    %c0_i32_0 = arith.constant 0 : i32
    %c0_i32_1 = arith.constant 0 : i32
    return %arg0, %c0_i32, %c0_i32_0 : i32, i32, i32
  }
  func.func @transform_3(%arg0: i32) -> (i32, i32, i32) {
    %c0_i32 = arith.constant 0 : i32
    %c0_i32_0 = arith.constant 0 : i32
    %c0_i32_1 = arith.constant 0 : i32
    return %arg0, %c0_i32, %c0_i32_0 : i32, i32, i32
  }
  func.func @transform_4(%arg0: i32) -> (i32, i32, i32, i32) {
    %c0_i32 = arith.constant 0 : i32
    %c0_i32_0 = arith.constant 0 : i32
    %c0_i32_1 = arith.constant 0 : i32
    %c0_i32_2 = arith.constant 0 : i32
    return %arg0, %c0_i32, %c0_i32_0, %c0_i32_1 : i32, i32, i32, i32
  }
  func.func @transform_5(%arg0: i32) -> (i32, i32, i32) {
    %c0_i32 = arith.constant 0 : i32
    %c0_i32_0 = arith.constant 0 : i32
    %c0_i32_1 = arith.constant 0 : i32
    return %arg0, %c0_i32, %c0_i32_0 : i32, i32, i32
  }
  func.func @transform_6(%arg0: i32) -> (i32, i32, i32) {
    %c0_i32 = arith.constant 0 : i32
    %c0_i32_0 = arith.constant 0 : i32
    %c0_i32_1 = arith.constant 0 : i32
    return %arg0, %c0_i32, %c0_i32_0 : i32, i32, i32
  }
  func.func @transform_7(%arg0: i32) -> (i32, i32, i32) {
    %c0_i32 = arith.constant 0 : i32
    %c0_i32_0 = arith.constant 0 : i32
    %c0_i32_1 = arith.constant 0 : i32
    return %arg0, %c0_i32, %c0_i32_0 : i32, i32, i32
  }
  func.func @transform_8(%arg0: i32) -> (i32, i32, i32) {
    %c0_i32 = arith.constant 0 : i32
    %c0_i32_0 = arith.constant 0 : i32
    %c0_i32_1 = arith.constant 0 : i32
    return %arg0, %c0_i32, %c0_i32_0 : i32, i32, i32
  }
  func.func @transform_9(%arg0: i32) -> (i32, i32, i32) {
    %c0_i32 = arith.constant 0 : i32
    %c0_i32_0 = arith.constant 0 : i32
    %c0_i32_1 = arith.constant 0 : i32
    return %arg0, %c0_i32, %c0_i32_0 : i32, i32, i32
  }
  func.func @transform_10(%arg0: i32) -> (i32, i32, i32) {
    %c0_i32 = arith.constant 0 : i32
    %c0_i32_0 = arith.constant 0 : i32
    %c0_i32_1 = arith.constant 0 : i32
    return %arg0, %c0_i32, %c0_i32_0 : i32, i32, i32
  }
  func.func @transform_11(%arg0: i32) -> (i32, i32, i32) {
    %c0_i32 = arith.constant 0 : i32
    %c0_i32_0 = arith.constant 0 : i32
    %c0_i32_1 = arith.constant 0 : i32
    return %arg0, %c0_i32, %c0_i32_0 : i32, i32, i32
  }
  func.func @transform_12(%arg0: i32) -> (i32, i32) {
    %c0_i32 = arith.constant 0 : i32
    %c0_i32_0 = arith.constant 0 : i32
    %c0_i32_1 = arith.constant 0 : i32
    return %c0_i32, %c0_i32_0 : i32, i32
  }
  func.func @transform_13(%arg0: i32) -> (i32, i32) {
    %c0_i32 = arith.constant 0 : i32
    %c0_i32_0 = arith.constant 0 : i32
    %c0_i32_1 = arith.constant 0 : i32
    return %c0_i32, %c0_i32_0 : i32, i32
  }
  func.func @transform_14(%arg0: i32) -> (i32, i32) {
    %c0_i32 = arith.constant 0 : i32
    %c0_i32_0 = arith.constant 0 : i32
    %c0_i32_1 = arith.constant 0 : i32
    return %c0_i32, %c0_i32_0 : i32, i32
  }
  func.func @transform_15(%arg0: i32) -> (i32, i32) {
    %c0_i32 = arith.constant 0 : i32
    %c0_i32_0 = arith.constant 0 : i32
    %c0_i32_1 = arith.constant 0 : i32
    return %c0_i32, %c0_i32_0 : i32, i32
  }
  func.func @transform_16(%arg0: i32) -> (i32, i32) {
    %c0_i32 = arith.constant 0 : i32
    %c0_i32_0 = arith.constant 0 : i32
    %c0_i32_1 = arith.constant 0 : i32
    return %c0_i32, %c0_i32_0 : i32, i32
  }
}

</mosaic_0001>

<llo_original>
// kernel: mp_avit_forward.1
$region0: #{mp_avit_forward.1}
  #allocation0 [shape = 'u32[]', space=smem, size = 0x4, offset = 0x4, fixed_abs, tag = 'smem constant byte address 0x4 - core index']
  #allocation1 [shape = 'u32[72,128]{1,0:T(1,128)}', space=vmem, size = 0x9000, scoped, tag = 'internal scratch']
  #allocation2 [shape = 'f32[2,9,32]{2,1,0:T(8,128)}', space=vmem, size = 0x4000, scoped, tag = 'scratch operand']
  %s0 = inlined_call_operand.vmem [shape: f32[2,9,32], index: 0, kind: input, shape index: {}]
  %s1 = inlined_call_operand.vmem [shape: f32[2,1,32], index: 1, kind: input, shape index: {}]
  %s2 = inlined_call_operand.vmem [shape: f32[2,1,32], index: 2, kind: input, shape index: {}]
  %s3 = inlined_call_operand.vmem [shape: bf16[2,32,96], index: 3, kind: input, shape index: {}]
  %s4 = inlined_call_operand.vmem [shape: bf16[2,4,8,32], index: 4, kind: input, shape index: {}]
  %s5 = inlined_call_operand.vmem [shape: f32[2,1,32], index: 5, kind: input, shape index: {}]
  %s6 = inlined_call_operand.vmem [shape: f32[2,1,32], index: 6, kind: input, shape index: {}]
  %s7 = inlined_call_operand.vmem [shape: f32[2,1,32], index: 7, kind: input, shape index: {}]
  %s8 = inlined_call_operand.vmem [shape: bf16[2,32,64], index: 8, kind: input, shape index: {}]
  %s9 = inlined_call_operand.vmem [shape: f32[2,1,64], index: 9, kind: input, shape index: {}]
  %s10 = inlined_call_operand.vmem [shape: bf16[2,64,32], index: 10, kind: input, shape index: {}]
  %s11 = inlined_call_operand.vmem [shape: f32[2,1,32], index: 11, kind: input, shape index: {}]
  %s12 = inlined_call_operand.vmem [shape: f32[1,32], index: 12, kind: input, shape index: {}]
  %s13 = inlined_call_operand.vmem [shape: f32[1,32], index: 13, kind: input, shape index: {}]
  %s14 = inlined_call_operand.vmem [shape: bf16[32,3], index: 14, kind: input, shape index: {}]
  %s15 = inlined_call_operand.vmem [shape: f32[1,3], index: 15, kind: input, shape index: {}]
  %s16 = inlined_call_operand.hbm [shape: f32[2,3], index: 16, kind: output, shape index: {}]
  %s17 = sld [smem:[#allocation0]]
  $region109: #{mp_avit_forward.1} parent=0
    _
  %s19 = ssub.s32 1, %s17
  %s20 = scalar_select 0, %s19, %s17
  $region1: #{mp_avit_forward.1} parent=0
    #allocation3 [shape = 'u8[1024]{0}', space=vmem, size = 0x400, scoped, tag = 'output window, operand 0, single buffered']
    #allocation4 [shape = 's32[2]{0}', space=sflag, size = 0x8, scoped, tag = 'scoped memory for mp_avit_forward.1']
    %21 = vsyncpa [#allocation4], 0
    loop: start=0, step=1, limit=4
    $region2: #{mp_avit_forward.1} parent=1 // loop_pre_header
      _
    $region3: #{mp_avit_forward.1} parent=1 // loop_header
      %s23 = sphi 0, %s27
      %p24 = scmp.ge.s32.totalorder %s23, 4
      %s31 = sphi 0, %s31
      %s33 = sphi 0, %s31
      %s34 = sphi 0, %s33
      %s48 = sphi 0, %s34
      %s54 = sphi 0, %s56
      %s57 = sphi 0, %s54
      %s58 = sphi 0, %s57
      %s74 = sphi 0, %s58
      %s80 = sphi 0, %s82
      %s83 = sphi 0, %s80
      %s84 = sphi 0, %s83
      %s100 = sphi 0, %s84
      %s106 = sphi 0, %s108
      %s109 = sphi 0, %s106
      %s110 = sphi 0, %s109
      %s126 = sphi 0, %s110
      %s132 = sphi 0, %s134
      %s135 = sphi 0, %s132
      %s136 = sphi 0, %s135
      %s152 = sphi 0, %s136
      %s158 = sphi 0, %s160
      %s161 = sphi 0, %s158
      %s162 = sphi 0, %s161
      %s178 = sphi 0, %s162
      %s184 = sphi 0, %s186
      %s187 = sphi 0, %s184
      %s188 = sphi 0, %s187
      %s204 = sphi 0, %s188
      %s210 = sphi 0, %s212
      %s213 = sphi 0, %s210
      %s214 = sphi 0, %s213
      %s230 = sphi 0, %s214
      %s236 = sphi 0, %s238
      %s239 = sphi 0, %s236
      %s240 = sphi 0, %s239
      %s256 = sphi 0, %s240
      %s262 = sphi 0, %s264
      %s265 = sphi 0, %s262
      %s266 = sphi 0, %s265
      %s282 = sphi 0, %s266
      %s288 = sphi 0, %s290
      %s291 = sphi 0, %s288
      %s292 = sphi 0, %s291
      %s308 = sphi 0, %s292
      %s314 = sphi 0, %s316
      %s317 = sphi 0, %s314
      %s318 = sphi 0, %s317
      %s334 = sphi 0, %s318
      %s338 = sphi 0, %s338
      %s340 = sphi 0, %s338
      %s341 = sphi 0, %s340
      %s355 = sphi 0, %s341
      %s359 = sphi 0, %s359
      %s361 = sphi 0, %s359
      %s362 = sphi 0, %s361
      %s376 = sphi 0, %s362
      %s380 = sphi 0, %s380
      %s382 = sphi 0, %s380
      %s383 = sphi 0, %s382
      %s397 = sphi 0, %s383
      %s401 = sphi 0, %s401
      %s403 = sphi 0, %s401
      %s404 = sphi 0, %s403
      %s418 = sphi 0, %s404
      %s422 = sphi 0, %s422
      %s424 = sphi 0, %s422
      %s425 = sphi 0, %s424
      %s439 = sphi 0, %s425
    $region4: #{mp_avit_forward.1} parent=1 // loop_header_branch
      %26 = sbr.rel (%p24) target = $region8
    $region5: #{mp_avit_forward.1} parent=1 // loop_body
      %s28 = ssub.s32 %s23, 1
      %s29 = ssub.s32 %s23, 2
      %s30 = sadd.s32 %s23, 1
      %s32 = sadd.s32 %s31, 1
      %p35 = scmp.eq.s32.totalorder %s23, 1
      %p36 = scmp.ne.s32.totalorder %s31, %s33
      %p37 = scmp.eq.s32.totalorder %s23, 0
      %p38 = por %p36, %p37
      %p39 = scmp.ne.s32.totalorder %s31, %s33
      %p40 = scmp.eq.s32.totalorder %s28, 1
      %p41 = por %p39, %p40
      %p42 = scmp.ne.s32.totalorder %s33, %s34
      %p43 = scmp.eq.s32.totalorder %s28, 0
      %p44 = por %p42, %p43
      %p45 = scmp.ne.s32.totalorder %s33, %s34
      %p46 = scmp.eq.s32.totalorder %s29, 1
      %p47 = por %p45, %p46
      %p49 = scmp.ne.s32.totalorder %s34, %s48
      %p50 = scmp.eq.s32.totalorder %s29, 0
      %p51 = por %p49, %p50
      %s52 = ssub.s32 %s23, %s30
      %p53 = scmp.eq.s32.totalorder %s52, 0
      %s55 = sadd.s32 %s54, 1
      %s56 = scalar_select %p53, %s54, %s55
      %p59 = pneg %p53
      %p60 = scmp.eq.s32.totalorder %s23, 1
      %p61 = por %p59, %p60
      %p62 = scmp.ne.s32.totalorder %s54, %s57
      %p63 = scmp.eq.s32.totalorder %s23, 0
      %p64 = por %p62, %p63
      %p65 = scmp.ne.s32.totalorder %s54, %s57
      %p66 = scmp.eq.s32.totalorder %s28, 1
      %p67 = por %p65, %p66
      %p68 = scmp.ne.s32.totalorder %s57, %s58
      %p69 = scmp.eq.s32.totalorder %s28, 0
      %p70 = por %p68, %p69
      %p71 = scmp.ne.s32.totalorder %s57, %s58
      %p72 = scmp.eq.s32.totalorder %s29, 1
      %p73 = por %p71, %p72
      %p75 = scmp.ne.s32.totalorder %s58, %s74
      %p76 = scmp.eq.s32.totalorder %s29, 0
      %p77 = por %p75, %p76
      %s78 = ssub.s32 %s23, %s30
      %p79 = scmp.eq.s32.totalorder %s78, 0
      %s81 = sadd.s32 %s80, 1
      %s82 = scalar_select %p79, %s80, %s81
      %p85 = pneg %p79
      %p86 = scmp.eq.s32.totalorder %s23, 1
      %p87 = por %p85, %p86
      %p88 = scmp.ne.s32.totalorder %s80, %s83
      %p89 = scmp.eq.s32.totalorder %s23, 0
      %p90 = por %p88, %p89
      %p91 = scmp.ne.s32.totalorder %s80, %s83
      %p92 = scmp.eq.s32.totalorder %s28, 1
      %p93 = por %p91, %p92
      %p94 = scmp.ne.s32.totalorder %s83, %s84
      %p95 = scmp.eq.s32.totalorder %s28, 0
      %p96 = por %p94, %p95
      %p97 = scmp.ne.s32.totalorder %s83, %s84
      %p98 = scmp.eq.s32.totalorder %s29, 1
      %p99 = por %p97, %p98
      %p101 = scmp.ne.s32.totalorder %s84, %s100
      %p102 = scmp.eq.s32.totalorder %s29, 0
      %p103 = por %p101, %p102
      %s104 = ssub.s32 %s23, %s30
      %p105 = scmp.eq.s32.totalorder %s104, 0
      %s107 = sadd.s32 %s106, 1
      %s108 = scalar_select %p105, %s106, %s107
      %p111 = pneg %p105
      %p112 = scmp.eq.s32.totalorder %s23, 1
      %p113 = por %p111, %p112
      %p114 = scmp.ne.s32.totalorder %s106, %s109
      %p115 = scmp.eq.s32.totalorder %s23, 0
      %p116 = por %p114, %p115
      %p117 = scmp.ne.s32.totalorder %s106, %s109
      %p118 = scmp.eq.s32.totalorder %s28, 1
      %p119 = por %p117, %p118
      %p120 = scmp.ne.s32.totalorder %s109, %s110
      %p121 = scmp.eq.s32.totalorder %s28, 0
      %p122 = por %p120, %p121
      %p123 = scmp.ne.s32.totalorder %s109, %s110
      %p124 = scmp.eq.s32.totalorder %s29, 1
      %p125 = por %p123, %p124
      %p127 = scmp.ne.s32.totalorder %s110, %s126
      %p128 = scmp.eq.s32.totalorder %s29, 0
      %p129 = por %p127, %p128
      %s130 = ssub.s32 %s23, %s30
      %p131 = scmp.eq.s32.totalorder %s130, 0
      %s133 = sadd.s32 %s132, 1
      %s134 = scalar_select %p131, %s132, %s133
      %p137 = pneg %p131
      %p138 = scmp.eq.s32.totalorder %s23, 1
      %p139 = por %p137, %p138
      %p140 = scmp.ne.s32.totalorder %s132, %s135
      %p141 = scmp.eq.s32.totalorder %s23, 0
      %p142 = por %p140, %p141
      %p143 = scmp.ne.s32.totalorder %s132, %s135
      %p144 = scmp.eq.s32.totalorder %s28, 1
      %p145 = por %p143, %p144
      %p146 = scmp.ne.s32.totalorder %s135, %s136
      %p147 = scmp.eq.s32.totalorder %s28, 0
      %p148 = por %p146, %p147
      %p149 = scmp.ne.s32.totalorder %s135, %s136
      %p150 = scmp.eq.s32.totalorder %s29, 1
      %p151 = por %p149, %p150
      %p153 = scmp.ne.s32.totalorder %s136, %s152
      %p154 = scmp.eq.s32.totalorder %s29, 0
      %p155 = por %p153, %p154
      %s156 = ssub.s32 %s23, %s30
      %p157 = scmp.eq.s32.totalorder %s156, 0
      %s159 = sadd.s32 %s158, 1
      %s160 = scalar_select %p157, %s158, %s159
      %p163 = pneg %p157
      %p164 = scmp.eq.s32.totalorder %s23, 1
      %p165 = por %p163, %p164
      %p166 = scmp.ne.s32.totalorder %s158, %s161
      %p167 = scmp.eq.s32.totalorder %s23, 0
      %p168 = por %p166, %p167
      %p169 = scmp.ne.s32.totalorder %s158, %s161
      %p170 = scmp.eq.s32.totalorder %s28, 1
      %p171 = por %p169, %p170
      %p172 = scmp.ne.s32.totalorder %s161, %s162
      %p173 = scmp.eq.s32.totalorder %s28, 0
      %p174 = por %p172, %p173
      %p175 = scmp.ne.s32.totalorder %s161, %s162
      %p176 = scmp.eq.s32.totalorder %s29, 1
      %p177 = por %p175, %p176
      %p179 = scmp.ne.s32.totalorder %s162, %s178
      %p180 = scmp.eq.s32.totalorder %s29, 0
      %p181 = por %p179, %p180
      %s182 = ssub.s32 %s23, %s30
      %p183 = scmp.eq.s32.totalorder %s182, 0
      %s185 = sadd.s32 %s184, 1
      %s186 = scalar_select %p183, %s184, %s185
      %p189 = pneg %p183
      %p190 = scmp.eq.s32.totalorder %s23, 1
      %p191 = por %p189, %p190
      %p192 = scmp.ne.s32.totalorder %s184, %s187
      %p193 = scmp.eq.s32.totalorder %s23, 0
      %p194 = por %p192, %p193
      %p195 = scmp.ne.s32.totalorder %s184, %s187
      %p196 = scmp.eq.s32.totalorder %s28, 1
      %p197 = por %p195, %p196
      %p198 = scmp.ne.s32.totalorder %s187, %s188
      %p199 = scmp.eq.s32.totalorder %s28, 0
      %p200 = por %p198, %p199
      %p201 = scmp.ne.s32.totalorder %s187, %s188
      %p202 = scmp.eq.s32.totalorder %s29, 1
      %p203 = por %p201, %p202
      %p205 = scmp.ne.s32.totalorder %s188, %s204
      %p206 = scmp.eq.s32.totalorder %s29, 0
      %p207 = por %p205, %p206
      %s208 = ssub.s32 %s23, %s30
      %p209 = scmp.eq.s32.totalorder %s208, 0
      %s211 = sadd.s32 %s210, 1
      %s212 = scalar_select %p209, %s210, %s211
      %p215 = pneg %p209
      %p216 = scmp.eq.s32.totalorder %s23, 1
      %p217 = por %p215, %p216
      %p218 = scmp.ne.s32.totalorder %s210, %s213
      %p219 = scmp.eq.s32.totalorder %s23, 0
      %p220 = por %p218, %p219
      %p221 = scmp.ne.s32.totalorder %s210, %s213
      %p222 = scmp.eq.s32.totalorder %s28, 1
      %p223 = por %p221, %p222
      %p224 = scmp.ne.s32.totalorder %s213, %s214
      %p225 = scmp.eq.s32.totalorder %s28, 0
      %p226 = por %p224, %p225
      %p227 = scmp.ne.s32.totalorder %s213, %s214
      %p228 = scmp.eq.s32.totalorder %s29, 1
      %p229 = por %p227, %p228
      %p231 = scmp.ne.s32.totalorder %s214, %s230
      %p232 = scmp.eq.s32.totalorder %s29, 0
      %p233 = por %p231, %p232
      %s234 = ssub.s32 %s23, %s30
      %p235 = scmp.eq.s32.totalorder %s234, 0
      %s237 = sadd.s32 %s236, 1
      %s238 = scalar_select %p235, %s236, %s237
      %p241 = pneg %p235
      %p242 = scmp.eq.s32.totalorder %s23, 1
      %p243 = por %p241, %p242
      %p244 = scmp.ne.s32.totalorder %s236, %s239
      %p245 = scmp.eq.s32.totalorder %s23, 0
      %p246 = por %p244, %p245
      %p247 = scmp.ne.s32.totalorder %s236, %s239
      %p248 = scmp.eq.s32.totalorder %s28, 1
      %p249 = por %p247, %p248
      %p250 = scmp.ne.s32.totalorder %s239, %s240
      %p251 = scmp.eq.s32.totalorder %s28, 0
      %p252 = por %p250, %p251
      %p253 = scmp.ne.s32.totalorder %s239, %s240
      %p254 = scmp.eq.s32.totalorder %s29, 1
      %p255 = por %p253, %p254
      %p257 = scmp.ne.s32.totalorder %s240, %s256
      %p258 = scmp.eq.s32.totalorder %s29, 0
      %p259 = por %p257, %p258
      %s260 = ssub.s32 %s23, %s30
      %p261 = scmp.eq.s32.totalorder %s260, 0
      %s263 = sadd.s32 %s262, 1
      %s264 = scalar_select %p261, %s262, %s263
      %p267 = pneg %p261
      %p268 = scmp.eq.s32.totalorder %s23, 1
      %p269 = por %p267, %p268
      %p270 = scmp.ne.s32.totalorder %s262, %s265
      %p271 = scmp.eq.s32.totalorder %s23, 0
      %p272 = por %p270, %p271
      %p273 = scmp.ne.s32.totalorder %s262, %s265
      %p274 = scmp.eq.s32.totalorder %s28, 1
      %p275 = por %p273, %p274
      %p276 = scmp.ne.s32.totalorder %s265, %s266
      %p277 = scmp.eq.s32.totalorder %s28, 0
      %p278 = por %p276, %p277
      %p279 = scmp.ne.s32.totalorder %s265, %s266
      %p280 = scmp.eq.s32.totalorder %s29, 1
      %p281 = por %p279, %p280
      %p283 = scmp.ne.s32.totalorder %s266, %s282
      %p284 = scmp.eq.s32.totalorder %s29, 0
      %p285 = por %p283, %p284
      %s286 = ssub.s32 %s23, %s30
      %p287 = scmp.eq.s32.totalorder %s286, 0
      %s289 = sadd.s32 %s288, 1
      %s290 = scalar_select %p287, %s288, %s289
      %p293 = pneg %p287
      %p294 = scmp.eq.s32.totalorder %s23, 1
      %p295 = por %p293, %p294
      %p296 = scmp.ne.s32.totalorder %s288, %s291
      %p297 = scmp.eq.s32.totalorder %s23, 0
      %p298 = por %p296, %p297
      %p299 = scmp.ne.s32.totalorder %s288, %s291
      %p300 = scmp.eq.s32.totalorder %s28, 1
      %p301 = por %p299, %p300
      %p302 = scmp.ne.s32.totalorder %s291, %s292
      %p303 = scmp.eq.s32.totalorder %s28, 0
      %p304 = por %p302, %p303
      %p305 = scmp.ne.s32.totalorder %s291, %s292
      %p306 = scmp.eq.s32.totalorder %s29, 1
      %p307 = por %p305, %p306
      %p309 = scmp.ne.s32.totalorder %s292, %s308
      %p310 = scmp.eq.s32.totalorder %s29, 0
      %p311 = por %p309, %p310
      %s312 = ssub.s32 %s23, %s30
      %p313 = scmp.eq.s32.totalorder %s312, 0
      %s315 = sadd.s32 %s314, 1
      %s316 = scalar_select %p313, %s314, %s315
      %p319 = pneg %p313
      %p320 = scmp.eq.s32.totalorder %s23, 1
      %p321 = por %p319, %p320
      %p322 = scmp.ne.s32.totalorder %s314, %s317
      %p323 = scmp.eq.s32.totalorder %s23, 0
      %p324 = por %p322, %p323
      %p325 = scmp.ne.s32.totalorder %s314, %s317
      %p326 = scmp.eq.s32.totalorder %s28, 1
      %p327 = por %p325, %p326
      %p328 = scmp.ne.s32.totalorder %s317, %s318
      %p329 = scmp.eq.s32.totalorder %s28, 0
      %p330 = por %p328, %p329
      %p331 = scmp.ne.s32.totalorder %s317, %s318
      %p332 = scmp.eq.s32.totalorder %s29, 1
      %p333 = por %p331, %p332
      %p335 = scmp.ne.s32.totalorder %s318, %s334
      %p336 = scmp.eq.s32.totalorder %s29, 0
      %p337 = por %p335, %p336
      %s339 = sadd.s32 %s338, 1
      %p342 = scmp.eq.s32.totalorder %s23, 1
      %p343 = scmp.ne.s32.totalorder %s338, %s340
      %p344 = scmp.eq.s32.totalorder %s23, 0
      %p345 = por %p343, %p344
      %p346 = scmp.ne.s32.totalorder %s338, %s340
      %p347 = scmp.eq.s32.totalorder %s28, 1
      %p348 = por %p346, %p347
      %p349 = scmp.ne.s32.totalorder %s340, %s341
      %p350 = scmp.eq.s32.totalorder %s28, 0
      %p351 = por %p349, %p350
      %p352 = scmp.ne.s32.totalorder %s340, %s341
      %p353 = scmp.eq.s32.totalorder %s29, 1
      %p354 = por %p352, %p353
      %p356 = scmp.ne.s32.totalorder %s341, %s355
      %p357 = scmp.eq.s32.totalorder %s29, 0
      %p358 = por %p356, %p357
      %s360 = sadd.s32 %s359, 1
      %p363 = scmp.eq.s32.totalorder %s23, 1
      %p364 = scmp.ne.s32.totalorder %s359, %s361
      %p365 = scmp.eq.s32.totalorder %s23, 0
      %p366 = por %p364, %p365
      %p367 = scmp.ne.s32.totalorder %s359, %s361
      %p368 = scmp.eq.s32.totalorder %s28, 1
      %p369 = por %p367, %p368
      %p370 = scmp.ne.s32.totalorder %s361, %s362
      %p371 = scmp.eq.s32.totalorder %s28, 0
      %p372 = por %p370, %p371
      %p373 = scmp.ne.s32.totalorder %s361, %s362
      %p374 = scmp.eq.s32.totalorder %s29, 1
      %p375 = por %p373, %p374
      %p377 = scmp.ne.s32.totalorder %s362, %s376
      %p378 = scmp.eq.s32.totalorder %s29, 0
      %p379 = por %p377, %p378
      %s381 = sadd.s32 %s380, 1
      %p384 = scmp.eq.s32.totalorder %s23, 1
      %p385 = scmp.ne.s32.totalorder %s380, %s382
      %p386 = scmp.eq.s32.totalorder %s23, 0
      %p387 = por %p385, %p386
      %p388 = scmp.ne.s32.totalorder %s380, %s382
      %p389 = scmp.eq.s32.totalorder %s28, 1
      %p390 = por %p388, %p389
      %p391 = scmp.ne.s32.totalorder %s382, %s383
      %p392 = scmp.eq.s32.totalorder %s28, 0
      %p393 = por %p391, %p392
      %p394 = scmp.ne.s32.totalorder %s382, %s383
      %p395 = scmp.eq.s32.totalorder %s29, 1
      %p396 = por %p394, %p395
      %p398 = scmp.ne.s32.totalorder %s383, %s397
      %p399 = scmp.eq.s32.totalorder %s29, 0
      %p400 = por %p398, %p399
      %s402 = sadd.s32 %s401, 1
      %p405 = scmp.eq.s32.totalorder %s23, 1
      %p406 = scmp.ne.s32.totalorder %s401, %s403
      %p407 = scmp.eq.s32.totalorder %s23, 0
      %p408 = por %p406, %p407
      %p409 = scmp.ne.s32.totalorder %s401, %s403
      %p410 = scmp.eq.s32.totalorder %s28, 1
      %p411 = por %p409, %p410
      %p412 = scmp.ne.s32.totalorder %s403, %s404
      %p413 = scmp.eq.s32.totalorder %s28, 0
      %p414 = por %p412, %p413
      %p415 = scmp.ne.s32.totalorder %s403, %s404
      %p416 = scmp.eq.s32.totalorder %s29, 1
      %p417 = por %p415, %p416
      %p419 = scmp.ne.s32.totalorder %s404, %s418
      %p420 = scmp.eq.s32.totalorder %s29, 0
      %p421 = por %p419, %p420
      %s423 = sadd.s32 %s422, 1
      %p426 = scmp.eq.s32.totalorder %s23, 1
      %p427 = scmp.ne.s32.totalorder %s422, %s424
      %p428 = scmp.eq.s32.totalorder %s23, 0
      %p429 = por %p427, %p428
      %p430 = scmp.ne.s32.totalorder %s422, %s424
      %p431 = scmp.eq.s32.totalorder %s28, 1
      %p432 = por %p430, %p431
      %p433 = scmp.ne.s32.totalorder %s424, %s425
      %p434 = scmp.eq.s32.totalorder %s28, 0
      %p435 = por %p433, %p434
      %p436 = scmp.ne.s32.totalorder %s424, %s425
      %p437 = scmp.eq.s32.totalorder %s29, 1
      %p438 = por %p436, %p437
      %p440 = scmp.ne.s32.totalorder %s425, %s439
      %p441 = scmp.eq.s32.totalorder %s29, 0
      %p442 = por %p440, %p441
      %p443 = scmp.le.s32.totalorder 1, %s23
      %p444 = scmp.lt.s32.totalorder %s23, 3
      %p445 = pnand %p443, %p444
      %p446 = pneg %p445
      // Predicated region
      $region9: #{mp_avit_forward.1} parent=5 // pred_check
        _
      $region10: #{mp_avit_forward.1} parent=5 // pred_check_branch
        %448 = sbr.rel (%p445) target = $region12
      $region11: #{mp_avit_forward.1} parent=5 // pred_region
        %s449 = ssub.s32 %s23, 1
        // Predicated region
        $region13: #{mp_avit_forward.1} parent=11 // pred_check
          %p450 = pneg %p44
        $region14: #{mp_avit_forward.1} parent=11 // pred_check_branch
          %452 = sbr.rel (%p450) target = $region16
        $region15: #{mp_avit_forward.1} parent=11 // pred_region
          _
        $region16: #{mp_avit_forward.1} parent=11 // pred_fallthru
          _
        // Predicated region
        $region17: #{mp_avit_forward.1} parent=11 // pred_check
          %p453 = pneg %p351
        $region18: #{mp_avit_forward.1} parent=11 // pred_check_branch
          %455 = sbr.rel (%p453) target = $region20
        $region19: #{mp_avit_forward.1} parent=11 // pred_region
          _
        $region20: #{mp_avit_forward.1} parent=11 // pred_fallthru
          _
        // Predicated region
        $region21: #{mp_avit_forward.1} parent=11 // pred_check
          %p456 = pneg %p372
        $region22: #{mp_avit_forward.1} parent=11 // pred_check_branch
          %458 = sbr.rel (%p456) target = $region24
        $region23: #{mp_avit_forward.1} parent=11 // pred_region
          _
        $region24: #{mp_avit_forward.1} parent=11 // pred_fallthru
          _
        // Predicated region
        $region25: #{mp_avit_forward.1} parent=11 // pred_check
          %p459 = pneg %p393
        $region26: #{mp_avit_forward.1} parent=11 // pred_check_branch
          %461 = sbr.rel (%p459) target = $region28
        $region27: #{mp_avit_forward.1} parent=11 // pred_region
          _
        $region28: #{mp_avit_forward.1} parent=11 // pred_fallthru
          _
        // Predicated region
        $region29: #{mp_avit_forward.1} parent=11 // pred_check
          %p462 = pneg %p414
        $region30: #{mp_avit_forward.1} parent=11 // pred_check_branch
          %464 = sbr.rel (%p462) target = $region32
        $region31: #{mp_avit_forward.1} parent=11 // pred_region
          _
        $region32: #{mp_avit_forward.1} parent=11 // pred_fallthru
          _
      $region12: #{mp_avit_forward.1} parent=5 // pred_fallthru
        _
      %p465 = scmp.lt.s32.totalorder %s23, 2
      // Predicated region
      $region33: #{mp_avit_forward.1} parent=5 // pred_check
        %p466 = pneg %p465
      $region34: #{mp_avit_forward.1} parent=5 // pred_check_branch
        %468 = sbr.rel (%p466) target = $region36
      $region35: #{mp_avit_forward.1} parent=5 // pred_region
        // Predicated region
        $region37: #{mp_avit_forward.1} parent=35 // pred_check
          %p469 = pneg %p64
        $region38: #{mp_avit_forward.1} parent=35 // pred_check_branch
          %471 = sbr.rel (%p469) target = $region40
        $region39: #{mp_avit_forward.1} parent=35 // pred_region
          %p472 = scmp.lt.s32.totalorder %s23, 1
          %s473 = scalar_select %p472, %s23, 1
          %s474 = scalar_lea.vmem %s1, %s473
        $region40: #{mp_avit_forward.1} parent=35 // pred_fallthru
          _
        // Predicated region
        $region41: #{mp_avit_forward.1} parent=35 // pred_check
          %p475 = pneg %p90
        $region42: #{mp_avit_forward.1} parent=35 // pred_check_branch
          %477 = sbr.rel (%p475) target = $region44
        $region43: #{mp_avit_forward.1} parent=35 // pred_region
          %p478 = scmp.lt.s32.totalorder %s23, 1
          %s479 = scalar_select %p478, %s23, 1
          %s480 = scalar_lea.vmem %s2, %s479
        $region44: #{mp_avit_forward.1} parent=35 // pred_fallthru
          _
        // Predicated region
        $region45: #{mp_avit_forward.1} parent=35 // pred_check
          %p481 = pneg %p116
        $region46: #{mp_avit_forward.1} parent=35 // pred_check_branch
          %483 = sbr.rel (%p481) target = $region48
        $region47: #{mp_avit_forward.1} parent=35 // pred_region
          %p484 = scmp.lt.s32.totalorder %s23, 1
          %s485 = scalar_select %p484, %s23, 1
          %s486 = smul.addr %s485, 4
          %s487 = smul.addr %s486, 4
          %s488 = scalar_lea.vmem %s3, %s487
        $region48: #{mp_avit_forward.1} parent=35 // pred_fallthru
          _
        // Predicated region
        $region49: #{mp_avit_forward.1} parent=35 // pred_check
          %p489 = pneg %p142
        $region50: #{mp_avit_forward.1} parent=35 // pred_check_branch
          %491 = sbr.rel (%p489) target = $region52
        $region51: #{mp_avit_forward.1} parent=35 // pred_region
          %p492 = scmp.lt.s32.totalorder %s23, 1
          %s493 = scalar_select %p492, %s23, 1
          %s494 = smul.addr %s493, 4
          %s495 = smul.addr %s494, 4
          %s496 = scalar_lea.vmem %s4, %s495
        $region52: #{mp_avit_forward.1} parent=35 // pred_fallthru
          _
        // Predicated region
        $region53: #{mp_avit_forward.1} parent=35 // pred_check
          %p497 = pneg %p168
        $region54: #{mp_avit_forward.1} parent=35 // pred_check_branch
          %499 = sbr.rel (%p497) target = $region56
        $region55: #{mp_avit_forward.1} parent=35 // pred_region
          %p500 = scmp.lt.s32.totalorder %s23, 1
          %s501 = scalar_select %p500, %s23, 1
          %s502 = scalar_lea.vmem %s5, %s501
        $region56: #{mp_avit_forward.1} parent=35 // pred_fallthru
          _
        // Predicated region
        $region57: #{mp_avit_forward.1} parent=35 // pred_check
          %p503 = pneg %p194
        $region58: #{mp_avit_forward.1} parent=35 // pred_check_branch
          %505 = sbr.rel (%p503) target = $region60
        $region59: #{mp_avit_forward.1} parent=35 // pred_region
          %p506 = scmp.lt.s32.totalorder %s23, 1
          %s507 = scalar_select %p506, %s23, 1
          %s508 = scalar_lea.vmem %s6, %s507
        $region60: #{mp_avit_forward.1} parent=35 // pred_fallthru
          _
        // Predicated region
        $region61: #{mp_avit_forward.1} parent=35 // pred_check
          %p509 = pneg %p220
        $region62: #{mp_avit_forward.1} parent=35 // pred_check_branch
          %511 = sbr.rel (%p509) target = $region64
        $region63: #{mp_avit_forward.1} parent=35 // pred_region
          %p512 = scmp.lt.s32.totalorder %s23, 1
          %s513 = scalar_select %p512, %s23, 1
          %s514 = scalar_lea.vmem %s7, %s513
        $region64: #{mp_avit_forward.1} parent=35 // pred_fallthru
          _
        // Predicated region
        $region65: #{mp_avit_forward.1} parent=35 // pred_check
          %p515 = pneg %p246
        $region66: #{mp_avit_forward.1} parent=35 // pred_check_branch
          %517 = sbr.rel (%p515) target = $region68
        $region67: #{mp_avit_forward.1} parent=35 // pred_region
          %p518 = scmp.lt.s32.totalorder %s23, 1
          %s519 = scalar_select %p518, %s23, 1
          %s520 = smul.addr %s519, 4
          %s521 = smul.addr %s520, 4
          %s522 = scalar_lea.vmem %s8, %s521
        $region68: #{mp_avit_forward.1} parent=35 // pred_fallthru
          _
        // Predicated region
        $region69: #{mp_avit_forward.1} parent=35 // pred_check
          %p523 = pneg %p272
        $region70: #{mp_avit_forward.1} parent=35 // pred_check_branch
          %525 = sbr.rel (%p523) target = $region72
        $region71: #{mp_avit_forward.1} parent=35 // pred_region
          %p526 = scmp.lt.s32.totalorder %s23, 1
          %s527 = scalar_select %p526, %s23, 1
          %s528 = scalar_lea.vmem %s9, %s527
        $region72: #{mp_avit_forward.1} parent=35 // pred_fallthru
          _
        // Predicated region
        $region73: #{mp_avit_forward.1} parent=35 // pred_check
          %p529 = pneg %p298
        $region74: #{mp_avit_forward.1} parent=35 // pred_check_branch
          %531 = sbr.rel (%p529) target = $region76
        $region75: #{mp_avit_forward.1} parent=35 // pred_region
          %p532 = scmp.lt.s32.totalorder %s23, 1
          %s533 = scalar_select %p532, %s23, 1
          %s534 = smul.addr %s533, 8
          %s535 = smul.addr %s534, 4
          %s536 = scalar_lea.vmem %s10, %s535
        $region76: #{mp_avit_forward.1} parent=35 // pred_fallthru
          _
        // Predicated region
        $region77: #{mp_avit_forward.1} parent=35 // pred_check
          %p537 = pneg %p324
        $region78: #{mp_avit_forward.1} parent=35 // pred_check_branch
          %539 = sbr.rel (%p537) target = $region80
        $region79: #{mp_avit_forward.1} parent=35 // pred_region
          %p540 = scmp.lt.s32.totalorder %s23, 1
          %s541 = scalar_select %p540, %s23, 1
          %s542 = scalar_lea.vmem %s11, %s541
        $region80: #{mp_avit_forward.1} parent=35 // pred_fallthru
          _
      $region36: #{mp_avit_forward.1} parent=5 // pred_fallthru
        _
      %p543 = scmp.le.s32.totalorder 1, %s23
      %p544 = scmp.lt.s32.totalorder %s23, 3
      %p545 = pnand %p543, %p544
      %p546 = pneg %p545
      // Predicated region
      $region81: #{mp_avit_forward.1} parent=5 // pred_check
        _
      $region82: #{mp_avit_forward.1} parent=5 // pred_check_branch
        %548 = sbr.rel (%p545) target = $region84
      $region83: #{mp_avit_forward.1} parent=5 // pred_region
        %s549 = ssub.s32 %s23, 1
        %p550 = pneg %p44
        %p551 = pneg %p41
        %p552 = scmp.lt.s32.totalorder %s28, 1
        %s553 = scalar_select %p552, %s28, 1
        %s554 = scalar_lea.vmem %s1, %s553
        %p555 = pneg %p70
        %p556 = pneg %p67
        %p557 = scmp.lt.s32.totalorder %s28, 1
        %s558 = scalar_select %p557, %s28, 1
        %s559 = scalar_lea.vmem %s2, %s558
        %p560 = pneg %p96
        %p561 = pneg %p93
        %p562 = scmp.lt.s32.totalorder %s28, 1
        %s563 = scalar_select %p562, %s28, 1
        %s564 = smul.addr %s563, 4
        %s565 = smul.addr %s564, 4
        %s566 = scalar_lea.vmem %s3, %s565
        %p567 = pneg %p122
        %p568 = pneg %p119
        %p569 = scmp.lt.s32.totalorder %s28, 1
        %s570 = scalar_select %p569, %s28, 1
        %s571 = smul.addr %s570, 4
        %s572 = smul.addr %s571, 4
        %s573 = scalar_lea.vmem %s4, %s572
        %p574 = pneg %p148
        %p575 = pneg %p145
        %p576 = scmp.lt.s32.totalorder %s28, 1
        %s577 = scalar_select %p576, %s28, 1
        %s578 = scalar_lea.vmem %s5, %s577
        %p579 = pneg %p174
        %p580 = pneg %p171
        %p581 = scmp.lt.s32.totalorder %s28, 1
        %s582 = scalar_select %p581, %s28, 1
        %s583 = scalar_lea.vmem %s6, %s582
        %p584 = pneg %p200
        %p585 = pneg %p197
        %p586 = scmp.lt.s32.totalorder %s28, 1
        %s587 = scalar_select %p586, %s28, 1
        %s588 = scalar_lea.vmem %s7, %s587
        %p589 = pneg %p226
        %p590 = pneg %p223
        %p591 = scmp.lt.s32.totalorder %s28, 1
        %s592 = scalar_select %p591, %s28, 1
        %s593 = smul.addr %s592, 4
        %s594 = smul.addr %s593, 4
        %s595 = scalar_lea.vmem %s8, %s594
        %p596 = pneg %p252
        %p597 = pneg %p249
        %p598 = scmp.lt.s32.totalorder %s28, 1
        %s599 = scalar_select %p598, %s28, 1
        %s600 = scalar_lea.vmem %s9, %s599
        %p601 = pneg %p278
        %p602 = pneg %p275
        %p603 = scmp.lt.s32.totalorder %s28, 1
        %s604 = scalar_select %p603, %s28, 1
        %s605 = smul.addr %s604, 8
        %s606 = smul.addr %s605, 4
        %s607 = scalar_lea.vmem %s10, %s606
        %p608 = pneg %p304
        %p609 = pneg %p301
        %p610 = scmp.lt.s32.totalorder %s28, 1
        %s611 = scalar_select %p610, %s28, 1
        %s612 = scalar_lea.vmem %s11, %s611
        %p613 = pneg %p330
        %p614 = pneg %p327
        %p615 = pneg %p351
        %p616 = pneg %p348
        %p617 = pneg %p372
        %p618 = pneg %p369
        %p619 = pneg %p393
        %p620 = pneg %p390
        %p621 = pneg %p414
        %p622 = pneg %p411
        %p623 = pneg %p435
        %p624 = pneg %p432
        %p625 = scmp.lt.s32.totalorder %s28, 1
        %s626 = scalar_select %p625, %s28, 1
        %s627 = scalar_lea.vmem %s1, %s626
        %p628 = scmp.lt.s32.totalorder %s28, 1
        %s629 = scalar_select %p628, %s28, 1
        %s630 = scalar_lea.vmem %s2, %s629
        %p631 = scmp.lt.s32.totalorder %s28, 1
        %s632 = scalar_select %p631, %s28, 1
        %s633 = smul.addr %s632, 4
        %s634 = smul.addr %s633, 4
        %s635 = scalar_lea.vmem %s3, %s634
        %p636 = scmp.lt.s32.totalorder %s28, 1
        %s637 = scalar_select %p636, %s28, 1
        %s638 = smul.addr %s637, 4
        %s639 = smul.addr %s638, 4
        %s640 = scalar_lea.vmem %s4, %s639
        %p641 = scmp.lt.s32.totalorder %s28, 1
        %s642 = scalar_select %p641, %s28, 1
        %s643 = scalar_lea.vmem %s5, %s642
        %p644 = scmp.lt.s32.totalorder %s28, 1
        %s645 = scalar_select %p644, %s28, 1
        %s646 = scalar_lea.vmem %s6, %s645
        %p647 = scmp.lt.s32.totalorder %s28, 1
        %s648 = scalar_select %p647, %s28, 1
        %s649 = scalar_lea.vmem %s7, %s648
        %p650 = scmp.lt.s32.totalorder %s28, 1
        %s651 = scalar_select %p650, %s28, 1
        %s652 = smul.addr %s651, 4
        %s653 = smul.addr %s652, 4
        %s654 = scalar_lea.vmem %s8, %s653
        %p655 = scmp.lt.s32.totalorder %s28, 1
        %s656 = scalar_select %p655, %s28, 1
        %s657 = scalar_lea.vmem %s9, %s656
        %p658 = scmp.lt.s32.totalorder %s28, 1
        %s659 = scalar_select %p658, %s28, 1
        %s660 = smul.addr %s659, 8
        %s661 = smul.addr %s660, 4
        %s662 = scalar_lea.vmem %s10, %s661
        %p663 = scmp.lt.s32.totalorder %s28, 1
        %s664 = scalar_select %p663, %s28, 1
        %s665 = scalar_lea.vmem %s11, %s664
        %p667 = scmp.eq.s32.totalorder %s28, 0
        // Predicated region
        $region85: #{mp_avit_forward.1} parent=83 // pred_check
          %p668 = pneg %p667
        $region86: #{mp_avit_forward.1} parent=83 // pred_check_branch
          %670 = sbr.rel (%p668) target = $region88
        $region87: #{mp_avit_forward.1} parent=83 // pred_region
          %v671 = vld [vmem:[%s0] sm:$0xff]
          %v672 = vld [vmem:[%s0 + $0x8] sm:$0x1]
          %v673 = vld [vmem:[%s0 + $0x10] sm:$0xff]
          %v674 = vld [vmem:[%s0 + $0x18] sm:$0x1]
          %vm675 = vcmask 261120
          %676 = vst.msk [vmem:[#allocation2] sm:$0xff] %vm675, %v671
          %vm677 = vcmask 253952
          %678 = vst.msk [vmem:[#allocation2 + $0x8] sm:$0x1] %vm677, %v672
          %679 = vst.msk [vmem:[#allocation2 + $0x10] sm:$0xff] %vm675, %v673
          %680 = vst.msk [vmem:[#allocation2 + $0x18] sm:$0x1] %vm677, %v674
        $region88: #{mp_avit_forward.1} parent=83 // pred_fallthru
          _
        %v681 = vld [vmem:[%s635] sm:$0xf]
        %v682 = vld [vmem:[%s635 + $0x4] sm:$0xf]
        %v683 = vld [vmem:[%s635 + $0x8] sm:$0xf]
        %v684 = vld [vmem:[%s635 + $0xc] sm:$0xf]
        %v685 = vld [vmem:[%s654] sm:$0xf]
        %v686 = vld [vmem:[%s654 + $0x4] sm:$0xf]
        %v687 = vld [vmem:[%s654 + $0x8] sm:$0xf]
        %v688 = vld [vmem:[%s654 + $0xc] sm:$0xf]
        %v689 = vld [vmem:[%s662] sm:$0xf]
        %v690 = vld [vmem:[%s662 + $0x4] sm:$0xf]
        %v691 = vld [vmem:[%s662 + $0x8] sm:$0xf]
        %v692 = vld [vmem:[%s662 + $0xc] sm:$0xf]
        %v693 = vld [vmem:[%s662 + $0x10] sm:$0xf]
        %v694 = vld [vmem:[%s662 + $0x14] sm:$0xf]
        %v695 = vld [vmem:[%s662 + $0x18] sm:$0xf]
        %v696 = vld [vmem:[%s662 + $0x1c] sm:$0xf]
        %v697 = vld [vmem:[%s627] sm:$0x1]
        %v698 = vld [vmem:[%s630] sm:$0x1]
        %v699 = vld [vmem:[%s646] sm:$0x1]
        %v700 = vld [vmem:[%s649] sm:$0x1]
        %v701 = vld [vmem:[%s643] sm:$0x1]
        %v702 = vld [vmem:[%s657] sm:$0x1]
        %v703 = vld [vmem:[%s665] sm:$0x1]
        %v704 = vld [vmem:[#allocation2] sm:$0xff]
        %v705 = vld [vmem:[#allocation2 + $0x8] sm:$0x1]
        %vm706 = vcmask 261120
        %v707 = vsel %vm706, %v704, 0.0
        %708 = vadd.xlane.f32.xlu0 %v707
        %v709 = vpop.xlane.xlu0 %708
        %vm710 = vcmask 253952
        %v711 = vsel %vm710, %v705, 0.0
        %712 = vadd.xlane.f32.xlu0 %v711
        %v713 = vpop.xlane.xlu0 %712
        %v714 = vrcp.pop 32.0
        %v715 = vmul.f32 32.0, %v714
        %v716 = vsub.f32 1.0, %v715
        %v717 = vmul.f32 %v714, %v716
        %v718 = vadd.f32 %v714, %v717
        %vm719 = vweird.f32 %v714
        %v720 = vsel %vm719, %v714, %v718
        %v721 = vmul.f32 %v709, %v720
        %v722 = vmul.f32 %v713, %v720
        %v723 = vsub.f32 %v704, %v721
        %v724 = vsub.f32 %v705, %v722
        %v725 = vmul.f32 %v723, %v723
        %v726 = vmul.f32 %v724, %v724
        %v727 = vsel %vm706, %v725, 0.0
        %728 = vadd.xlane.f32.xlu0 %v727
        %v729 = vpop.xlane.xlu0 %728
        %v730 = vsel %vm710, %v726, 0.0
        %731 = vadd.xlane.f32.xlu0 %v730
        %v732 = vpop.xlane.xlu0 %731
        %v733 = vmul.f32 %v729, %v720
        %v734 = vmul.f32 %v732, %v720
        %v735 = vadd.f32 %v733, 1e-05
        %v736 = vadd.f32 %v734, 1e-05
        %v737 = vrsqrt.pop %v735
        %v738 = vmul.f32 %v737, %v735
        %v739 = vmul.f32 %v738, %v737
        %v740 = vmul.f32 0.5, %v739
        %v741 = vsub.f32 1.5, %v740
        %v742 = vmul.f32 %v737, %v741
        %vm743 = vweird.f32 %v735
        %vm744 = vweird.f32 %v737
        %vm745 = vmor %vm743, %vm744
        %v746 = vsel %vm745, %v737, %v742
        %v747 = vrsqrt.pop %v736
        %v748 = vmul.f32 %v747, %v736
        %v749 = vmul.f32 %v748, %v747
        %v750 = vmul.f32 0.5, %v749
        %v751 = vsub.f32 1.5, %v750
        %v752 = vmul.f32 %v747, %v751
        %vm753 = vweird.f32 %v736
        %vm754 = vweird.f32 %v747
        %vm755 = vmor %vm753, %vm754
        %v756 = vsel %vm755, %v747, %v752
        %v757 = vmul.f32 %v723, %v746
        %v758 = vmul.f32 %v724, %v756
        %v760 = vperm.slane %v697, 0
        %v762 = vmul.f32 %v757, %v760
        %v763 = vmul.f32 %v758, %v760
        %v765 = vperm.slane %v698, 0
        %v767 = vadd.f32 %v762, %v765
        %v768 = vadd.f32 %v763, %v765
        %v769 = vpack.c.bf16 %v768, %v767
        %v774 = vunpack.c.l.b16 %v681
        %v775 = vunpack.c.l.b16 %v682
        %v776 = vunpack.c.l.b16 %v683
        %v777 = vunpack.c.l.b16 %v684
        %v778 = vpack.c.b16 %v775, %v774
        %v779 = vpack.c.b16 %v777, %v776
        %v783 = vsel %vm706, %v769, 0
        %785 = vmatpush.bf16.msra.mxu0 0
        %786 = vmatpush.bf16.msra.mxu0 0
        %787 = vmatpush.bf16.msra.mxu0 0
        %788 = vmatpush.bf16.msra.mxu0 0
        %789 = vmatpush.bf16.msra.mxu0 0
        %790 = vmatpush.bf16.msra.mxu0 0
        %791 = vmatpush.bf16.msra.mxu0 %v779
        %792 = vmatpush.bf16.msra.mxu0 %v778
        %793 = vmatmul.bf16.gmra.mxu0 %v783
        %v794 = vpop.f32.mrf.mxu0
        %v795 = vadd.f32 0.0, %v794
        %v796 = vpop.f32.mrf.mxu0
        %v797 = vadd.f32 0.0, %v796
        %798 = vdwg.mxu0
        %v799 = vpack.c.bf16 %v797, %v795
        %801 = vrot.lane.b32.xlu0 %v799, 96
        %v802 = vpop.permute.xlu0 %801
        %vm803 = vcmask 64512
        %v805 = vsel %vm803, %v799, 0
        %v808 = vsel %vm803, %v802, 0
        %810 = vmatpush.bf16.xpose.msra.mxu0 0
        %811 = vmatpush.bf16.xpose.msra.mxu0 0
        %812 = vmatpush.bf16.xpose.msra.mxu0 0
        %813 = vmatpush.bf16.xpose.msra.mxu0 0
        %814 = vmatpush.bf16.xpose.msra.mxu0 0
        %815 = vmatpush.bf16.xpose.msra.mxu0 0
        %816 = vmatpush.bf16.xpose.msra.mxu0 0
        %817 = vmatpush.bf16.xpose.msra.mxu0 %v808
        %818 = vmatmul.bf16.gmra.mxu0 %v805
        %v819 = vpop.f32.mrf.mxu0
        %v820 = vadd.f32 0.0, %v819
        %v821 = vpop.f32.mrf.mxu0
        %v822 = vadd.f32 0.0, %v821
        %823 = vdwg.mxu0
        %vm824 = vcmask 72704
        %v825 = vsel %vm824, %v820, -inf
        %826 = vmax.xlane.f32.xlu0 %v825
        %v827 = vpop.xlane.xlu0 %826
        %vm828 = vcmask 65536
        %v829 = vsel %vm828, %v822, -inf
        %830 = vmax.xlane.f32.xlu0 %v829
        %v831 = vpop.xlane.xlu0 %830
        %v832 = vsub.f32 %v820, %v827
        %v833 = vsub.f32 %v822, %v831
        %v834 = vmul.f32 %v832, 1.442695
        %v835 = vpow.pop %v834
        %v836 = vmul.f32 %v833, 1.442695
        %v837 = vpow.pop %v836
        %v838 = vsel %vm824, %v835, 0.0
        %839 = vadd.xlane.f32.xlu0 %v838
        %v840 = vpop.xlane.xlu0 %839
        %v841 = vsel %vm828, %v837, 0.0
        %842 = vadd.xlane.f32.xlu0 %v841
        %v843 = vpop.xlane.xlu0 %842
        %v844 = vrcp.pop %v840
        %v845 = vmul.f32 %v840, %v844
        %v846 = vsub.f32 1.0, %v845
        %v847 = vmul.f32 %v844, %v846
        %v848 = vadd.f32 %v844, %v847
        %vm849 = vweird.f32 %v840
        %vm850 = vweird.f32 %v844
        %vm851 = vmor %vm849, %vm850
        %v852 = vsel %vm851, %v844, %v848
        %v853 = vand.u32 2147483647, %v840
        %vm854 = vcmp.eq.f32.partialorder %v853, 8.507059e+37
        %v855 = vand.u32 %v840, 2147483648
        %v856 = vor.u32 1.1754944e-38, %v855
        %v857 = vsel %vm854, %v856, %v852
        %v858 = vmul.f32 1.0, %v857
        %v859 = vrcp.pop %v843
        %v860 = vmul.f32 %v843, %v859
        %v861 = vsub.f32 1.0, %v860
        %v862 = vmul.f32 %v859, %v861
        %v863 = vadd.f32 %v859, %v862
        %vm864 = vweird.f32 %v843
        %vm865 = vweird.f32 %v859
        %vm866 = vmor %vm864, %vm865
        %v867 = vsel %vm866, %v859, %v863
        %v868 = vand.u32 2147483647, %v843
        %vm869 = vcmp.eq.f32.partialorder %v868, 8.507059e+37
        %v870 = vand.u32 %v843, 2147483648
        %v871 = vor.u32 1.1754944e-38, %v870
        %v872 = vsel %vm869, %v871, %v867
        %v873 = vmul.f32 1.0, %v872
        %v874 = vmul.f32 %v835, %v858
        %v875 = vmul.f32 %v837, %v873
        %v876 = vpack.c.bf16 %v875, %v874
        %877 = vrot.lane.b32.xlu0 %v799, 64
        %v878 = vpop.permute.xlu0 %877
        %v880 = vsel %vm824, %v876, 0
        %vm882 = vcmask 1043456
        %vm883 = vcmask 1044480
        %v884 = vsel %vm882, 4294967295, 65535
        %v885 = vsel %vm883, %v884, 0
        %v887 = vand.u32 %v878, %v885
        %889 = vmatpush.bf16.msra.mxu0 0
        %890 = vmatpush.bf16.msra.mxu0 0
        %891 = vmatpush.bf16.msra.mxu0 0
        %892 = vmatpush.bf16.msra.mxu0 0
        %893 = vmatpush.bf16.msra.mxu0 0
        %894 = vmatpush.bf16.msra.mxu0 0
        %895 = vmatpush.bf16.msra.mxu0 0
        %896 = vmatpush.bf16.msra.mxu0 %v887
        %897 = vmatmul.bf16.gmra.mxu0 %v880
        %v898 = vpop.f32.mrf.mxu0
        %v899 = vadd.f32 0.0, %v898
        %v900 = vpop.f32.mrf.mxu0
        %v901 = vadd.f32 0.0, %v900
        %902 = vdwg.mxu0
        %v903 = vpack.c.bf16 %v901, %v899
        %v904 = vld [vmem:[%s640] sm:$0xf]
        %905 = vrot.lane.b32.xlu0 %v799, 120
        %v906 = vpop.permute.xlu0 %905
        %907 = vrot.lane.b32.xlu0 %v799, 88
        %v908 = vpop.permute.xlu0 %907
        %v910 = vsel %vm803, %v906, 0
        %v913 = vsel %vm803, %v908, 0
        %915 = vmatpush.bf16.xpose.msra.mxu0 0
        %916 = vmatpush.bf16.xpose.msra.mxu0 0
        %917 = vmatpush.bf16.xpose.msra.mxu0 0
        %918 = vmatpush.bf16.xpose.msra.mxu0 0
        %919 = vmatpush.bf16.xpose.msra.mxu0 0
        %920 = vmatpush.bf16.xpose.msra.mxu0 0
        %921 = vmatpush.bf16.xpose.msra.mxu0 0
        %922 = vmatpush.bf16.xpose.msra.mxu0 %v913
        %923 = vmatmul.bf16.gmra.mxu0 %v910
        %v924 = vpop.f32.mrf.mxu0
        %v925 = vadd.f32 0.0, %v924
        %v926 = vpop.f32.mrf.mxu0
        %v927 = vadd.f32 0.0, %v926
        %928 = vdwg.mxu0
        %v929 = vsel %vm824, %v925, -inf
        %930 = vmax.xlane.f32.xlu0 %v929
        %v931 = vpop.xlane.xlu0 %930
        %v932 = vsel %vm828, %v927, -inf
        %933 = vmax.xlane.f32.xlu0 %v932
        %v934 = vpop.xlane.xlu0 %933
        %v935 = vsub.f32 %v925, %v931
        %v936 = vsub.f32 %v927, %v934
        %v937 = vmul.f32 %v935, 1.442695
        %v938 = vpow.pop %v937
        %v939 = vmul.f32 %v936, 1.442695
        %v940 = vpow.pop %v939
        %v941 = vsel %vm824, %v938, 0.0
        %942 = vadd.xlane.f32.xlu0 %v941
        %v943 = vpop.xlane.xlu0 %942
        %v944 = vsel %vm828, %v940, 0.0
        %945 = vadd.xlane.f32.xlu0 %v944
        %v946 = vpop.xlane.xlu0 %945
        %v947 = vrcp.pop %v943
        %v948 = vmul.f32 %v943, %v947
        %v949 = vsub.f32 1.0, %v948
        %v950 = vmul.f32 %v947, %v949
        %v951 = vadd.f32 %v947, %v950
        %vm952 = vweird.f32 %v943
        %vm953 = vweird.f32 %v947
        %vm954 = vmor %vm952, %vm953
        %v955 = vsel %vm954, %v947, %v951
        %v956 = vand.u32 2147483647, %v943
        %vm957 = vcmp.eq.f32.partialorder %v956, 8.507059e+37
        %v958 = vand.u32 %v943, 2147483648
        %v959 = vor.u32 1.1754944e-38, %v958
        %v960 = vsel %vm957, %v959, %v955
        %v961 = vmul.f32 1.0, %v960
        %v962 = vrcp.pop %v946
        %v963 = vmul.f32 %v946, %v962
        %v964 = vsub.f32 1.0, %v963
        %v965 = vmul.f32 %v962, %v964
        %v966 = vadd.f32 %v962, %v965
        %vm967 = vweird.f32 %v946
        %vm968 = vweird.f32 %v962
        %vm969 = vmor %vm967, %vm968
        %v970 = vsel %vm969, %v962, %v966
        %v971 = vand.u32 2147483647, %v946
        %vm972 = vcmp.eq.f32.partialorder %v971, 8.507059e+37
        %v973 = vand.u32 %v946, 2147483648
        %v974 = vor.u32 1.1754944e-38, %v973
        %v975 = vsel %vm972, %v974, %v970
        %v976 = vmul.f32 1.0, %v975
        %v977 = vmul.f32 %v938, %v961
        %v978 = vmul.f32 %v940, %v976
        %v979 = vpack.c.bf16 %v978, %v977
        %980 = vrot.lane.b32.xlu0 %v799, 56
        %v981 = vpop.permute.xlu0 %980
        %v983 = vsel %vm824, %v979, 0
        %v986 = vand.u32 %v981, %v885
        %988 = vmatpush.bf16.msra.mxu0 0
        %989 = vmatpush.bf16.msra.mxu0 0
        %990 = vmatpush.bf16.msra.mxu0 0
        %991 = vmatpush.bf16.msra.mxu0 0
        %992 = vmatpush.bf16.msra.mxu0 0
        %993 = vmatpush.bf16.msra.mxu0 0
        %994 = vmatpush.bf16.msra.mxu0 0
        %995 = vmatpush.bf16.msra.mxu0 %v986
        %996 = vmatmul.bf16.gmra.mxu0 %v983
        %v997 = vpop.f32.mrf.mxu0
        %v998 = vadd.f32 0.0, %v997
        %v999 = vpop.f32.mrf.mxu0
        %v1000 = vadd.f32 0.0, %v999
        %1001 = vdwg.mxu0
        %v1002 = vpack.c.bf16 %v1000, %v998
        %s1003 = scalar_lea.vmem %s640, 4
        %v1004 = vld [vmem:[%s1003] sm:$0xf]
        %v1006 = vsel %vm803, %v1002, 0
        %v1009 = vsel %vm882, %v1004, 0
        %1011 = vmatpush.bf16.msra.mxu0 0
        %1012 = vmatpush.bf16.msra.mxu0 0
        %1013 = vmatpush.bf16.msra.mxu0 0
        %1014 = vmatpush.bf16.msra.mxu0 0
        %1015 = vmatpush.bf16.msra.mxu0 0
        %1016 = vmatpush.bf16.msra.mxu0 0
        %1017 = vmatpush.bf16.msra.mxu0 0
        %1018 = vmatpush.bf16.msra.mxu0 %v1009
        %1019 = vmatmul.bf16.gmra.mxu0 %v1006
        %v1020 = vpop.f32.mrf.mxu0
        %v1021 = vadd.f32 0.0, %v1020
        %v1022 = vpop.f32.mrf.mxu0
        %v1023 = vadd.f32 0.0, %v1022
        %1024 = vdwg.mxu0
        %v1026 = vsel %vm803, %v903, 0
        %v1029 = vsel %vm882, %v904, 0
        %1031 = vmatpush.bf16.msra.mxu0 0
        %1032 = vmatpush.bf16.msra.mxu0 0
        %1033 = vmatpush.bf16.msra.mxu0 0
        %1034 = vmatpush.bf16.msra.mxu0 0
        %1035 = vmatpush.bf16.msra.mxu0 0
        %1036 = vmatpush.bf16.msra.mxu0 0
        %1037 = vmatpush.bf16.msra.mxu0 0
        %1038 = vmatpush.bf16.msra.mxu0 %v1029
        %1039 = vmatmul.bf16.gmra.mxu0 %v1026
        %v1040 = vpop.f32.mrf.mxu0
        %v1041 = vadd.f32 %v1021, %v1040
        %v1042 = vpop.f32.mrf.mxu0
        %v1043 = vadd.f32 %v1023, %v1042
        %1044 = vdwg.mxu0
        %1045 = vrot.lane.b32.xlu0 %v799, 112
        %v1046 = vpop.permute.xlu0 %1045
        %1047 = vrot.lane.b32.xlu0 %v799, 80
        %v1048 = vpop.permute.xlu0 %1047
        %v1050 = vsel %vm803, %v1046, 0
        %v1053 = vsel %vm803, %v1048, 0
        %1055 = vmatpush.bf16.xpose.msra.mxu0 0
        %1056 = vmatpush.bf16.xpose.msra.mxu0 0
        %1057 = vmatpush.bf16.xpose.msra.mxu0 0
        %1058 = vmatpush.bf16.xpose.msra.mxu0 0
        %1059 = vmatpush.bf16.xpose.msra.mxu0 0
        %1060 = vmatpush.bf16.xpose.msra.mxu0 0
        %1061 = vmatpush.bf16.xpose.msra.mxu0 0
        %1062 = vmatpush.bf16.xpose.msra.mxu0 %v1053
        %1063 = vmatmul.bf16.gmra.mxu0 %v1050
        %v1064 = vpop.f32.mrf.mxu0
        %v1065 = vadd.f32 0.0, %v1064
        %v1066 = vpop.f32.mrf.mxu0
        %v1067 = vadd.f32 0.0, %v1066
        %1068 = vdwg.mxu0
        %v1069 = vsel %vm824, %v1065, -inf
        %1070 = vmax.xlane.f32.xlu0 %v1069
        %v1071 = vpop.xlane.xlu0 %1070
        %v1072 = vsel %vm828, %v1067, -inf
        %1073 = vmax.xlane.f32.xlu0 %v1072
        %v1074 = vpop.xlane.xlu0 %1073
        %v1075 = vsub.f32 %v1065, %v1071
        %v1076 = vsub.f32 %v1067, %v1074
        %v1077 = vmul.f32 %v1075, 1.442695
        %v1078 = vpow.pop %v1077
        %v1079 = vmul.f32 %v1076, 1.442695
        %v1080 = vpow.pop %v1079
        %v1081 = vsel %vm824, %v1078, 0.0
        %1082 = vadd.xlane.f32.xlu0 %v1081
        %v1083 = vpop.xlane.xlu0 %1082
        %v1084 = vsel %vm828, %v1080, 0.0
        %1085 = vadd.xlane.f32.xlu0 %v1084
        %v1086 = vpop.xlane.xlu0 %1085
        %v1087 = vrcp.pop %v1083
        %v1088 = vmul.f32 %v1083, %v1087
        %v1089 = vsub.f32 1.0, %v1088
        %v1090 = vmul.f32 %v1087, %v1089
        %v1091 = vadd.f32 %v1087, %v1090
        %vm1092 = vweird.f32 %v1083
        %vm1093 = vweird.f32 %v1087
        %vm1094 = vmor %vm1092, %vm1093
        %v1095 = vsel %vm1094, %v1087, %v1091
        %v1096 = vand.u32 2147483647, %v1083
        %vm1097 = vcmp.eq.f32.partialorder %v1096, 8.507059e+37
        %v1098 = vand.u32 %v1083, 2147483648
        %v1099 = vor.u32 1.1754944e-38, %v1098
        %v1100 = vsel %vm1097, %v1099, %v1095
        %v1101 = vmul.f32 1.0, %v1100
        %v1102 = vrcp.pop %v1086
        %v1103 = vmul.f32 %v1086, %v1102
        %v1104 = vsub.f32 1.0, %v1103
        %v1105 = vmul.f32 %v1102, %v1104
        %v1106 = vadd.f32 %v1102, %v1105
        %vm1107 = vweird.f32 %v1086
        %vm1108 = vweird.f32 %v1102
        %vm1109 = vmor %vm1107, %vm1108
        %v1110 = vsel %vm1109, %v1102, %v1106
        %v1111 = vand.u32 2147483647, %v1086
        %vm1112 = vcmp.eq.f32.partialorder %v1111, 8.507059e+37
        %v1113 = vand.u32 %v1086, 2147483648
        %v1114 = vor.u32 1.1754944e-38, %v1113
        %v1115 = vsel %vm1112, %v1114, %v1110
        %v1116 = vmul.f32 1.0, %v1115
        %v1117 = vmul.f32 %v1078, %v1101
        %v1118 = vmul.f32 %v1080, %v1116
        %v1119 = vpack.c.bf16 %v1118, %v1117
        %1120 = vrot.lane.b32.xlu0 %v799, 48
        %v1121 = vpop.permute.xlu0 %1120
        %v1123 = vsel %vm824, %v1119, 0
        %v1126 = vand.u32 %v1121, %v885
        %1128 = vmatpush.bf16.msra.mxu0 0
        %1129 = vmatpush.bf16.msra.mxu0 0
        %1130 = vmatpush.bf16.msra.mxu0 0
        %1131 = vmatpush.bf16.msra.mxu0 0
        %1132 = vmatpush.bf16.msra.mxu0 0
        %1133 = vmatpush.bf16.msra.mxu0 0
        %1134 = vmatpush.bf16.msra.mxu0 0
        %1135 = vmatpush.bf16.msra.mxu0 %v1126
        %1136 = vmatmul.bf16.gmra.mxu0 %v1123
        %v1137 = vpop.f32.mrf.mxu0
        %v1138 = vadd.f32 0.0, %v1137
        %v1139 = vpop.f32.mrf.mxu0
        %v1140 = vadd.f32 0.0, %v1139
        %1141 = vdwg.mxu0
        %v1142 = vpack.c.bf16 %v1140, %v1138
        %s1143 = scalar_lea.vmem %s640, 8
        %v1144 = vld [vmem:[%s1143] sm:$0xf]
        %v1146 = vsel %vm803, %v1142, 0
        %v1149 = vsel %vm882, %v1144, 0
        %1151 = vmatpush.bf16.msra.mxu0 0
        %1152 = vmatpush.bf16.msra.mxu0 0
        %1153 = vmatpush.bf16.msra.mxu0 0
        %1154 = vmatpush.bf16.msra.mxu0 0
        %1155 = vmatpush.bf16.msra.mxu0 0
        %1156 = vmatpush.bf16.msra.mxu0 0
        %1157 = vmatpush.bf16.msra.mxu0 0
        %1158 = vmatpush.bf16.msra.mxu0 %v1149
        %1159 = vmatmul.bf16.gmra.mxu0 %v1146
        %v1160 = vpop.f32.mrf.mxu0
        %v1161 = vadd.f32 0.0, %v1160
        %v1162 = vpop.f32.mrf.mxu0
        %v1163 = vadd.f32 0.0, %v1162
        %1164 = vdwg.mxu0
        %v1165 = vadd.f32 %v1041, %v1161
        %v1166 = vadd.f32 %v1043, %v1163
        %1167 = vrot.lane.b32.xlu0 %v799, 104
        %v1168 = vpop.permute.xlu0 %1167
        %1169 = vrot.lane.b32.xlu0 %v799, 72
        %v1170 = vpop.permute.xlu0 %1169
        %v1172 = vsel %vm803, %v1168, 0
        %v1175 = vsel %vm803, %v1170, 0
        %1177 = vmatpush.bf16.xpose.msra.mxu0 0
        %1178 = vmatpush.bf16.xpose.msra.mxu0 0
        %1179 = vmatpush.bf16.xpose.msra.mxu0 0
        %1180 = vmatpush.bf16.xpose.msra.mxu0 0
        %1181 = vmatpush.bf16.xpose.msra.mxu0 0
        %1182 = vmatpush.bf16.xpose.msra.mxu0 0
        %1183 = vmatpush.bf16.xpose.msra.mxu0 0
        %1184 = vmatpush.bf16.xpose.msra.mxu0 %v1175
        %1185 = vmatmul.bf16.gmra.mxu0 %v1172
        %v1186 = vpop.f32.mrf.mxu0
        %v1187 = vadd.f32 0.0, %v1186
        %v1188 = vpop.f32.mrf.mxu0
        %v1189 = vadd.f32 0.0, %v1188
        %1190 = vdwg.mxu0
        %v1191 = vsel %vm824, %v1187, -inf
        %1192 = vmax.xlane.f32.xlu0 %v1191
        %v1193 = vpop.xlane.xlu0 %1192
        %v1194 = vsel %vm828, %v1189, -inf
        %1195 = vmax.xlane.f32.xlu0 %v1194
        %v1196 = vpop.xlane.xlu0 %1195
        %v1197 = vsub.f32 %v1187, %v1193
        %v1198 = vsub.f32 %v1189, %v1196
        %v1199 = vmul.f32 %v1197, 1.442695
        %v1200 = vpow.pop %v1199
        %v1201 = vmul.f32 %v1198, 1.442695
        %v1202 = vpow.pop %v1201
        %v1203 = vsel %vm824, %v1200, 0.0
        %1204 = vadd.xlane.f32.xlu0 %v1203
        %v1205 = vpop.xlane.xlu0 %1204
        %v1206 = vsel %vm828, %v1202, 0.0
        %1207 = vadd.xlane.f32.xlu0 %v1206
        %v1208 = vpop.xlane.xlu0 %1207
        %v1209 = vrcp.pop %v1205
        %v1210 = vmul.f32 %v1205, %v1209
        %v1211 = vsub.f32 1.0, %v1210
        %v1212 = vmul.f32 %v1209, %v1211
        %v1213 = vadd.f32 %v1209, %v1212
        %vm1214 = vweird.f32 %v1205
        %vm1215 = vweird.f32 %v1209
        %vm1216 = vmor %vm1214, %vm1215
        %v1217 = vsel %vm1216, %v1209, %v1213
        %v1218 = vand.u32 2147483647, %v1205
        %vm1219 = vcmp.eq.f32.partialorder %v1218, 8.507059e+37
        %v1220 = vand.u32 %v1205, 2147483648
        %v1221 = vor.u32 1.1754944e-38, %v1220
        %v1222 = vsel %vm1219, %v1221, %v1217
        %v1223 = vmul.f32 1.0, %v1222
        %v1224 = vrcp.pop %v1208
        %v1225 = vmul.f32 %v1208, %v1224
        %v1226 = vsub.f32 1.0, %v1225
        %v1227 = vmul.f32 %v1224, %v1226
        %v1228 = vadd.f32 %v1224, %v1227
        %vm1229 = vweird.f32 %v1208
        %vm1230 = vweird.f32 %v1224
        %vm1231 = vmor %vm1229, %vm1230
        %v1232 = vsel %vm1231, %v1224, %v1228
        %v1233 = vand.u32 2147483647, %v1208
        %vm1234 = vcmp.eq.f32.partialorder %v1233, 8.507059e+37
        %v1235 = vand.u32 %v1208, 2147483648
        %v1236 = vor.u32 1.1754944e-38, %v1235
        %v1237 = vsel %vm1234, %v1236, %v1232
        %v1238 = vmul.f32 1.0, %v1237
        %v1239 = vmul.f32 %v1200, %v1223
        %v1240 = vmul.f32 %v1202, %v1238
        %v1241 = vpack.c.bf16 %v1240, %v1239
        %1242 = vrot.lane.b32.xlu0 %v799, 40
        %v1243 = vpop.permute.xlu0 %1242
        %v1245 = vsel %vm824, %v1241, 0
        %v1248 = vand.u32 %v1243, %v885
        %1250 = vmatpush.bf16.msra.mxu0 0
        %1251 = vmatpush.bf16.msra.mxu0 0
        %1252 = vmatpush.bf16.msra.mxu0 0
        %1253 = vmatpush.bf16.msra.mxu0 0
        %1254 = vmatpush.bf16.msra.mxu0 0
        %1255 = vmatpush.bf16.msra.mxu0 0
        %1256 = vmatpush.bf16.msra.mxu0 0
        %1257 = vmatpush.bf16.msra.mxu0 %v1248
        %1258 = vmatmul.bf16.gmra.mxu0 %v1245
        %v1259 = vpop.f32.mrf.mxu0
        %v1260 = vadd.f32 0.0, %v1259
        %v1261 = vpop.f32.mrf.mxu0
        %v1262 = vadd.f32 0.0, %v1261
        %1263 = vdwg.mxu0
        %v1264 = vpack.c.bf16 %v1262, %v1260
        %s1265 = scalar_lea.vmem %s640, 12
        %v1266 = vld [vmem:[%s1265] sm:$0xf]
        %v1268 = vsel %vm803, %v1264, 0
        %v1271 = vsel %vm882, %v1266, 0
        %1273 = vmatpush.bf16.msra.mxu0 0
        %1274 = vmatpush.bf16.msra.mxu0 0
        %1275 = vmatpush.bf16.msra.mxu0 0
        %1276 = vmatpush.bf16.msra.mxu0 0
        %1277 = vmatpush.bf16.msra.mxu0 0
        %1278 = vmatpush.bf16.msra.mxu0 0
        %1279 = vmatpush.bf16.msra.mxu0 0
        %1280 = vmatpush.bf16.msra.mxu0 %v1271
        %1281 = vmatmul.bf16.gmra.mxu0 %v1268
        %v1282 = vpop.f32.mrf.mxu0
        %v1283 = vadd.f32 0.0, %v1282
        %v1284 = vpop.f32.mrf.mxu0
        %v1285 = vadd.f32 0.0, %v1284
        %1286 = vdwg.mxu0
        %v1287 = vadd.f32 %v1165, %v1283
        %v1288 = vadd.f32 %v1166, %v1285
        %v1289 = vadd.f32 %v704, %v1287
        %v1290 = vadd.f32 %v705, %v1288
        %v1292 = vperm.slane %v701, 0
        %v1294 = vadd.f32 %v1289, %v1292
        %v1295 = vadd.f32 %v1290, %v1292
        %v1296 = vsel %vm706, %v1294, 0.0
        %1297 = vadd.xlane.f32.xlu0 %v1296
        %v1298 = vpop.xlane.xlu0 %1297
        %v1299 = vsel %vm710, %v1295, 0.0
        %1300 = vadd.xlane.f32.xlu0 %v1299
        %v1301 = vpop.xlane.xlu0 %1300
        %v1302 = vmul.f32 %v1298, %v720
        %v1303 = vmul.f32 %v1301, %v720
        %v1304 = vsub.f32 %v1294, %v1302
        %v1305 = vsub.f32 %v1295, %v1303
        %v1306 = vmul.f32 %v1304, %v1304
        %v1307 = vmul.f32 %v1305, %v1305
        %v1308 = vsel %vm706, %v1306, 0.0
        %1309 = vadd.xlane.f32.xlu0 %v1308
        %v1310 = vpop.xlane.xlu0 %1309
        %v1311 = vsel %vm710, %v1307, 0.0
        %1312 = vadd.xlane.f32.xlu0 %v1311
        %v1313 = vpop.xlane.xlu0 %1312
        %v1314 = vmul.f32 %v1310, %v720
        %v1315 = vmul.f32 %v1313, %v720
        %v1316 = vadd.f32 %v1314, 1e-05
        %v1317 = vadd.f32 %v1315, 1e-05
        %v1318 = vrsqrt.pop %v1316
        %v1319 = vmul.f32 %v1318, %v1316
        %v1320 = vmul.f32 %v1319, %v1318
        %v1321 = vmul.f32 0.5, %v1320
        %v1322 = vsub.f32 1.5, %v1321
        %v1323 = vmul.f32 %v1318, %v1322
        %vm1324 = vweird.f32 %v1316
        %vm1325 = vweird.f32 %v1318
        %vm1326 = vmor %vm1324, %vm1325
        %v1327 = vsel %vm1326, %v1318, %v1323
        %v1328 = vrsqrt.pop %v1317
        %v1329 = vmul.f32 %v1328, %v1317
        %v1330 = vmul.f32 %v1329, %v1328
        %v1331 = vmul.f32 0.5, %v1330
        %v1332 = vsub.f32 1.5, %v1331
        %v1333 = vmul.f32 %v1328, %v1332
        %vm1334 = vweird.f32 %v1317
        %vm1335 = vweird.f32 %v1328
        %vm1336 = vmor %vm1334, %vm1335
        %v1337 = vsel %vm1336, %v1328, %v1333
        %v1338 = vmul.f32 %v1304, %v1327
        %v1339 = vmul.f32 %v1305, %v1337
        %v1341 = vperm.slane %v699, 0
        %v1343 = vmul.f32 %v1338, %v1341
        %v1344 = vmul.f32 %v1339, %v1341
        %v1346 = vperm.slane %v700, 0
        %v1348 = vadd.f32 %v1343, %v1346
        %v1349 = vadd.f32 %v1344, %v1346
        %v1350 = vpack.c.bf16 %v1349, %v1348
        %v1352 = vperm.slane %v702, 0
        %v1358 = vunpack.c.l.b16 %v685
        %v1359 = vunpack.c.l.b16 %v686
        %v1360 = vunpack.c.l.b16 %v687
        %v1361 = vunpack.c.l.b16 %v688
        %v1362 = vpack.c.b16 %v1359, %v1358
        %v1363 = vpack.c.b16 %v1361, %v1360
        %v1367 = vsel %vm706, %v1350, 0
        %1369 = vmatpush.bf16.msra.mxu0 0
        %1370 = vmatpush.bf16.msra.mxu0 0
        %1371 = vmatpush.bf16.msra.mxu0 0
        %1372 = vmatpush.bf16.msra.mxu0 0
        %1373 = vmatpush.bf16.msra.mxu0 0
        %1374 = vmatpush.bf16.msra.mxu0 0
        %1375 = vmatpush.bf16.msra.mxu0 %v1363
        %1376 = vmatpush.bf16.msra.mxu0 %v1362
        %1377 = vmatmul.bf16.gmra.mxu0 %v1367
        %v1378 = vpop.f32.mrf.mxu0
        %v1379 = vadd.f32 %v1352, %v1378
        %v1380 = vpop.f32.mrf.mxu0
        %v1381 = vadd.f32 %v1352, %v1380
        %1382 = vdwg.mxu0
        %v1383 = vmul.f32 %v1379, 0.5
        %v1384 = vmul.f32 %v1381, 0.5
        %v1385 = vmul.f32 %v1379, 0.044715
        %v1386 = vmul.f32 %v1381, 0.044715
        %v1387 = vmul.f32 %v1385, %v1379
        %v1388 = vmul.f32 %v1386, %v1381
        %v1389 = vmul.f32 %v1387, %v1379
        %v1390 = vmul.f32 %v1388, %v1381
        %v1391 = vadd.f32 %v1379, %v1389
        %v1392 = vadd.f32 %v1381, %v1390
        %v1393 = vmul.f32 %v1391, 0.7978846
        %v1394 = vmul.f32 %v1392, 0.7978846
        %v1395 = vtanh.pop %v1393
        %v1396 = vtanh.pop %v1394
        %v1397 = vadd.f32 %v1395, 1.0
        %v1398 = vadd.f32 %v1396, 1.0
        %v1399 = vmul.f32 %v1383, %v1397
        %v1400 = vmul.f32 %v1384, %v1398
        %v1401 = vpack.c.bf16 %v1400, %v1399
        %v1403 = vperm.slane %v703, 0
        %v1413 = vunpack.c.l.b16 %v689
        %v1414 = vunpack.c.l.b16 %v690
        %v1415 = vunpack.c.l.b16 %v691
        %v1416 = vunpack.c.l.b16 %v692
        %v1417 = vunpack.c.l.b16 %v693
        %v1418 = vunpack.c.l.b16 %v694
        %v1419 = vunpack.c.l.b16 %v695
        %v1420 = vunpack.c.l.b16 %v696
        %v1421 = vpack.c.b16 %v1414, %v1413
        %v1422 = vpack.c.b16 %v1416, %v1415
        %v1423 = vpack.c.b16 %v1418, %v1417
        %v1424 = vpack.c.b16 %v1420, %v1419
        %vm1429 = vcmask 523264
        %v1431 = vsel %vm1429, %v1401, 0
        %1433 = vmatpush.bf16.msra.mxu0 0
        %1434 = vmatpush.bf16.msra.mxu0 0
        %1435 = vmatpush.bf16.msra.mxu0 0
        %1436 = vmatpush.bf16.msra.mxu0 0
        %1437 = vmatpush.bf16.msra.mxu0 %v1424
        %1438 = vmatpush.bf16.msra.mxu0 %v1423
        %1439 = vmatpush.bf16.msra.mxu0 %v1422
        %1440 = vmatpush.bf16.msra.mxu0 %v1421
        %1441 = vmatmul.bf16.gmra.mxu0 %v1431
        %v1442 = vpop.f32.mrf.mxu0
        %v1443 = vadd.f32 %v1403, %v1442
        %v1444 = vpop.f32.mrf.mxu0
        %v1445 = vadd.f32 %v1403, %v1444
        %1446 = vdwg.mxu0
        %v1447 = vadd.f32 %v1294, %v1443
        %v1448 = vadd.f32 %v1295, %v1445
        %1449 = vst.msk [vmem:[#allocation2] sm:$0xff] %vm706, %v1447
        %1450 = vst.msk [vmem:[#allocation2 + $0x8] sm:$0x1] %vm710, %v1448
        %p1451 = scmp.eq.s32.totalorder %s28, 1
        // Predicated region
        $region89: #{mp_avit_forward.1} parent=83 // pred_check
          %p1452 = pneg %p1451
        $region90: #{mp_avit_forward.1} parent=83 // pred_check_branch
          %1454 = sbr.rel (%p1452) target = $region92
        $region91: #{mp_avit_forward.1} parent=83 // pred_region
          %v1455 = vld [vmem:[%s12] sm:$0x1]
          %v1456 = vld [vmem:[%s13] sm:$0x1]
          %v1457 = vsel %vm710, %v1447, 0.0
          %1458 = vadd.xlane.f32.xlu0 %v1457
          %v1459 = vpop.xlane.xlu0 %1458
          %v1460 = vmul.f32 %v1459, %v720
          %v1461 = vsub.f32 %v1447, %v1460
          %v1462 = vmul.f32 %v1461, %v1461
          %v1463 = vsel %vm710, %v1462, 0.0
          %1464 = vadd.xlane.f32.xlu0 %v1463
          %v1465 = vpop.xlane.xlu0 %1464
          %v1466 = vmul.f32 %v1465, %v720
          %v1467 = vadd.f32 %v1466, 1e-05
          %v1468 = vrsqrt.pop %v1467
          %v1469 = vmul.f32 %v1468, %v1467
          %v1470 = vmul.f32 %v1469, %v1468
          %v1471 = vmul.f32 0.5, %v1470
          %v1472 = vsub.f32 1.5, %v1471
          %v1473 = vmul.f32 %v1468, %v1472
          %vm1474 = vweird.f32 %v1467
          %vm1475 = vweird.f32 %v1468
          %vm1476 = vmor %vm1474, %vm1475
          %v1477 = vsel %vm1476, %v1468, %v1473
          %v1478 = vmul.f32 %v1461, %v1477
          %v1479 = vmul.f32 %v1478, %v1455
          %v1480 = vadd.f32 %v1479, %v1456
          %v1481 = vpack.c.bf16 %v1480, %v1480
          %v1482 = vld [vmem:[%s14] sm:$0xf]
          %v1483 = vld [vmem:[%s14 + $0x4] sm:$0xf]
          %v1484 = vld [vmem:[%s14 + $0x8] sm:$0xf]
          %v1485 = vld [vmem:[%s14 + $0xc] sm:$0xf]
          %v1486 = vld [vmem:[%s15] sm:$0x1]
          %v1491 = vunpack.c.l.b16 %v1482
          %v1492 = vunpack.c.l.b16 %v1483
          %v1493 = vunpack.c.l.b16 %v1484
          %v1494 = vunpack.c.l.b16 %v1485
          %v1495 = vpack.c.b16 %v1492, %v1491
          %v1496 = vpack.c.b16 %v1494, %v1493
          %v1500 = vsel %vm706, %v1481, 0
          %1502 = vmatpush.bf16.msra.mxu0 0
          %1503 = vmatpush.bf16.msra.mxu0 0
          %1504 = vmatpush.bf16.msra.mxu0 0
          %1505 = vmatpush.bf16.msra.mxu0 0
          %1506 = vmatpush.bf16.msra.mxu0 0
          %1507 = vmatpush.bf16.msra.mxu0 0
          %1508 = vmatpush.bf16.msra.mxu0 %v1496
          %1509 = vmatpush.bf16.msra.mxu0 %v1495
          %1510 = vmatmul.bf16.gmra.mxu0 %v1500
          %v1511 = vpop.f32.mrf.mxu0
          %v1512 = vadd.f32 %v1486, %v1511
          %v1513 = vpop.f32.mrf.mxu0
          %1514 = vdwg.mxu0
          %vm1515 = vcmask 16384
          %1516 = vst.msk [vmem:[#allocation3] sm:$0x1] %vm1515, %v1512
        $region92: #{mp_avit_forward.1} parent=83 // pred_fallthru
          _
        %s1517 = scalar_lea.vmem [#allocation2], 16
        %v1518 = vld [vmem:[%s1517] sm:$0xff]
        %v1519 = vld [vmem:[%s1517 + $0x8] sm:$0x1]
        %v1520 = vsel %vm706, %v1518, 0.0
        %1521 = vadd.xlane.f32.xlu0 %v1520
        %v1522 = vpop.xlane.xlu0 %1521
        %v1523 = vsel %vm710, %v1519, 0.0
        %1524 = vadd.xlane.f32.xlu0 %v1523
        %v1525 = vpop.xlane.xlu0 %1524
        %v1526 = vmul.f32 %v1522, %v720
        %v1527 = vmul.f32 %v1525, %v720
        %v1528 = vsub.f32 %v1518, %v1526
        %v1529 = vsub.f32 %v1519, %v1527
        %v1530 = vmul.f32 %v1528, %v1528
        %v1531 = vmul.f32 %v1529, %v1529
        %v1532 = vsel %vm706, %v1530, 0.0
        %1533 = vadd.xlane.f32.xlu0 %v1532
        %v1534 = vpop.xlane.xlu0 %1533
        %v1535 = vsel %vm710, %v1531, 0.0
        %1536 = vadd.xlane.f32.xlu0 %v1535
        %v1537 = vpop.xlane.xlu0 %1536
        %v1538 = vmul.f32 %v1534, %v720
        %v1539 = vmul.f32 %v1537, %v720
        %v1540 = vadd.f32 %v1538, 1e-05
        %v1541 = vadd.f32 %v1539, 1e-05
        %v1542 = vrsqrt.pop %v1540
        %v1543 = vmul.f32 %v1542, %v1540
        %v1544 = vmul.f32 %v1543, %v1542
        %v1545 = vmul.f32 0.5, %v1544
        %v1546 = vsub.f32 1.5, %v1545
        %v1547 = vmul.f32 %v1542, %v1546
        %vm1548 = vweird.f32 %v1540
        %vm1549 = vweird.f32 %v1542
        %vm1550 = vmor %vm1548, %vm1549
        %v1551 = vsel %vm1550, %v1542, %v1547
        %v1552 = vrsqrt.pop %v1541
        %v1553 = vmul.f32 %v1552, %v1541
        %v1554 = vmul.f32 %v1553, %v1552
        %v1555 = vmul.f32 0.5, %v1554
        %v1556 = vsub.f32 1.5, %v1555
        %v1557 = vmul.f32 %v1552, %v1556
        %vm1558 = vweird.f32 %v1541
        %vm1559 = vweird.f32 %v1552
        %vm1560 = vmor %vm1558, %vm1559
        %v1561 = vsel %vm1560, %v1552, %v1557
        %v1562 = vmul.f32 %v1528, %v1551
        %v1563 = vmul.f32 %v1529, %v1561
        %v1564 = vmul.f32 %v1562, %v760
        %v1565 = vmul.f32 %v1563, %v760
        %v1566 = vadd.f32 %v1564, %v765
        %v1567 = vadd.f32 %v1565, %v765
        %v1568 = vpack.c.bf16 %v1567, %v1566
        %v1570 = vsel %vm706, %v1568, 0
        %1572 = vmatpush.bf16.msra.mxu0 0
        %1573 = vmatpush.bf16.msra.mxu0 0
        %1574 = vmatpush.bf16.msra.mxu0 0
        %1575 = vmatpush.bf16.msra.mxu0 0
        %1576 = vmatpush.bf16.msra.mxu0 0
        %1577 = vmatpush.bf16.msra.mxu0 0
        %1578 = vmatpush.bf16.msra.mxu0 %v779
        %1579 = vmatpush.bf16.msra.mxu0 %v778
        %1580 = vmatmul.bf16.gmra.mxu0 %v1570
        %v1581 = vpop.f32.mrf.mxu0
        %v1582 = vadd.f32 0.0, %v1581
        %v1583 = vpop.f32.mrf.mxu0
        %v1584 = vadd.f32 0.0, %v1583
        %1585 = vdwg.mxu0
        %v1586 = vpack.c.bf16 %v1584, %v1582
        %1588 = vrot.lane.b32.xlu0 %v1586, 96
        %v1589 = vpop.permute.xlu0 %1588
        %v1591 = vsel %vm803, %v1586, 0
        %v1594 = vsel %vm803, %v1589, 0
        %1596 = vmatpush.bf16.xpose.msra.mxu0 0
        %1597 = vmatpush.bf16.xpose.msra.mxu0 0
        %1598 = vmatpush.bf16.xpose.msra.mxu0 0
        %1599 = vmatpush.bf16.xpose.msra.mxu0 0
        %1600 = vmatpush.bf16.xpose.msra.mxu0 0
        %1601 = vmatpush.bf16.xpose.msra.mxu0 0
        %1602 = vmatpush.bf16.xpose.msra.mxu0 0
        %1603 = vmatpush.bf16.xpose.msra.mxu0 %v1594
        %1604 = vmatmul.bf16.gmra.mxu0 %v1591
        %v1605 = vpop.f32.mrf.mxu0
        %v1606 = vadd.f32 0.0, %v1605
        %v1607 = vpop.f32.mrf.mxu0
        %v1608 = vadd.f32 0.0, %v1607
        %1609 = vdwg.mxu0
        %v1610 = vsel %vm824, %v1606, -inf
        %1611 = vmax.xlane.f32.xlu0 %v1610
        %v1612 = vpop.xlane.xlu0 %1611
        %v1613 = vsel %vm828, %v1608, -inf
        %1614 = vmax.xlane.f32.xlu0 %v1613
        %v1615 = vpop.xlane.xlu0 %1614
        %v1616 = vsub.f32 %v1606, %v1612
        %v1617 = vsub.f32 %v1608, %v1615
        %v1618 = vmul.f32 %v1616, 1.442695
        %v1619 = vpow.pop %v1618
        %v1620 = vmul.f32 %v1617, 1.442695
        %v1621 = vpow.pop %v1620
        %v1622 = vsel %vm824, %v1619, 0.0
        %1623 = vadd.xlane.f32.xlu0 %v1622
        %v1624 = vpop.xlane.xlu0 %1623
        %v1625 = vsel %vm828, %v1621, 0.0
        %1626 = vadd.xlane.f32.xlu0 %v1625
        %v1627 = vpop.xlane.xlu0 %1626
        %v1628 = vrcp.pop %v1624
        %v1629 = vmul.f32 %v1624, %v1628
        %v1630 = vsub.f32 1.0, %v1629
        %v1631 = vmul.f32 %v1628, %v1630
        %v1632 = vadd.f32 %v1628, %v1631
        %vm1633 = vweird.f32 %v1624
        %vm1634 = vweird.f32 %v1628
        %vm1635 = vmor %vm1633, %vm1634
        %v1636 = vsel %vm1635, %v1628, %v1632
        %v1637 = vand.u32 2147483647, %v1624
        %vm1638 = vcmp.eq.f32.partialorder %v1637, 8.507059e+37
        %v1639 = vand.u32 %v1624, 2147483648
        %v1640 = vor.u32 1.1754944e-38, %v1639
        %v1641 = vsel %vm1638, %v1640, %v1636
        %v1642 = vmul.f32 1.0, %v1641
        %v1643 = vrcp.pop %v1627
        %v1644 = vmul.f32 %v1627, %v1643
        %v1645 = vsub.f32 1.0, %v1644
        %v1646 = vmul.f32 %v1643, %v1645
        %v1647 = vadd.f32 %v1643, %v1646
        %vm1648 = vweird.f32 %v1627
        %vm1649 = vweird.f32 %v1643
        %vm1650 = vmor %vm1648, %vm1649
        %v1651 = vsel %vm1650, %v1643, %v1647
        %v1652 = vand.u32 2147483647, %v1627
        %vm1653 = vcmp.eq.f32.partialorder %v1652, 8.507059e+37
        %v1654 = vand.u32 %v1627, 2147483648
        %v1655 = vor.u32 1.1754944e-38, %v1654
        %v1656 = vsel %vm1653, %v1655, %v1651
        %v1657 = vmul.f32 1.0, %v1656
        %v1658 = vmul.f32 %v1619, %v1642
        %v1659 = vmul.f32 %v1621, %v1657
        %v1660 = vpack.c.bf16 %v1659, %v1658
        %1661 = vrot.lane.b32.xlu0 %v1586, 64
        %v1662 = vpop.permute.xlu0 %1661
        %v1664 = vsel %vm824, %v1660, 0
        %v1667 = vand.u32 %v1662, %v885
        %1669 = vmatpush.bf16.msra.mxu0 0
        %1670 = vmatpush.bf16.msra.mxu0 0
        %1671 = vmatpush.bf16.msra.mxu0 0
        %1672 = vmatpush.bf16.msra.mxu0 0
        %1673 = vmatpush.bf16.msra.mxu0 0
        %1674 = vmatpush.bf16.msra.mxu0 0
        %1675 = vmatpush.bf16.msra.mxu0 0
        %1676 = vmatpush.bf16.msra.mxu0 %v1667
        %1677 = vmatmul.bf16.gmra.mxu0 %v1664
        %v1678 = vpop.f32.mrf.mxu0
        %v1679 = vadd.f32 0.0, %v1678
        %v1680 = vpop.f32.mrf.mxu0
        %v1681 = vadd.f32 0.0, %v1680
        %1682 = vdwg.mxu0
        %v1683 = vpack.c.bf16 %v1681, %v1679
        %v1684 = vld [vmem:[%s640] sm:$0xf]
        %1685 = vrot.lane.b32.xlu0 %v1586, 120
        %v1686 = vpop.permute.xlu0 %1685
        %1687 = vrot.lane.b32.xlu0 %v1586, 88
        %v1688 = vpop.permute.xlu0 %1687
        %v1690 = vsel %vm803, %v1686, 0
        %v1693 = vsel %vm803, %v1688, 0
        %1695 = vmatpush.bf16.xpose.msra.mxu0 0
        %1696 = vmatpush.bf16.xpose.msra.mxu0 0
        %1697 = vmatpush.bf16.xpose.msra.mxu0 0
        %1698 = vmatpush.bf16.xpose.msra.mxu0 0
        %1699 = vmatpush.bf16.xpose.msra.mxu0 0
        %1700 = vmatpush.bf16.xpose.msra.mxu0 0
        %1701 = vmatpush.bf16.xpose.msra.mxu0 0
        %1702 = vmatpush.bf16.xpose.msra.mxu0 %v1693
        %1703 = vmatmul.bf16.gmra.mxu0 %v1690
        %v1704 = vpop.f32.mrf.mxu0
        %v1705 = vadd.f32 0.0, %v1704
        %v1706 = vpop.f32.mrf.mxu0
        %v1707 = vadd.f32 0.0, %v1706
        %1708 = vdwg.mxu0
        %v1709 = vsel %vm824, %v1705, -inf
        %1710 = vmax.xlane.f32.xlu0 %v1709
        %v1711 = vpop.xlane.xlu0 %1710
        %v1712 = vsel %vm828, %v1707, -inf
        %1713 = vmax.xlane.f32.xlu0 %v1712
        %v1714 = vpop.xlane.xlu0 %1713
        %v1715 = vsub.f32 %v1705, %v1711
        %v1716 = vsub.f32 %v1707, %v1714
        %v1717 = vmul.f32 %v1715, 1.442695
        %v1718 = vpow.pop %v1717
        %v1719 = vmul.f32 %v1716, 1.442695
        %v1720 = vpow.pop %v1719
        %v1721 = vsel %vm824, %v1718, 0.0
        %1722 = vadd.xlane.f32.xlu0 %v1721
        %v1723 = vpop.xlane.xlu0 %1722
        %v1724 = vsel %vm828, %v1720, 0.0
        %1725 = vadd.xlane.f32.xlu0 %v1724
        %v1726 = vpop.xlane.xlu0 %1725
        %v1727 = vrcp.pop %v1723
        %v1728 = vmul.f32 %v1723, %v1727
        %v1729 = vsub.f32 1.0, %v1728
        %v1730 = vmul.f32 %v1727, %v1729
        %v1731 = vadd.f32 %v1727, %v1730
        %vm1732 = vweird.f32 %v1723
        %vm1733 = vweird.f32 %v1727
        %vm1734 = vmor %vm1732, %vm1733
        %v1735 = vsel %vm1734, %v1727, %v1731
        %v1736 = vand.u32 2147483647, %v1723
        %vm1737 = vcmp.eq.f32.partialorder %v1736, 8.507059e+37
        %v1738 = vand.u32 %v1723, 2147483648
        %v1739 = vor.u32 1.1754944e-38, %v1738
        %v1740 = vsel %vm1737, %v1739, %v1735
        %v1741 = vmul.f32 1.0, %v1740
        %v1742 = vrcp.pop %v1726
        %v1743 = vmul.f32 %v1726, %v1742
        %v1744 = vsub.f32 1.0, %v1743
        %v1745 = vmul.f32 %v1742, %v1744
        %v1746 = vadd.f32 %v1742, %v1745
        %vm1747 = vweird.f32 %v1726
        %vm1748 = vweird.f32 %v1742
        %vm1749 = vmor %vm1747, %vm1748
        %v1750 = vsel %vm1749, %v1742, %v1746
        %v1751 = vand.u32 2147483647, %v1726
        %vm1752 = vcmp.eq.f32.partialorder %v1751, 8.507059e+37
        %v1753 = vand.u32 %v1726, 2147483648
        %v1754 = vor.u32 1.1754944e-38, %v1753
        %v1755 = vsel %vm1752, %v1754, %v1750
        %v1756 = vmul.f32 1.0, %v1755
        %v1757 = vmul.f32 %v1718, %v1741
        %v1758 = vmul.f32 %v1720, %v1756
        %v1759 = vpack.c.bf16 %v1758, %v1757
        %1760 = vrot.lane.b32.xlu0 %v1586, 56
        %v1761 = vpop.permute.xlu0 %1760
        %v1763 = vsel %vm824, %v1759, 0
        %v1766 = vand.u32 %v1761, %v885
        %1768 = vmatpush.bf16.msra.mxu0 0
        %1769 = vmatpush.bf16.msra.mxu0 0
        %1770 = vmatpush.bf16.msra.mxu0 0
        %1771 = vmatpush.bf16.msra.mxu0 0
        %1772 = vmatpush.bf16.msra.mxu0 0
        %1773 = vmatpush.bf16.msra.mxu0 0
        %1774 = vmatpush.bf16.msra.mxu0 0
        %1775 = vmatpush.bf16.msra.mxu0 %v1766
        %1776 = vmatmul.bf16.gmra.mxu0 %v1763
        %v1777 = vpop.f32.mrf.mxu0
        %v1778 = vadd.f32 0.0, %v1777
        %v1779 = vpop.f32.mrf.mxu0
        %v1780 = vadd.f32 0.0, %v1779
        %1781 = vdwg.mxu0
        %v1782 = vpack.c.bf16 %v1780, %v1778
        %v1783 = vld [vmem:[%s1003] sm:$0xf]
        %v1785 = vsel %vm803, %v1782, 0
        %v1788 = vsel %vm882, %v1783, 0
        %1790 = vmatpush.bf16.msra.mxu0 0
        %1791 = vmatpush.bf16.msra.mxu0 0
        %1792 = vmatpush.bf16.msra.mxu0 0
        %1793 = vmatpush.bf16.msra.mxu0 0
        %1794 = vmatpush.bf16.msra.mxu0 0
        %1795 = vmatpush.bf16.msra.mxu0 0
        %1796 = vmatpush.bf16.msra.mxu0 0
        %1797 = vmatpush.bf16.msra.mxu0 %v1788
        %1798 = vmatmul.bf16.gmra.mxu0 %v1785
        %v1799 = vpop.f32.mrf.mxu0
        %v1800 = vadd.f32 0.0, %v1799
        %v1801 = vpop.f32.mrf.mxu0
        %v1802 = vadd.f32 0.0, %v1801
        %1803 = vdwg.mxu0
        %v1805 = vsel %vm803, %v1683, 0
        %v1808 = vsel %vm882, %v1684, 0
        %1810 = vmatpush.bf16.msra.mxu0 0
        %1811 = vmatpush.bf16.msra.mxu0 0
        %1812 = vmatpush.bf16.msra.mxu0 0
        %1813 = vmatpush.bf16.msra.mxu0 0
        %1814 = vmatpush.bf16.msra.mxu0 0
        %1815 = vmatpush.bf16.msra.mxu0 0
        %1816 = vmatpush.bf16.msra.mxu0 0
        %1817 = vmatpush.bf16.msra.mxu0 %v1808
        %1818 = vmatmul.bf16.gmra.mxu0 %v1805
        %v1819 = vpop.f32.mrf.mxu0
        %v1820 = vadd.f32 %v1800, %v1819
        %v1821 = vpop.f32.mrf.mxu0
        %v1822 = vadd.f32 %v1802, %v1821
        %1823 = vdwg.mxu0
        %1824 = vrot.lane.b32.xlu0 %v1586, 112
        %v1825 = vpop.permute.xlu0 %1824
        %1826 = vrot.lane.b32.xlu0 %v1586, 80
        %v1827 = vpop.permute.xlu0 %1826
        %v1829 = vsel %vm803, %v1825, 0
        %v1832 = vsel %vm803, %v1827, 0
        %1834 = vmatpush.bf16.xpose.msra.mxu0 0
        %1835 = vmatpush.bf16.xpose.msra.mxu0 0
        %1836 = vmatpush.bf16.xpose.msra.mxu0 0
        %1837 = vmatpush.bf16.xpose.msra.mxu0 0
        %1838 = vmatpush.bf16.xpose.msra.mxu0 0
        %1839 = vmatpush.bf16.xpose.msra.mxu0 0
        %1840 = vmatpush.bf16.xpose.msra.mxu0 0
        %1841 = vmatpush.bf16.xpose.msra.mxu0 %v1832
        %1842 = vmatmul.bf16.gmra.mxu0 %v1829
        %v1843 = vpop.f32.mrf.mxu0
        %v1844 = vadd.f32 0.0, %v1843
        %v1845 = vpop.f32.mrf.mxu0
        %v1846 = vadd.f32 0.0, %v1845
        %1847 = vdwg.mxu0
        %v1848 = vsel %vm824, %v1844, -inf
        %1849 = vmax.xlane.f32.xlu0 %v1848
        %v1850 = vpop.xlane.xlu0 %1849
        %v1851 = vsel %vm828, %v1846, -inf
        %1852 = vmax.xlane.f32.xlu0 %v1851
        %v1853 = vpop.xlane.xlu0 %1852
        %v1854 = vsub.f32 %v1844, %v1850
        %v1855 = vsub.f32 %v1846, %v1853
        %v1856 = vmul.f32 %v1854, 1.442695
        %v1857 = vpow.pop %v1856
        %v1858 = vmul.f32 %v1855, 1.442695
        %v1859 = vpow.pop %v1858
        %v1860 = vsel %vm824, %v1857, 0.0
        %1861 = vadd.xlane.f32.xlu0 %v1860
        %v1862 = vpop.xlane.xlu0 %1861
        %v1863 = vsel %vm828, %v1859, 0.0
        %1864 = vadd.xlane.f32.xlu0 %v1863
        %v1865 = vpop.xlane.xlu0 %1864
        %v1866 = vrcp.pop %v1862
        %v1867 = vmul.f32 %v1862, %v1866
        %v1868 = vsub.f32 1.0, %v1867
        %v1869 = vmul.f32 %v1866, %v1868
        %v1870 = vadd.f32 %v1866, %v1869
        %vm1871 = vweird.f32 %v1862
        %vm1872 = vweird.f32 %v1866
        %vm1873 = vmor %vm1871, %vm1872
        %v1874 = vsel %vm1873, %v1866, %v1870
        %v1875 = vand.u32 2147483647, %v1862
        %vm1876 = vcmp.eq.f32.partialorder %v1875, 8.507059e+37
        %v1877 = vand.u32 %v1862, 2147483648
        %v1878 = vor.u32 1.1754944e-38, %v1877
        %v1879 = vsel %vm1876, %v1878, %v1874
        %v1880 = vmul.f32 1.0, %v1879
        %v1881 = vrcp.pop %v1865
        %v1882 = vmul.f32 %v1865, %v1881
        %v1883 = vsub.f32 1.0, %v1882
        %v1884 = vmul.f32 %v1881, %v1883
        %v1885 = vadd.f32 %v1881, %v1884
        %vm1886 = vweird.f32 %v1865
        %vm1887 = vweird.f32 %v1881
        %vm1888 = vmor %vm1886, %vm1887
        %v1889 = vsel %vm1888, %v1881, %v1885
        %v1890 = vand.u32 2147483647, %v1865
        %vm1891 = vcmp.eq.f32.partialorder %v1890, 8.507059e+37
        %v1892 = vand.u32 %v1865, 2147483648
        %v1893 = vor.u32 1.1754944e-38, %v1892
        %v1894 = vsel %vm1891, %v1893, %v1889
        %v1895 = vmul.f32 1.0, %v1894
        %v1896 = vmul.f32 %v1857, %v1880
        %v1897 = vmul.f32 %v1859, %v1895
        %v1898 = vpack.c.bf16 %v1897, %v1896
        %1899 = vrot.lane.b32.xlu0 %v1586, 48
        %v1900 = vpop.permute.xlu0 %1899
        %v1902 = vsel %vm824, %v1898, 0
        %v1905 = vand.u32 %v1900, %v885
        %1907 = vmatpush.bf16.msra.mxu0 0
        %1908 = vmatpush.bf16.msra.mxu0 0
        %1909 = vmatpush.bf16.msra.mxu0 0
        %1910 = vmatpush.bf16.msra.mxu0 0
        %1911 = vmatpush.bf16.msra.mxu0 0
        %1912 = vmatpush.bf16.msra.mxu0 0
        %1913 = vmatpush.bf16.msra.mxu0 0
        %1914 = vmatpush.bf16.msra.mxu0 %v1905
        %1915 = vmatmul.bf16.gmra.mxu0 %v1902
        %v1916 = vpop.f32.mrf.mxu0
        %v1917 = vadd.f32 0.0, %v1916
        %v1918 = vpop.f32.mrf.mxu0
        %v1919 = vadd.f32 0.0, %v1918
        %1920 = vdwg.mxu0
        %v1921 = vpack.c.bf16 %v1919, %v1917
        %v1922 = vld [vmem:[%s1143] sm:$0xf]
        %v1924 = vsel %vm803, %v1921, 0
        %v1927 = vsel %vm882, %v1922, 0
        %1929 = vmatpush.bf16.msra.mxu0 0
        %1930 = vmatpush.bf16.msra.mxu0 0
        %1931 = vmatpush.bf16.msra.mxu0 0
        %1932 = vmatpush.bf16.msra.mxu0 0
        %1933 = vmatpush.bf16.msra.mxu0 0
        %1934 = vmatpush.bf16.msra.mxu0 0
        %1935 = vmatpush.bf16.msra.mxu0 0
        %1936 = vmatpush.bf16.msra.mxu0 %v1927
        %1937 = vmatmul.bf16.gmra.mxu0 %v1924
        %v1938 = vpop.f32.mrf.mxu0
        %v1939 = vadd.f32 0.0, %v1938
        %v1940 = vpop.f32.mrf.mxu0
        %v1941 = vadd.f32 0.0, %v1940
        %1942 = vdwg.mxu0
        %v1943 = vadd.f32 %v1820, %v1939
        %v1944 = vadd.f32 %v1822, %v1941
        %1945 = vrot.lane.b32.xlu0 %v1586, 104
        %v1946 = vpop.permute.xlu0 %1945
        %1947 = vrot.lane.b32.xlu0 %v1586, 72
        %v1948 = vpop.permute.xlu0 %1947
        %v1950 = vsel %vm803, %v1946, 0
        %v1953 = vsel %vm803, %v1948, 0
        %1955 = vmatpush.bf16.xpose.msra.mxu0 0
        %1956 = vmatpush.bf16.xpose.msra.mxu0 0
        %1957 = vmatpush.bf16.xpose.msra.mxu0 0
        %1958 = vmatpush.bf16.xpose.msra.mxu0 0
        %1959 = vmatpush.bf16.xpose.msra.mxu0 0
        %1960 = vmatpush.bf16.xpose.msra.mxu0 0
        %1961 = vmatpush.bf16.xpose.msra.mxu0 0
        %1962 = vmatpush.bf16.xpose.msra.mxu0 %v1953
        %1963 = vmatmul.bf16.gmra.mxu0 %v1950
        %v1964 = vpop.f32.mrf.mxu0
        %v1965 = vadd.f32 0.0, %v1964
        %v1966 = vpop.f32.mrf.mxu0
        %v1967 = vadd.f32 0.0, %v1966
        %1968 = vdwg.mxu0
        %v1969 = vsel %vm824, %v1965, -inf
        %1970 = vmax.xlane.f32.xlu0 %v1969
        %v1971 = vpop.xlane.xlu0 %1970
        %v1972 = vsel %vm828, %v1967, -inf
        %1973 = vmax.xlane.f32.xlu0 %v1972
        %v1974 = vpop.xlane.xlu0 %1973
        %v1975 = vsub.f32 %v1965, %v1971
        %v1976 = vsub.f32 %v1967, %v1974
        %v1977 = vmul.f32 %v1975, 1.442695
        %v1978 = vpow.pop %v1977
        %v1979 = vmul.f32 %v1976, 1.442695
        %v1980 = vpow.pop %v1979
        %v1981 = vsel %vm824, %v1978, 0.0
        %1982 = vadd.xlane.f32.xlu0 %v1981
        %v1983 = vpop.xlane.xlu0 %1982
        %v1984 = vsel %vm828, %v1980, 0.0
        %1985 = vadd.xlane.f32.xlu0 %v1984
        %v1986 = vpop.xlane.xlu0 %1985
        %v1987 = vrcp.pop %v1983
        %v1988 = vmul.f32 %v1983, %v1987
        %v1989 = vsub.f32 1.0, %v1988
        %v1990 = vmul.f32 %v1987, %v1989
        %v1991 = vadd.f32 %v1987, %v1990
        %vm1992 = vweird.f32 %v1983
        %vm1993 = vweird.f32 %v1987
        %vm1994 = vmor %vm1992, %vm1993
        %v1995 = vsel %vm1994, %v1987, %v1991
        %v1996 = vand.u32 2147483647, %v1983
        %vm1997 = vcmp.eq.f32.partialorder %v1996, 8.507059e+37
        %v1998 = vand.u32 %v1983, 2147483648
        %v1999 = vor.u32 1.1754944e-38, %v1998
        %v2000 = vsel %vm1997, %v1999, %v1995
        %v2001 = vmul.f32 1.0, %v2000
        %v2002 = vrcp.pop %v1986
        %v2003 = vmul.f32 %v1986, %v2002
        %v2004 = vsub.f32 1.0, %v2003
        %v2005 = vmul.f32 %v2002, %v2004
        %v2006 = vadd.f32 %v2002, %v2005
        %vm2007 = vweird.f32 %v1986
        %vm2008 = vweird.f32 %v2002
        %vm2009 = vmor %vm2007, %vm2008
        %v2010 = vsel %vm2009, %v2002, %v2006
        %v2011 = vand.u32 2147483647, %v1986
        %vm2012 = vcmp.eq.f32.partialorder %v2011, 8.507059e+37
        %v2013 = vand.u32 %v1986, 2147483648
        %v2014 = vor.u32 1.1754944e-38, %v2013
        %v2015 = vsel %vm2012, %v2014, %v2010
        %v2016 = vmul.f32 1.0, %v2015
        %v2017 = vmul.f32 %v1978, %v2001
        %v2018 = vmul.f32 %v1980, %v2016
        %v2019 = vpack.c.bf16 %v2018, %v2017
        %2020 = vrot.lane.b32.xlu0 %v1586, 40
        %v2021 = vpop.permute.xlu0 %2020
        %v2023 = vsel %vm824, %v2019, 0
        %v2026 = vand.u32 %v2021, %v885
        %2028 = vmatpush.bf16.msra.mxu0 0
        %2029 = vmatpush.bf16.msra.mxu0 0
        %2030 = vmatpush.bf16.msra.mxu0 0
        %2031 = vmatpush.bf16.msra.mxu0 0
        %2032 = vmatpush.bf16.msra.mxu0 0
        %2033 = vmatpush.bf16.msra.mxu0 0
        %2034 = vmatpush.bf16.msra.mxu0 0
        %2035 = vmatpush.bf16.msra.mxu0 %v2026
        %2036 = vmatmul.bf16.gmra.mxu0 %v2023
        %v2037 = vpop.f32.mrf.mxu0
        %v2038 = vadd.f32 0.0, %v2037
        %v2039 = vpop.f32.mrf.mxu0
        %v2040 = vadd.f32 0.0, %v2039
        %2041 = vdwg.mxu0
        %v2042 = vpack.c.bf16 %v2040, %v2038
        %v2043 = vld [vmem:[%s1265] sm:$0xf]
        %v2045 = vsel %vm803, %v2042, 0
        %v2048 = vsel %vm882, %v2043, 0
        %2050 = vmatpush.bf16.msra.mxu0 0
        %2051 = vmatpush.bf16.msra.mxu0 0
        %2052 = vmatpush.bf16.msra.mxu0 0
        %2053 = vmatpush.bf16.msra.mxu0 0
        %2054 = vmatpush.bf16.msra.mxu0 0
        %2055 = vmatpush.bf16.msra.mxu0 0
        %2056 = vmatpush.bf16.msra.mxu0 0
        %2057 = vmatpush.bf16.msra.mxu0 %v2048
        %2058 = vmatmul.bf16.gmra.mxu0 %v2045
        %v2059 = vpop.f32.mrf.mxu0
        %v2060 = vadd.f32 0.0, %v2059
        %v2061 = vpop.f32.mrf.mxu0
        %v2062 = vadd.f32 0.0, %v2061
        %2063 = vdwg.mxu0
        %v2064 = vadd.f32 %v1943, %v2060
        %v2065 = vadd.f32 %v1944, %v2062
        %v2066 = vadd.f32 %v1518, %v2064
        %v2067 = vadd.f32 %v1519, %v2065
        %v2068 = vadd.f32 %v2066, %v1292
        %v2069 = vadd.f32 %v2067, %v1292
        %v2070 = vsel %vm706, %v2068, 0.0
        %2071 = vadd.xlane.f32.xlu0 %v2070
        %v2072 = vpop.xlane.xlu0 %2071
        %v2073 = vsel %vm710, %v2069, 0.0
        %2074 = vadd.xlane.f32.xlu0 %v2073
        %v2075 = vpop.xlane.xlu0 %2074
        %v2076 = vmul.f32 %v2072, %v720
        %v2077 = vmul.f32 %v2075, %v720
        %v2078 = vsub.f32 %v2068, %v2076
        %v2079 = vsub.f32 %v2069, %v2077
        %v2080 = vmul.f32 %v2078, %v2078
        %v2081 = vmul.f32 %v2079, %v2079
        %v2082 = vsel %vm706, %v2080, 0.0
        %2083 = vadd.xlane.f32.xlu0 %v2082
        %v2084 = vpop.xlane.xlu0 %2083
        %v2085 = vsel %vm710, %v2081, 0.0
        %2086 = vadd.xlane.f32.xlu0 %v2085
        %v2087 = vpop.xlane.xlu0 %2086
        %v2088 = vmul.f32 %v2084, %v720
        %v2089 = vmul.f32 %v2087, %v720
        %v2090 = vadd.f32 %v2088, 1e-05
        %v2091 = vadd.f32 %v2089, 1e-05
        %v2092 = vrsqrt.pop %v2090
        %v2093 = vmul.f32 %v2092, %v2090
        %v2094 = vmul.f32 %v2093, %v2092
        %v2095 = vmul.f32 0.5, %v2094
        %v2096 = vsub.f32 1.5, %v2095
        %v2097 = vmul.f32 %v2092, %v2096
        %vm2098 = vweird.f32 %v2090
        %vm2099 = vweird.f32 %v2092
        %vm2100 = vmor %vm2098, %vm2099
        %v2101 = vsel %vm2100, %v2092, %v2097
        %v2102 = vrsqrt.pop %v2091
        %v2103 = vmul.f32 %v2102, %v2091
        %v2104 = vmul.f32 %v2103, %v2102
        %v2105 = vmul.f32 0.5, %v2104
        %v2106 = vsub.f32 1.5, %v2105
        %v2107 = vmul.f32 %v2102, %v2106
        %vm2108 = vweird.f32 %v2091
        %vm2109 = vweird.f32 %v2102
        %vm2110 = vmor %vm2108, %vm2109
        %v2111 = vsel %vm2110, %v2102, %v2107
        %v2112 = vmul.f32 %v2078, %v2101
        %v2113 = vmul.f32 %v2079, %v2111
        %v2114 = vmul.f32 %v2112, %v1341
        %v2115 = vmul.f32 %v2113, %v1341
        %v2116 = vadd.f32 %v2114, %v1346
        %v2117 = vadd.f32 %v2115, %v1346
        %v2118 = vpack.c.bf16 %v2117, %v2116
        %v2120 = vsel %vm706, %v2118, 0
        %2122 = vmatpush.bf16.msra.mxu0 0
        %2123 = vmatpush.bf16.msra.mxu0 0
        %2124 = vmatpush.bf16.msra.mxu0 0
        %2125 = vmatpush.bf16.msra.mxu0 0
        %2126 = vmatpush.bf16.msra.mxu0 0
        %2127 = vmatpush.bf16.msra.mxu0 0
        %2128 = vmatpush.bf16.msra.mxu0 %v1363
        %2129 = vmatpush.bf16.msra.mxu0 %v1362
        %2130 = vmatmul.bf16.gmra.mxu0 %v2120
        %v2131 = vpop.f32.mrf.mxu0
        %v2132 = vadd.f32 %v1352, %v2131
        %v2133 = vpop.f32.mrf.mxu0
        %v2134 = vadd.f32 %v1352, %v2133
        %2135 = vdwg.mxu0
        %v2136 = vmul.f32 %v2132, 0.5
        %v2137 = vmul.f32 %v2134, 0.5
        %v2138 = vmul.f32 %v2132, 0.044715
        %v2139 = vmul.f32 %v2134, 0.044715
        %v2140 = vmul.f32 %v2138, %v2132
        %v2141 = vmul.f32 %v2139, %v2134
        %v2142 = vmul.f32 %v2140, %v2132
        %v2143 = vmul.f32 %v2141, %v2134
        %v2144 = vadd.f32 %v2132, %v2142
        %v2145 = vadd.f32 %v2134, %v2143
        %v2146 = vmul.f32 %v2144, 0.7978846
        %v2147 = vmul.f32 %v2145, 0.7978846
        %v2148 = vtanh.pop %v2146
        %v2149 = vtanh.pop %v2147
        %v2150 = vadd.f32 %v2148, 1.0
        %v2151 = vadd.f32 %v2149, 1.0
        %v2152 = vmul.f32 %v2136, %v2150
        %v2153 = vmul.f32 %v2137, %v2151
        %v2154 = vpack.c.bf16 %v2153, %v2152
        %v2156 = vsel %vm1429, %v2154, 0
        %2158 = vmatpush.bf16.msra.mxu0 0
        %2159 = vmatpush.bf16.msra.mxu0 0
        %2160 = vmatpush.bf16.msra.mxu0 0
        %2161 = vmatpush.bf16.msra.mxu0 0
        %2162 = vmatpush.bf16.msra.mxu0 %v1424
        %2163 = vmatpush.bf16.msra.mxu0 %v1423
        %2164 = vmatpush.bf16.msra.mxu0 %v1422
        %2165 = vmatpush.bf16.msra.mxu0 %v1421
        %2166 = vmatmul.bf16.gmra.mxu0 %v2156
        %v2167 = vpop.f32.mrf.mxu0
        %v2168 = vadd.f32 %v1403, %v2167
        %v2169 = vpop.f32.mrf.mxu0
        %v2170 = vadd.f32 %v1403, %v2169
        %2171 = vdwg.mxu0
        %v2172 = vadd.f32 %v2068, %v2168
        %v2173 = vadd.f32 %v2069, %v2170
        %2174 = vst.msk [vmem:[%s1517] sm:$0xff] %vm706, %v2172
        %2175 = vst.msk [vmem:[%s1517 + $0x8] sm:$0x1] %vm710, %v2173
        // Predicated region
        $region93: #{mp_avit_forward.1} parent=83 // pred_check
          %p2176 = pneg %p1451
        $region94: #{mp_avit_forward.1} parent=83 // pred_check_branch
          %2178 = sbr.rel (%p2176) target = $region96
        $region95: #{mp_avit_forward.1} parent=83 // pred_region
          %v2179 = vld [vmem:[%s12] sm:$0x1]
          %v2180 = vld [vmem:[%s13] sm:$0x1]
          %v2181 = vsel %vm710, %v2172, 0.0
          %2182 = vadd.xlane.f32.xlu0 %v2181
          %v2183 = vpop.xlane.xlu0 %2182
          %v2184 = vmul.f32 %v2183, %v720
          %v2185 = vsub.f32 %v2172, %v2184
          %v2186 = vmul.f32 %v2185, %v2185
          %v2187 = vsel %vm710, %v2186, 0.0
          %2188 = vadd.xlane.f32.xlu0 %v2187
          %v2189 = vpop.xlane.xlu0 %2188
          %v2190 = vmul.f32 %v2189, %v720
          %v2191 = vadd.f32 %v2190, 1e-05
          %v2192 = vrsqrt.pop %v2191
          %v2193 = vmul.f32 %v2192, %v2191
          %v2194 = vmul.f32 %v2193, %v2192
          %v2195 = vmul.f32 0.5, %v2194
          %v2196 = vsub.f32 1.5, %v2195
          %v2197 = vmul.f32 %v2192, %v2196
          %vm2198 = vweird.f32 %v2191
          %vm2199 = vweird.f32 %v2192
          %vm2200 = vmor %vm2198, %vm2199
          %v2201 = vsel %vm2200, %v2192, %v2197
          %v2202 = vmul.f32 %v2185, %v2201
          %v2203 = vmul.f32 %v2202, %v2179
          %v2204 = vadd.f32 %v2203, %v2180
          %v2205 = vpack.c.bf16 %v2204, %v2204
          %v2206 = vld [vmem:[%s14] sm:$0xf]
          %v2207 = vld [vmem:[%s14 + $0x4] sm:$0xf]
          %v2208 = vld [vmem:[%s14 + $0x8] sm:$0xf]
          %v2209 = vld [vmem:[%s14 + $0xc] sm:$0xf]
          %v2210 = vld [vmem:[%s15] sm:$0x1]
          %v2215 = vunpack.c.l.b16 %v2206
          %v2216 = vunpack.c.l.b16 %v2207
          %v2217 = vunpack.c.l.b16 %v2208
          %v2218 = vunpack.c.l.b16 %v2209
          %v2219 = vpack.c.b16 %v2216, %v2215
          %v2220 = vpack.c.b16 %v2218, %v2217
          %v2224 = vsel %vm706, %v2205, 0
          %2226 = vmatpush.bf16.msra.mxu0 0
          %2227 = vmatpush.bf16.msra.mxu0 0
          %2228 = vmatpush.bf16.msra.mxu0 0
          %2229 = vmatpush.bf16.msra.mxu0 0
          %2230 = vmatpush.bf16.msra.mxu0 0
          %2231 = vmatpush.bf16.msra.mxu0 0
          %2232 = vmatpush.bf16.msra.mxu0 %v2220
          %2233 = vmatpush.bf16.msra.mxu0 %v2219
          %2234 = vmatmul.bf16.gmra.mxu0 %v2224
          %v2235 = vpop.f32.mrf.mxu0
          %v2236 = vadd.f32 %v2210, %v2235
          %v2237 = vpop.f32.mrf.mxu0
          %2238 = vdwg.mxu0
          %vm2239 = vcmask 16384
          %2240 = vst.msk [vmem:[#allocation3 + $0x1] sm:$0x1] %vm2239, %v2236
        $region96: #{mp_avit_forward.1} parent=83 // pred_fallthru
          _
        // Predicated region
        $region97: #{mp_avit_forward.1} parent=83 // pred_check
          %p2241 = pneg %p432
        $region98: #{mp_avit_forward.1} parent=83 // pred_check_branch
          %2243 = sbr.rel (%p2241) target = $region100
        $region99: #{mp_avit_forward.1} parent=83 // pred_region
          %2245 = vsyncadd [#allocation4], 0
          %s2247 = sshll.u32 [#allocation3], 4
          %s2248 = int_to_ptr.vmem [resolvable:$true] %s2247
          %s2249 = sshll.u32 %s16, 4
          %s2250 = int_to_ptr.hbm [resolvable:$true] %s2249
          %2252 = dma.vmem_to_hbm [thread:$0]  %s2248, 32, %s2250, [#allocation4]
        $region100: #{mp_avit_forward.1} parent=83 // pred_fallthru
          _
        // Predicated region
        $region101: #{mp_avit_forward.1} parent=83 // pred_check
          %p2253 = pneg %p432
        $region102: #{mp_avit_forward.1} parent=83 // pred_check_branch
          %2255 = sbr.rel (%p2253) target = $region104
        $region103: #{mp_avit_forward.1} parent=83 // pred_region
          %2257 = dma.done [#allocation4], 32
        $region104: #{mp_avit_forward.1} parent=83 // pred_fallthru
          _
      $region84: #{mp_avit_forward.1} parent=5 // pred_fallthru
        _
      %p2258 = scmp.le.s32.totalorder 2, %s23
      // Predicated region
      $region105: #{mp_avit_forward.1} parent=5 // pred_check
        %p2259 = pneg %p2258
      $region106: #{mp_avit_forward.1} parent=5 // pred_check_branch
        %2261 = sbr.rel (%p2259) target = $region108
      $region107: #{mp_avit_forward.1} parent=5 // pred_region
        %s2262 = ssub.s32 %s23, 2
      $region108: #{mp_avit_forward.1} parent=5 // pred_fallthru
        _
    $region6: #{mp_avit_forward.1} parent=1 // loop_footer
      %s27 = sadd.s32 1, %s23
    $region7: #{mp_avit_forward.1} parent=1 // loop_footer_branch
      %22 = sbr.rel target = $region3
    $region8: #{mp_avit_forward.1} parent=1 // loop_exit
      _
    %2263 = vsyncpa [#allocation4], 1
    %s2264 = scalar_lea.sflag [#allocation4], 1
    %2265 = vsyncpa %s2264, 1

</llo_original>
